<compile_context>
chip_gen: v5e
topology: v5e:2x2
jax: 0.10.0
libtpu: 0.0.40
codegen_flags: <defaults>
</compile_context>

<pallas_src>
import jax
import jax.numpy as jnp
from jax.experimental import pallas as pl
from jax.experimental.pallas import tpu as pltpu

EPS = 1e-5          # nn.BatchNorm2d default
NEG_SLOPE = 0.01    # nn.LeakyReLU default
CP = 128            # lane-padded channel width (lane-dense stores)


def _vmem_limit_bytes():
    """Generation-aware scoped-VMEM request: ~3/4 of physical, capped at 96 MiB."""
    try:
        cap = int(pltpu.get_tpu_info().vmem_capacity_bytes)
        if cap >= (64 << 20):
            return int(min(cap * 3 // 4, 96 << 20))
    except Exception:
        pass
    return 48 << 20


_VMEM_LIMIT = _vmem_limit_bytes()


# ------------------------- small helpers -------------------------

def _pick_ho_tile(ho, wo, max_rows=256):
    """Largest divisor t of ho with t*wo <= max_rows and (t*wo) % 8 == 0."""
    best = None
    for t in range(1, ho + 1):
        if ho % t == 0 and (t * wo) % 8 == 0 and t * wo <= max_rows:
            best = t
    if best is None:
        best = 1   # TODO(synk): pad the flat output when no sublane-aligned tile exists
    assert (best * wo) % 8 == 0, "output row tile must be a multiple of 8 sublanes"
    return best


def _pick_row_tile(m, cap=2048):
    """Largest divisor of m that is a multiple of 8 and <= cap (else m itself)."""
    best = None
    for t in range(8, min(m, cap) + 1, 8):
        if m % t == 0:
            best = t
    return best if best is not None else m


def _pad_vec(v, n):
    return jnp.zeros((n,), jnp.float32).at[: v.shape[0]].set(v.astype(jnp.float32))


# ------------------------- fused conv kernel -------------------------

def _make_conv_kernel(*, stride, tile_ho, Ho, Wo, H, W, Cin, apply_input_act):
    """3x3 conv (padding=1) + bias on the MXU for one row-tile of one image.

    Optionally fuses the previous layer's BatchNorm affine + LeakyReLU into the input
    build, and accumulates per-image partial BN statistics in the resident stats block.
    """
    K3 = 3 * Cin
    rows = tile_ho * Wo

    def kernel(const_ref, x_ref, w_ref, y_ref, stats_ref, xpad_ref, xunf_ref):
        h = pl.program_id(1)

        # Once per image (h axis is "arbitrary" -> scratch persists across row tiles):
        # zero-pad the border, apply the previous layer's BN affine + LeakyReLU if
        # requested, and unfold the 3 kx taps along channels so the inner loop is
        # 3 contiguous-K MXU contractions with no strided reads.
        @pl.when(h == 0)
        def _build_unfolded_input():
            xf = x_ref[0].astype(jnp.float32)                         # (H, W, Cin)
            if apply_input_act:
                scale = const_ref[0:1, :].reshape(1, 1, Cin)          # BN affine (prev layer)
                shift = const_ref[1:2, :].reshape(1, 1, Cin)
                xf = xf * scale + shift
                xf = jnp.where(xf >= 0.0, xf, NEG_SLOPE * xf)         # LeakyReLU

            # Zero only the 1-px border (no full-buffer memset); interior overwritten.
            xpad_ref[0:1, :, :] = jnp.zeros((1, W + 2, Cin), jnp.float32)
            xpad_ref[H + 1:H + 2, :, :] = jnp.zeros((1, W + 2, Cin), jnp.float32)
            xpad_ref[1:H + 1, 0:1, :] = jnp.zeros((H, 1, Cin), jnp.float32)
            xpad_ref[1:H + 1, W + 1:W + 2, :] = jnp.zeros((H, 1, Cin), jnp.float32)
            xpad_ref[1:H + 1, 1:W + 1, :] = xf

            # Unfold:  xunf[ky, oh*Wo+ow, kx*Cin+c] = xpad[s*oh+ky, s*ow+kx, c]
            # (stride-2 deinterleave happens here, once per image, not per tile).
            for ky in range(3):
                for kx in range(3):
                    if stride == 1:
                        tap = xpad_ref[pl.ds(ky, Ho), pl.ds(kx, Wo), :]
                    else:
                        tap = xpad_ref[pl.ds(ky, Ho, stride=stride),
                                       pl.ds(kx, Wo, stride=stride), :]
                    xunf_ref[ky, :, kx * Cin:(kx + 1) * Cin] = (
                        tap.reshape(Ho * Wo, Cin).astype(jnp.bfloat16))

            stats_ref[...] = jnp.zeros_like(stats_ref)                # per-image BN partials

        # 3 MXU contractions, K = 3*Cin, f32 accumulation; rows <= 256 keeps the
        # accumulator register-resident.
        row0 = pl.multiple_of(h * rows, rows)
        acc = jnp.zeros((rows, CP), jnp.float32)
        for ky in range(3):
            lhs = xunf_ref[ky, pl.ds(row0, rows), :]                  # (rows, 3*Cin) bf16
            acc = acc + jnp.dot(lhs, w_ref[ky], preferred_element_type=jnp.float32)

        yt = acc + const_ref[2:3, :]                                  # + conv bias (f32)
        y_ref[...] = yt.astype(jnp.bfloat16)                          # lane-dense bf16 slab

        # Accumulate per-image BN partial sums in the resident output block
        # (written back to HBM once per image, finalized outside the kernel).
        # TODO(synk): single-pass E[x^2]-E[x]^2 can cancel for large-mean activations.
        stats_ref[0, 0:1, :] = stats_ref[0, 0:1, :] + jnp.sum(yt, axis=0, keepdims=True)
        stats_ref[0, 1:2, :] = stats_ref[0, 1:2, :] + jnp.sum(yt * yt, axis=0, keepdims=True)

    return kernel


def fused_conv3x3(x_nhwc, w_oihw, bias, *, stride, in_scale=None, in_shift=None):
    """Returns (y_flat (N*Ho*Wo, CP) bf16, channel_sum (CP,), channel_sqsum (CP,), Ho, Wo)."""
    N, H, W, Cin = x_nhwc.shape
    Cout, Cin_w = w_oihw.shape[0], w_oihw.shape[1]
    Ho = (H + 2 - 3) // stride + 1
    Wo = (W + 2 - 3) // stride + 1
    tile_ho = _pick_ho_tile(Ho, Wo)
    n_h = Ho // tile_ho
    rows = tile_ho * Wo
    K3 = 3 * Cin

    # Weights: (Cout, Cin_w, 3, 3) -> per-ky (3*Cin, CP) with K index = kx*Cin + cin.
    wt = jnp.transpose(w_oihw, (2, 3, 1, 0)).astype(jnp.float32)      # (ky, kx, cin_w, cout)
    wp = jnp.zeros((3, K3, CP), jnp.float32)
    for kx in range(3):
        wp = wp.at[:, kx * Cin:kx * Cin + Cin_w, :Cout].set(wt[:, kx, :, :])
    wp = wp.astype(jnp.bfloat16)

    # Single (8, CP) constants block: row 0 = input scale, 1 = input shift, 2 = conv bias.
    apply_act = in_scale is not None
    const = jnp.zeros((8, CP), jnp.float32)
    const = const.at[2, :Cout].set(bias.astype(jnp.float32))
    if apply_act:
        assert Cin == CP, "fused input activation expects a CP-padded input slab"
        const = const.at[0, :].set(in_scale.astype(jnp.float32))
        const = const.at[1, :].set(in_shift.astype(jnp.float32))

    kernel = _make_conv_kernel(stride=stride, tile_ho=tile_ho, Ho=Ho, Wo=Wo, H=H, W=W,
                               Cin=Cin, apply_input_act=apply_act)

    flops = 2 * N * Ho * Wo * 3 * K3 * CP
    bytes_accessed = (x_nhwc.size * x_nhwc.dtype.itemsize + wp.size * 2 + const.size * 4
                      + N * Ho * Wo * CP * 2 + N * 8 * CP * 4)

    y_flat, stats = pl.pallas_call(
        kernel,
        grid=(N, n_h),
        in_specs=[
            pl.BlockSpec((8, CP), lambda n, h: (0, 0)),                 # scale/shift/bias
            pl.BlockSpec((1, H, W, Cin), lambda n, h: (n, 0, 0, 0)),    # one image (resident over h)
            pl.BlockSpec((3, K3, CP), lambda n, h: (0, 0, 0)),          # unfolded weights
        ],
        out_specs=[
            pl.BlockSpec((rows, CP), lambda n, h: (n * n_h + h, 0)),    # lane-dense bf16 conv out
            pl.BlockSpec((1, 8, CP), lambda n, h: (n, 0, 0)),           # per-image BN partials
        ],
        out_shape=[
            jax.ShapeDtypeStruct((N * Ho * Wo, CP), jnp.bfloat16),
            jax.ShapeDtypeStruct((N, 8, CP), jnp.float32),
        ],
        scratch_shapes=[
            pltpu.VMEM((H + 2, W + 2, Cin), jnp.float32),   # zero-padded image (f32: keeps the
                                                            # unaligned/strided sublane accesses robust)
            pltpu.VMEM((3, Ho * Wo, K3), jnp.bfloat16),     # K-unfolded bf16 MXU operand
        ],
        compiler_params=pltpu.CompilerParams(
            dimension_semantics=("parallel", "arbitrary"),
            vmem_limit_bytes=_VMEM_LIMIT),
        cost_estimate=pl.CostEstimate(flops=flops, transcendentals=0,
                                      bytes_accessed=bytes_accessed),
    )(const, x_nhwc, wp)

    ch_sum = jnp.sum(stats[:, 0, :], axis=0)
    ch_sqsum = jnp.sum(stats[:, 1, :], axis=0)
    return y_flat, ch_sum, ch_sqsum, Ho, Wo


# ------------------------- final BN affine + LeakyReLU -------------------------

def _affine_lrelu_kernel(scale_ref, shift_ref, x_ref, o_ref):
    v = x_ref[...].astype(jnp.float32) * scale_ref[...] + shift_ref[...]
    o_ref[...] = jnp.where(v >= 0.0, v, NEG_SLOPE * v)


def affine_lrelu(x_flat, scale, shift):
    M = x_flat.shape[0]
    tile_m = _pick_row_tile(M, cap=2048)
    return pl.pallas_call(
        _affine_lrelu_kernel,
        grid=(M // tile_m,),
        in_specs=[pl.BlockSpec((1, CP), lambda i: (0, 0)),
                  pl.BlockSpec((1, CP), lambda i: (0, 0)),
                  pl.BlockSpec((tile_m, CP), lambda i: (i, 0))],
        out_specs=pl.BlockSpec((tile_m, CP), lambda i: (i, 0)),
        out_shape=jax.ShapeDtypeStruct((M, CP), jnp.float32),
        compiler_params=pltpu.CompilerParams(
            dimension_semantics=("parallel",),
            vmem_limit_bytes=_VMEM_LIMIT),
    )(scale.reshape(1, CP).astype(jnp.float32),
      shift.reshape(1, CP).astype(jnp.float32),
      x_flat)


def _bn_scale_shift(ch_sum, ch_sqsum, count, gamma, beta):
    """Finalize training-mode BN statistics -> per-channel (scale, shift), CP-padded."""
    mean = ch_sum / count
    var = ch_sqsum / count - mean * mean        # biased variance (BN training mode)
    gp = _pad_vec(gamma, CP)                    # padded channels: gamma=0 -> scale=0
    bp = _pad_vec(beta, CP)
    scale = gp * jax.lax.rsqrt(var + EPS)
    shift = bp - mean * scale
    return scale, shift


# ------------------------- ConvBlock forward -------------------------

def conv_block_forward(x_nchw, p):
    N = x_nchw.shape[0]
    Cout = p["w1"].shape[0]
    x = jnp.transpose(x_nchw, (0, 2, 3, 1))                      # NCHW -> NHWC

    # conv1 (stride 1) + bias, fused BN1 partial stats
    y1, s1, q1, H1, W1 = fused_conv3x3(x, p["w1"], p["b1"], stride=1)
    scale1, shift1 = _bn_scale_shift(s1, q1, N * H1 * W1, p["g1"], p["bt1"])

    # conv2 (stride 2) + bias; BN1 affine + LeakyReLU fused into its input build,
    # fused BN2 partial stats
    y1_nhwc = y1.reshape(N, H1, W1, CP)
    y2, s2, q2, H2, W2 = fused_conv3x3(y1_nhwc, p["w2"], p["b2"], stride=2,
                                       in_scale=scale1, in_shift=shift1)
    scale2, shift2 = _bn_scale_shift(s2, q2, N * H2 * W2, p["g2"], p["bt2"])

    # final BN2 affine + LeakyReLU on a lane-dense (M, 128) bf16 slab
    out = affine_lrelu(y2, scale2, shift2)
    out = out[:, :Cout].reshape(N, H2, W2, Cout)                 # drop channel padding
    return jnp.transpose(out, (0, 3, 1, 2))                      # NHWC -> NCHW


# ------------------------- pure-JAX reference -------------------------

def reference_forward(x_nchw, p):
    def conv(x, w, b, stride):
        y = jax.lax.conv_general_dilated(
            x, w, (stride, stride), ((1, 1), (1, 1)),
            dimension_numbers=("NCHW", "OIHW", "NCHW"),
            precision=jax.lax.Precision.HIGHEST)
        return y + b[None, :, None, None]

    def bn_lrelu(x, g, bt):
        mean = jnp.mean(x, axis=(0, 2, 3), keepdims=True)
        var = jnp.mean(jnp.square(x - mean), axis=(0, 2, 3), keepdims=True)
        y = ((x - mean) / jnp.sqrt(var + EPS)) * g[None, :, None, None] \
            + bt[None, :, None, None]
        return jnp.where(y >= 0, y, NEG_SLOPE * y)

    y = conv(x_nchw, p["w1"], p["b1"], 1)
    y = bn_lrelu(y, p["g1"], p["bt1"])
    y = conv(y, p["w2"], p["b2"], 2)
    y = bn_lrelu(y, p["g2"], p["bt2"])
    return y


# ------------------------- main -------------------------

if __name__ == "__main__":
    key = jax.random.PRNGKey(0)
    k_x, k_w1, k_b1, k_w2, k_b2, k_g1, k_bt1, k_g2, k_bt2 = jax.random.split(key, 9)

    in_channels, out_channels = 4, 8
    N, H, W = 2, 16, 16

    x = jax.random.normal(k_x, (N, in_channels, H, W), dtype=jnp.float32)

    params = {
        "w1": 0.1 * jax.random.normal(k_w1, (out_channels, in_channels, 3, 3), jnp.float32),
        "b1": 0.1 * jax.random.normal(k_b1, (out_channels,), jnp.float32),
        "w2": 0.1 * jax.random.normal(k_w2, (out_channels, out_channels, 3, 3), jnp.float32),
        "b2": 0.1 * jax.random.normal(k_b2, (out_channels,), jnp.float32),
        "g1": 1.0 + 0.1 * jax.random.normal(k_g1, (out_channels,), jnp.float32),
        "bt1": 0.1 * jax.random.normal(k_bt1, (out_channels,), jnp.float32),
        "g2": 1.0 + 0.1 * jax.random.normal(k_g2, (out_channels,), jnp.float32),
        "bt2": 0.1 * jax.random.normal(k_bt2, (out_channels,), jnp.float32),
    }

    out = jax.block_until_ready(jax.jit(conv_block_forward)(x, params))
    ref = jax.block_until_ready(reference_forward(x, params))

    assert out.shape == (N, out_channels, H // 2, W // 2), out.shape
    max_err = float(jnp.max(jnp.abs(out - ref)))
    # bf16 MXU operands + bf16 intermediate slabs vs. an f32-HIGHEST reference
    # -> looser tolerance than an all-f32 pipeline.
    assert jnp.allclose(out, ref, atol=1e-1, rtol=1e-1), max_err

    print("KERNEL_OK")
</pallas_src>

<mosaic_0001>
module attributes {stable_mosaic.version = 11 : i64} {
  func.func @kernel(%arg0: i32, %arg1: i32, %arg2: memref<8x128xf32, #tpu.memory_space<vmem>>, %arg3: memref<1x16x16x4xf32, #tpu.memory_space<vmem>>, %arg4: memref<3x12x128xbf16, #tpu.memory_space<vmem>>, %arg5: memref<256x128xbf16, #tpu.memory_space<vmem>>, %arg6: memref<1x8x128xf32, #tpu.memory_space<vmem>>, %arg7: memref<18x18x4xf32, #tpu.memory_space<vmem>>, %arg8: memref<3x256x12xbf16, #tpu.memory_space<vmem>>) attributes {dimension_semantics = [#tpu.dimension_semantics<parallel>, #tpu.dimension_semantics<arbitrary>], iteration_bounds = array<i64: 2, 1>, scalar_prefetch = 0 : i64, scratch_operands = 2 : i64, tpu.core_type = #tpu.core_type<tc>, window_params = [{pipeline_mode = #tpu.pipeline_mode<synchronous>, transform_indices = @transform_0, window_bounds = array<i64: 8, 128>}, {transform_indices = @transform_1, window_bounds = array<i64: 1, 16, 16, 4>}, {pipeline_mode = #tpu.pipeline_mode<synchronous>, transform_indices = @transform_2, window_bounds = array<i64: 3, 12, 128>}, {transform_indices = @transform_3, window_bounds = array<i64: 256, 128>}, {transform_indices = @transform_4, window_bounds = array<i64: 1, 8, 128>}]} {
    %c0_i32 = arith.constant 0 : i32
    %0 = arith.cmpi eq, %arg1, %c0_i32 : i32
    %1 = arith.extui %0 : i1 to i32
    %c0_i32_0 = arith.constant 0 : i32
    %2 = arith.cmpi ne, %1, %c0_i32_0 : i32
    scf.if %2 {
      %c0_34 = arith.constant 0 : index
      %c0_35 = arith.constant 0 : index
      %c0_36 = arith.constant 0 : index
      %c0_37 = arith.constant 0 : index
      %49 = vector.load %arg3[%c0_34, %c0_35, %c0_36, %c0_37] : memref<1x16x16x4xf32, #tpu.memory_space<vmem>>, vector<1x16x16x4xf32>
      %50 = vector.shape_cast %49 : vector<1x16x16x4xf32> to vector<16x16x4xf32>
      %cst_38 = arith.constant 0.000000e+00 : f32
      %51 = vector.broadcast %cst_38 : f32 to vector<1x18x4xf32>
      %c0_39 = arith.constant 0 : index
      %c0_40 = arith.constant 0 : index
      %c0_41 = arith.constant 0 : index
      %52 = vector.load %arg7[%c0_39, %c0_40, %c0_41] : memref<18x18x4xf32, #tpu.memory_space<vmem>>, vector<1x18x4xf32>
      tpu.vector_store %arg7[%c0_39, %c0_40, %c0_41], %51 {strides = array<i32>} : memref<18x18x4xf32, #tpu.memory_space<vmem>>, vector<1x18x4xf32>,
      %cst_42 = arith.constant 0.000000e+00 : f32
      %53 = vector.broadcast %cst_42 : f32 to vector<1x18x4xf32>
      %c17 = arith.constant 17 : index
      %c0_43 = arith.constant 0 : index
      %c0_44 = arith.constant 0 : index
      %54 = vector.load %arg7[%c17, %c0_43, %c0_44] : memref<18x18x4xf32, #tpu.memory_space<vmem>>, vector<1x18x4xf32>
      tpu.vector_store %arg7[%c17, %c0_43, %c0_44], %53 {strides = array<i32>} : memref<18x18x4xf32, #tpu.memory_space<vmem>>, vector<1x18x4xf32>,
      %cst_45 = arith.constant 0.000000e+00 : f32
      %55 = vector.broadcast %cst_45 : f32 to vector<16x1x4xf32>
      %c1_46 = arith.constant 1 : index
      %c0_47 = arith.constant 0 : index
      %c0_48 = arith.constant 0 : index
      %56 = vector.load %arg7[%c1_46, %c0_47, %c0_48] : memref<18x18x4xf32, #tpu.memory_space<vmem>>, vector<16x1x4xf32>
      tpu.vector_store %arg7[%c1_46, %c0_47, %c0_48], %55 {strides = array<i32>} : memref<18x18x4xf32, #tpu.memory_space<vmem>>, vector<16x1x4xf32>,
      %cst_49 = arith.constant 0.000000e+00 : f32
      %57 = vector.broadcast %cst_49 : f32 to vector<16x1x4xf32>
      %c1_50 = arith.constant 1 : index
      %c17_51 = arith.constant 17 : index
      %c0_52 = arith.constant 0 : index
      %58 = vector.load %arg7[%c1_50, %c17_51, %c0_52] : memref<18x18x4xf32, #tpu.memory_space<vmem>>, vector<16x1x4xf32>
      tpu.vector_store %arg7[%c1_50, %c17_51, %c0_52], %57 {strides = array<i32>} : memref<18x18x4xf32, #tpu.memory_space<vmem>>, vector<16x1x4xf32>,
      %c1_53 = arith.constant 1 : index
      %c1_54 = arith.constant 1 : index
      %c0_55 = arith.constant 0 : index
      %59 = vector.load %arg7[%c1_53, %c1_54, %c0_55] : memref<18x18x4xf32, #tpu.memory_space<vmem>>, vector<16x16x4xf32>
      tpu.vector_store %arg7[%c1_53, %c1_54, %c0_55], %50 {strides = array<i32>} : memref<18x18x4xf32, #tpu.memory_space<vmem>>, vector<16x16x4xf32>,
      %c0_56 = arith.constant 0 : index
      %c0_57 = arith.constant 0 : index
      %c0_58 = arith.constant 0 : index
      %60 = vector.load %arg7[%c0_56, %c0_57, %c0_58] : memref<18x18x4xf32, #tpu.memory_space<vmem>>, vector<16x16x4xf32>
      %61 = vector.shape_cast %60 : vector<16x16x4xf32> to vector<256x4xf32>
      %62 = arith.truncf %61 : vector<256x4xf32> to vector<256x4xbf16>
      %c0_59 = arith.constant 0 : index
      %c0_60 = arith.constant 0 : index
      %c0_61 = arith.constant 0 : index
      %63 = vector.load %arg8[%c0_59, %c0_60, %c0_61] : memref<3x256x12xbf16, #tpu.memory_space<vmem>>, vector<1x256x4xbf16>
      %64 = vector.shape_cast %63 : vector<1x256x4xbf16> to vector<256x4xbf16>
      %65 = vector.shape_cast %62 : vector<256x4xbf16> to vector<1x256x4xbf16>
      tpu.vector_store %arg8[%c0_59, %c0_60, %c0_61], %65 {strides = array<i32>} : memref<3x256x12xbf16, #tpu.memory_space<vmem>>, vector<1x256x4xbf16>,
      %c0_62 = arith.constant 0 : index
      %c1_63 = arith.constant 1 : index
      %c0_64 = arith.constant 0 : index
      %66 = vector.load %arg7[%c0_62, %c1_63, %c0_64] : memref<18x18x4xf32, #tpu.memory_space<vmem>>, vector<16x16x4xf32>
      %67 = vector.shape_cast %66 : vector<16x16x4xf32> to vector<256x4xf32>
      %68 = arith.truncf %67 : vector<256x4xf32> to vector<256x4xbf16>
      %c0_65 = arith.constant 0 : index
      %c0_66 = arith.constant 0 : index
      %c4 = arith.constant 4 : index
      %69 = vector.load %arg8[%c0_65, %c0_66, %c4] : memref<3x256x12xbf16, #tpu.memory_space<vmem>>, vector<1x256x4xbf16>
      %70 = vector.shape_cast %69 : vector<1x256x4xbf16> to vector<256x4xbf16>
      %71 = vector.shape_cast %68 : vector<256x4xbf16> to vector<1x256x4xbf16>
      tpu.vector_store %arg8[%c0_65, %c0_66, %c4], %71 {strides = array<i32>} : memref<3x256x12xbf16, #tpu.memory_space<vmem>>, vector<1x256x4xbf16>,
      %c0_67 = arith.constant 0 : index
      %c2_68 = arith.constant 2 : index
      %c0_69 = arith.constant 0 : index
      %72 = vector.load %arg7[%c0_67, %c2_68, %c0_69] : memref<18x18x4xf32, #tpu.memory_space<vmem>>, vector<16x16x4xf32>
      %73 = vector.shape_cast %72 : vector<16x16x4xf32> to vector<256x4xf32>
      %74 = arith.truncf %73 : vector<256x4xf32> to vector<256x4xbf16>
      %c0_70 = arith.constant 0 : index
      %c0_71 = arith.constant 0 : index
      %c8 = arith.constant 8 : index
      %75 = vector.load %arg8[%c0_70, %c0_71, %c8] : memref<3x256x12xbf16, #tpu.memory_space<vmem>>, vector<1x256x4xbf16>
      %76 = vector.shape_cast %75 : vector<1x256x4xbf16> to vector<256x4xbf16>
      %77 = vector.shape_cast %74 : vector<256x4xbf16> to vector<1x256x4xbf16>
      tpu.vector_store %arg8[%c0_70, %c0_71, %c8], %77 {strides = array<i32>} : memref<3x256x12xbf16, #tpu.memory_space<vmem>>, vector<1x256x4xbf16>,
      %c1_72 = arith.constant 1 : index
      %c0_73 = arith.constant 0 : index
      %c0_74 = arith.constant 0 : index
      %78 = vector.load %arg7[%c1_72, %c0_73, %c0_74] : memref<18x18x4xf32, #tpu.memory_space<vmem>>, vector<16x16x4xf32>
      %79 = vector.shape_cast %78 : vector<16x16x4xf32> to vector<256x4xf32>
      %80 = arith.truncf %79 : vector<256x4xf32> to vector<256x4xbf16>
      %c1_75 = arith.constant 1 : index
      %c0_76 = arith.constant 0 : index
      %c0_77 = arith.constant 0 : index
      %81 = vector.load %arg8[%c1_75, %c0_76, %c0_77] : memref<3x256x12xbf16, #tpu.memory_space<vmem>>, vector<1x256x4xbf16>
      %82 = vector.shape_cast %81 : vector<1x256x4xbf16> to vector<256x4xbf16>
      %83 = vector.shape_cast %80 : vector<256x4xbf16> to vector<1x256x4xbf16>
      tpu.vector_store %arg8[%c1_75, %c0_76, %c0_77], %83 {strides = array<i32>} : memref<3x256x12xbf16, #tpu.memory_space<vmem>>, vector<1x256x4xbf16>,
      %c1_78 = arith.constant 1 : index
      %c1_79 = arith.constant 1 : index
      %c0_80 = arith.constant 0 : index
      %84 = vector.load %arg7[%c1_78, %c1_79, %c0_80] : memref<18x18x4xf32, #tpu.memory_space<vmem>>, vector<16x16x4xf32>
      %85 = vector.shape_cast %84 : vector<16x16x4xf32> to vector<256x4xf32>
      %86 = arith.truncf %85 : vector<256x4xf32> to vector<256x4xbf16>
      %c1_81 = arith.constant 1 : index
      %c0_82 = arith.constant 0 : index
      %c4_83 = arith.constant 4 : index
      %87 = vector.load %arg8[%c1_81, %c0_82, %c4_83] : memref<3x256x12xbf16, #tpu.memory_space<vmem>>, vector<1x256x4xbf16>
      %88 = vector.shape_cast %87 : vector<1x256x4xbf16> to vector<256x4xbf16>
      %89 = vector.shape_cast %86 : vector<256x4xbf16> to vector<1x256x4xbf16>
      tpu.vector_store %arg8[%c1_81, %c0_82, %c4_83], %89 {strides = array<i32>} : memref<3x256x12xbf16, #tpu.memory_space<vmem>>, vector<1x256x4xbf16>,
      %c1_84 = arith.constant 1 : index
      %c2_85 = arith.constant 2 : index
      %c0_86 = arith.constant 0 : index
      %90 = vector.load %arg7[%c1_84, %c2_85, %c0_86] : memref<18x18x4xf32, #tpu.memory_space<vmem>>, vector<16x16x4xf32>
      %91 = vector.shape_cast %90 : vector<16x16x4xf32> to vector<256x4xf32>
      %92 = arith.truncf %91 : vector<256x4xf32> to vector<256x4xbf16>
      %c1_87 = arith.constant 1 : index
      %c0_88 = arith.constant 0 : index
      %c8_89 = arith.constant 8 : index
      %93 = vector.load %arg8[%c1_87, %c0_88, %c8_89] : memref<3x256x12xbf16, #tpu.memory_space<vmem>>, vector<1x256x4xbf16>
      %94 = vector.shape_cast %93 : vector<1x256x4xbf16> to vector<256x4xbf16>
      %95 = vector.shape_cast %92 : vector<256x4xbf16> to vector<1x256x4xbf16>
      tpu.vector_store %arg8[%c1_87, %c0_88, %c8_89], %95 {strides = array<i32>} : memref<3x256x12xbf16, #tpu.memory_space<vmem>>, vector<1x256x4xbf16>,
      %c2_90 = arith.constant 2 : index
      %c0_91 = arith.constant 0 : index
      %c0_92 = arith.constant 0 : index
      %96 = vector.load %arg7[%c2_90, %c0_91, %c0_92] : memref<18x18x4xf32, #tpu.memory_space<vmem>>, vector<16x16x4xf32>
      %97 = vector.shape_cast %96 : vector<16x16x4xf32> to vector<256x4xf32>
      %98 = arith.truncf %97 : vector<256x4xf32> to vector<256x4xbf16>
      %c2_93 = arith.constant 2 : index
      %c0_94 = arith.constant 0 : index
      %c0_95 = arith.constant 0 : index
      %99 = vector.load %arg8[%c2_93, %c0_94, %c0_95] : memref<3x256x12xbf16, #tpu.memory_space<vmem>>, vector<1x256x4xbf16>
      %100 = vector.shape_cast %99 : vector<1x256x4xbf16> to vector<256x4xbf16>
      %101 = vector.shape_cast %98 : vector<256x4xbf16> to vector<1x256x4xbf16>
      tpu.vector_store %arg8[%c2_93, %c0_94, %c0_95], %101 {strides = array<i32>} : memref<3x256x12xbf16, #tpu.memory_space<vmem>>, vector<1x256x4xbf16>,
      %c2_96 = arith.constant 2 : index
      %c1_97 = arith.constant 1 : index
      %c0_98 = arith.constant 0 : index
      %102 = vector.load %arg7[%c2_96, %c1_97, %c0_98] : memref<18x18x4xf32, #tpu.memory_space<vmem>>, vector<16x16x4xf32>
      %103 = vector.shape_cast %102 : vector<16x16x4xf32> to vector<256x4xf32>
      %104 = arith.truncf %103 : vector<256x4xf32> to vector<256x4xbf16>
      %c2_99 = arith.constant 2 : index
      %c0_100 = arith.constant 0 : index
      %c4_101 = arith.constant 4 : index
      %105 = vector.load %arg8[%c2_99, %c0_100, %c4_101] : memref<3x256x12xbf16, #tpu.memory_space<vmem>>, vector<1x256x4xbf16>
      %106 = vector.shape_cast %105 : vector<1x256x4xbf16> to vector<256x4xbf16>
      %107 = vector.shape_cast %104 : vector<256x4xbf16> to vector<1x256x4xbf16>
      tpu.vector_store %arg8[%c2_99, %c0_100, %c4_101], %107 {strides = array<i32>} : memref<3x256x12xbf16, #tpu.memory_space<vmem>>, vector<1x256x4xbf16>,
      %c2_102 = arith.constant 2 : index
      %c2_103 = arith.constant 2 : index
      %c0_104 = arith.constant 0 : index
      %108 = vector.load %arg7[%c2_102, %c2_103, %c0_104] : memref<18x18x4xf32, #tpu.memory_space<vmem>>, vector<16x16x4xf32>
      %109 = vector.shape_cast %108 : vector<16x16x4xf32> to vector<256x4xf32>
      %110 = arith.truncf %109 : vector<256x4xf32> to vector<256x4xbf16>
      %c2_105 = arith.constant 2 : index
      %c0_106 = arith.constant 0 : index
      %c8_107 = arith.constant 8 : index
      %111 = vector.load %arg8[%c2_105, %c0_106, %c8_107] : memref<3x256x12xbf16, #tpu.memory_space<vmem>>, vector<1x256x4xbf16>
      %112 = vector.shape_cast %111 : vector<1x256x4xbf16> to vector<256x4xbf16>
      %113 = vector.shape_cast %110 : vector<256x4xbf16> to vector<1x256x4xbf16>
      tpu.vector_store %arg8[%c2_105, %c0_106, %c8_107], %113 {strides = array<i32>} : memref<3x256x12xbf16, #tpu.memory_space<vmem>>, vector<1x256x4xbf16>,
      %cst_108 = arith.constant 0.000000e+00 : f32
      %114 = vector.broadcast %cst_108 : f32 to vector<1x8x128xf32>
      %c0_109 = arith.constant 0 : index
      %c0_110 = arith.constant 0 : index
      %c0_111 = arith.constant 0 : index
      %115 = vector.load %arg6[%c0_109, %c0_110, %c0_111] : memref<1x8x128xf32, #tpu.memory_space<vmem>>, vector<1x8x128xf32>
      tpu.vector_store %arg6[%c0_109, %c0_110, %c0_111], %114 {strides = array<i32>} : memref<1x8x128xf32, #tpu.memory_space<vmem>>, vector<1x8x128xf32>,
    } else {
    }
    %c256_i32 = arith.constant 256 : i32
    %3 = arith.muli %arg1, %c256_i32 : i32
    %4 = tpu.assume_multiple %3, 256 : i32
    %cst = arith.constant 0.000000e+00 : f32
    %5 = vector.broadcast %cst : f32 to vector<256x128xf32>
    %c0 = arith.constant 0 : index
    %6 = arith.index_cast %4 : i32 to index
    %c0_1 = arith.constant 0 : index
    %7 = vector.load %arg8[%c0, %6, %c0_1] : memref<3x256x12xbf16, #tpu.memory_space<vmem>>, vector<1x256x12xbf16>
    %8 = vector.shape_cast %7 : vector<1x256x12xbf16> to vector<256x12xbf16>
    %c0_2 = arith.constant 0 : index
    %c0_3 = arith.constant 0 : index
    %c0_4 = arith.constant 0 : index
    %9 = vector.load %arg4[%c0_2, %c0_3, %c0_4] : memref<3x12x128xbf16, #tpu.memory_space<vmem>>, vector<1x12x128xbf16>
    %10 = vector.shape_cast %9 : vector<1x12x128xbf16> to vector<12x128xbf16>
    %cst_5 = arith.constant dense<0.000000e+00> : vector<256x128xf32>
    %11 = tpu.matmul %8, %10, %cst_5 {dimension_numbers = #tpu.dot_dimension_numbers<[1], [0], [0], [1], [0, 0, 1, 1], [], []>} : vector<256x12xbf16>, vector<12x128xbf16>, vector<256x128xf32> -> vector<256x128xf32>
    %12 = arith.addf %5, %11 : vector<256x128xf32>
    %c1 = arith.constant 1 : index
    %13 = arith.index_cast %4 : i32 to index
    %c0_6 = arith.constant 0 : index
    %14 = vector.load %arg8[%c1, %13, %c0_6] : memref<3x256x12xbf16, #tpu.memory_space<vmem>>, vector<1x256x12xbf16>
    %15 = vector.shape_cast %14 : vector<1x256x12xbf16> to vector<256x12xbf16>
    %c1_7 = arith.constant 1 : index
    %c0_8 = arith.constant 0 : index
    %c0_9 = arith.constant 0 : index
    %16 = vector.load %arg4[%c1_7, %c0_8, %c0_9] : memref<3x12x128xbf16, #tpu.memory_space<vmem>>, vector<1x12x128xbf16>
    %17 = vector.shape_cast %16 : vector<1x12x128xbf16> to vector<12x128xbf16>
    %cst_10 = arith.constant dense<0.000000e+00> : vector<256x128xf32>
    %18 = tpu.matmul %15, %17, %cst_10 {dimension_numbers = #tpu.dot_dimension_numbers<[1], [0], [0], [1], [0, 0, 1, 1], [], []>} : vector<256x12xbf16>, vector<12x128xbf16>, vector<256x128xf32> -> vector<256x128xf32>
    %19 = arith.addf %12, %18 : vector<256x128xf32>
    %c2 = arith.constant 2 : index
    %20 = arith.index_cast %4 : i32 to index
    %c0_11 = arith.constant 0 : index
    %21 = vector.load %arg8[%c2, %20, %c0_11] : memref<3x256x12xbf16, #tpu.memory_space<vmem>>, vector<1x256x12xbf16>
    %22 = vector.shape_cast %21 : vector<1x256x12xbf16> to vector<256x12xbf16>
    %c2_12 = arith.constant 2 : index
    %c0_13 = arith.constant 0 : index
    %c0_14 = arith.constant 0 : index
    %23 = vector.load %arg4[%c2_12, %c0_13, %c0_14] : memref<3x12x128xbf16, #tpu.memory_space<vmem>>, vector<1x12x128xbf16>
    %24 = vector.shape_cast %23 : vector<1x12x128xbf16> to vector<12x128xbf16>
    %cst_15 = arith.constant dense<0.000000e+00> : vector<256x128xf32>
    %25 = tpu.matmul %22, %24, %cst_15 {dimension_numbers = #tpu.dot_dimension_numbers<[1], [0], [0], [1], [0, 0, 1, 1], [], []>} : vector<256x12xbf16>, vector<12x128xbf16>, vector<256x128xf32> -> vector<256x128xf32>
    %26 = arith.addf %19, %25 : vector<256x128xf32>
    %c2_16 = arith.constant 2 : index
    %c0_17 = arith.constant 0 : index
    %27 = vector.load %arg2[%c2_16, %c0_17] : memref<8x128xf32, #tpu.memory_space<vmem>>, vector<1x128xf32>
    %28 = vector.broadcast %27 : vector<1x128xf32> to vector<256x128xf32>
    %29 = arith.addf %26, %28 : vector<256x128xf32>
    %30 = arith.truncf %29 : vector<256x128xf32> to vector<256x128xbf16>
    %c0_18 = arith.constant 0 : index
    %c0_19 = arith.constant 0 : index
    %31 = vector.load %arg5[%c0_18, %c0_19] : memref<256x128xbf16, #tpu.memory_space<vmem>>, vector<256x128xbf16>
    tpu.vector_store %arg5[%c0_18, %c0_19], %30 {strides = array<i32>} : memref<256x128xbf16, #tpu.memory_space<vmem>>, vector<256x128xbf16>,
    %c0_20 = arith.constant 0 : index
    %c0_21 = arith.constant 0 : index
    %c0_22 = arith.constant 0 : index
    %32 = vector.load %arg6[%c0_20, %c0_21, %c0_22] : memref<1x8x128xf32, #tpu.memory_space<vmem>>, vector<1x1x128xf32>
    %33 = vector.shape_cast %32 : vector<1x1x128xf32> to vector<1x128xf32>
    %cst_23 = arith.constant dense<0.000000e+00> : vector<128xf32>
    %34 = vector.multi_reduction <add>, %29, %cst_23 [0] : vector<256x128xf32> to vector<128xf32>
    %35 = vector.shape_cast %34 : vector<128xf32> to vector<1x128xf32>
    %36 = arith.addf %33, %35 : vector<1x128xf32>
    %c0_24 = arith.constant 0 : index
    %c0_25 = arith.constant 0 : index
    %c0_26 = arith.constant 0 : index
    %37 = vector.load %arg6[%c0_24, %c0_25, %c0_26] : memref<1x8x128xf32, #tpu.memory_space<vmem>>, vector<1x1x128xf32>
    %38 = vector.shape_cast %37 : vector<1x1x128xf32> to vector<1x128xf32>
    %39 = vector.shape_cast %36 : vector<1x128xf32> to vector<1x1x128xf32>
    tpu.vector_store %arg6[%c0_24, %c0_25, %c0_26], %39 {strides = array<i32>} : memref<1x8x128xf32, #tpu.memory_space<vmem>>, vector<1x1x128xf32>,
    %c0_27 = arith.constant 0 : index
    %c1_28 = arith.constant 1 : index
    %c0_29 = arith.constant 0 : index
    %40 = vector.load %arg6[%c0_27, %c1_28, %c0_29] : memref<1x8x128xf32, #tpu.memory_space<vmem>>, vector<1x1x128xf32>
    %41 = vector.shape_cast %40 : vector<1x1x128xf32> to vector<1x128xf32>
    %42 = arith.mulf %29, %29 : vector<256x128xf32>
    %cst_30 = arith.constant dense<0.000000e+00> : vector<128xf32>
    %43 = vector.multi_reduction <add>, %42, %cst_30 [0] : vector<256x128xf32> to vector<128xf32>
    %44 = vector.shape_cast %43 : vector<128xf32> to vector<1x128xf32>
    %45 = arith.addf %41, %44 : vector<1x128xf32>
    %c0_31 = arith.constant 0 : index
    %c1_32 = arith.constant 1 : index
    %c0_33 = arith.constant 0 : index
    %46 = vector.load %arg6[%c0_31, %c1_32, %c0_33] : memref<1x8x128xf32, #tpu.memory_space<vmem>>, vector<1x1x128xf32>
    %47 = vector.shape_cast %46 : vector<1x1x128xf32> to vector<1x128xf32>
    %48 = vector.shape_cast %45 : vector<1x128xf32> to vector<1x1x128xf32>
    tpu.vector_store %arg6[%c0_31, %c1_32, %c0_33], %48 {strides = array<i32>} : memref<1x8x128xf32, #tpu.memory_space<vmem>>, vector<1x1x128xf32>,
    return
  }
  func.func @transform_0(%arg0: i32, %arg1: i32) -> (i32, i32) {
    %c0_i32 = arith.constant 0 : i32
    %c0_i32_0 = arith.constant 0 : i32
    %c0_i32_1 = arith.constant 0 : i32
    return %c0_i32, %c0_i32_0 : i32, i32
  }
  func.func @transform_1(%arg0: i32, %arg1: i32) -> (i32, i32, i32, i32) {
    %c0_i32 = arith.constant 0 : i32
    %c0_i32_0 = arith.constant 0 : i32
    %c0_i32_1 = arith.constant 0 : i32
    %c0_i32_2 = arith.constant 0 : i32
    return %arg0, %c0_i32, %c0_i32_0, %c0_i32_1 : i32, i32, i32, i32
  }
  func.func @transform_2(%arg0: i32, %arg1: i32) -> (i32, i32, i32) {
    %c0_i32 = arith.constant 0 : i32
    %c0_i32_0 = arith.constant 0 : i32
    %c0_i32_1 = arith.constant 0 : i32
    %c0_i32_2 = arith.constant 0 : i32
    return %c0_i32, %c0_i32_0, %c0_i32_1 : i32, i32, i32
  }
  func.func @transform_3(%arg0: i32, %arg1: i32) -> (i32, i32) {
    %c1_i32 = arith.constant 1 : i32
    %0 = arith.muli %arg0, %c1_i32 : i32
    %1 = arith.addi %0, %arg1 : i32
    %c0_i32 = arith.constant 0 : i32
    %c0_i32_0 = arith.constant 0 : i32
    return %1, %c0_i32 : i32, i32
  }
  func.func @transform_4(%arg0: i32, %arg1: i32) -> (i32, i32, i32) {
    %c0_i32 = arith.constant 0 : i32
    %c0_i32_0 = arith.constant 0 : i32
    %c0_i32_1 = arith.constant 0 : i32
    return %arg0, %c0_i32, %c0_i32_0 : i32, i32, i32
  }
}

module attributes {stable_mosaic.version = 11 : i64} {
  func.func @kernel(%arg0: i32, %arg1: i32, %arg2: memref<8x128xf32, #tpu.memory_space<vmem>>, %arg3: memref<1x16x16x128xbf16, #tpu.memory_space<vmem>>, %arg4: memref<3x384x128xbf16, #tpu.memory_space<vmem>>, %arg5: memref<64x128xbf16, #tpu.memory_space<vmem>>, %arg6: memref<1x8x128xf32, #tpu.memory_space<vmem>>, %arg7: memref<18x18x128xf32, #tpu.memory_space<vmem>>, %arg8: memref<3x64x384xbf16, #tpu.memory_space<vmem>>) attributes {dimension_semantics = [#tpu.dimension_semantics<parallel>, #tpu.dimension_semantics<arbitrary>], iteration_bounds = array<i64: 2, 1>, scalar_prefetch = 0 : i64, scratch_operands = 2 : i64, tpu.core_type = #tpu.core_type<tc>, window_params = [{pipeline_mode = #tpu.pipeline_mode<synchronous>, transform_indices = @transform_0, window_bounds = array<i64: 8, 128>}, {transform_indices = @transform_1, window_bounds = array<i64: 1, 16, 16, 128>}, {pipeline_mode = #tpu.pipeline_mode<synchronous>, transform_indices = @transform_2, window_bounds = array<i64: 3, 384, 128>}, {transform_indices = @transform_3, window_bounds = array<i64: 64, 128>}, {transform_indices = @transform_4, window_bounds = array<i64: 1, 8, 128>}]} {
    %c0_i32 = arith.constant 0 : i32
    %0 = arith.cmpi eq, %arg1, %c0_i32 : i32
    %1 = arith.extui %0 : i1 to i32
    %c0_i32_0 = arith.constant 0 : i32
    %2 = arith.cmpi ne, %1, %c0_i32_0 : i32
    scf.if %2 {
      %c0_34 = arith.constant 0 : index
      %c0_35 = arith.constant 0 : index
      %c0_36 = arith.constant 0 : index
      %c0_37 = arith.constant 0 : index
      %49 = vector.load %arg3[%c0_34, %c0_35, %c0_36, %c0_37] : memref<1x16x16x128xbf16, #tpu.memory_space<vmem>>, vector<1x16x16x128xbf16>
      %50 = vector.shape_cast %49 : vector<1x16x16x128xbf16> to vector<16x16x128xbf16>
      %51 = arith.extf %50 : vector<16x16x128xbf16> to vector<16x16x128xf32>
      %c0_38 = arith.constant 0 : index
      %c0_39 = arith.constant 0 : index
      %52 = vector.load %arg2[%c0_38, %c0_39] : memref<8x128xf32, #tpu.memory_space<vmem>>, vector<1x128xf32>
      %53 = vector.shape_cast %52 : vector<1x128xf32> to vector<1x1x128xf32>
      %c1_40 = arith.constant 1 : index
      %c0_41 = arith.constant 0 : index
      %54 = vector.load %arg2[%c1_40, %c0_41] : memref<8x128xf32, #tpu.memory_space<vmem>>, vector<1x128xf32>
      %55 = vector.shape_cast %54 : vector<1x128xf32> to vector<1x1x128xf32>
      %56 = vector.broadcast %53 : vector<1x1x128xf32> to vector<16x16x128xf32>
      %57 = arith.mulf %51, %56 : vector<16x16x128xf32>
      %58 = vector.broadcast %55 : vector<1x1x128xf32> to vector<16x16x128xf32>
      %59 = arith.addf %57, %58 : vector<16x16x128xf32>
      %cst_42 = arith.constant 0.000000e+00 : f32
      %60 = vector.broadcast %cst_42 : f32 to vector<16x16x128xf32>
      %61 = arith.cmpf oge, %59, %60 : vector<16x16x128xf32>
      %cst_43 = arith.constant 0.00999999977 : f32
      %62 = vector.broadcast %cst_43 : f32 to vector<16x16x128xf32>
      %63 = arith.mulf %62, %59 : vector<16x16x128xf32>
      %64 = arith.select %61, %59, %63 : vector<16x16x128xi1>, vector<16x16x128xf32>
      %cst_44 = arith.constant 0.000000e+00 : f32
      %65 = vector.broadcast %cst_44 : f32 to vector<1x18x128xf32>
      %c0_45 = arith.constant 0 : index
      %c0_46 = arith.constant 0 : index
      %c0_47 = arith.constant 0 : index
      %66 = vector.load %arg7[%c0_45, %c0_46, %c0_47] : memref<18x18x128xf32, #tpu.memory_space<vmem>>, vector<1x18x128xf32>
      tpu.vector_store %arg7[%c0_45, %c0_46, %c0_47], %65 {strides = array<i32>} : memref<18x18x128xf32, #tpu.memory_space<vmem>>, vector<1x18x128xf32>,
      %cst_48 = arith.constant 0.000000e+00 : f32
      %67 = vector.broadcast %cst_48 : f32 to vector<1x18x128xf32>
      %c17 = arith.constant 17 : index
      %c0_49 = arith.constant 0 : index
      %c0_50 = arith.constant 0 : index
      %68 = vector.load %arg7[%c17, %c0_49, %c0_50] : memref<18x18x128xf32, #tpu.memory_space<vmem>>, vector<1x18x128xf32>
      tpu.vector_store %arg7[%c17, %c0_49, %c0_50], %67 {strides = array<i32>} : memref<18x18x128xf32, #tpu.memory_space<vmem>>, vector<1x18x128xf32>,
      %cst_51 = arith.constant 0.000000e+00 : f32
      %69 = vector.broadcast %cst_51 : f32 to vector<16x1x128xf32>
      %c1_52 = arith.constant 1 : index
      %c0_53 = arith.constant 0 : index
      %c0_54 = arith.constant 0 : index
      %70 = vector.load %arg7[%c1_52, %c0_53, %c0_54] : memref<18x18x128xf32, #tpu.memory_space<vmem>>, vector<16x1x128xf32>
      tpu.vector_store %arg7[%c1_52, %c0_53, %c0_54], %69 {strides = array<i32>} : memref<18x18x128xf32, #tpu.memory_space<vmem>>, vector<16x1x128xf32>,
      %cst_55 = arith.constant 0.000000e+00 : f32
      %71 = vector.broadcast %cst_55 : f32 to vector<16x1x128xf32>
      %c1_56 = arith.constant 1 : index
      %c17_57 = arith.constant 17 : index
      %c0_58 = arith.constant 0 : index
      %72 = vector.load %arg7[%c1_56, %c17_57, %c0_58] : memref<18x18x128xf32, #tpu.memory_space<vmem>>, vector<16x1x128xf32>
      tpu.vector_store %arg7[%c1_56, %c17_57, %c0_58], %71 {strides = array<i32>} : memref<18x18x128xf32, #tpu.memory_space<vmem>>, vector<16x1x128xf32>,
      %c1_59 = arith.constant 1 : index
      %c1_60 = arith.constant 1 : index
      %c0_61 = arith.constant 0 : index
      %73 = vector.load %arg7[%c1_59, %c1_60, %c0_61] : memref<18x18x128xf32, #tpu.memory_space<vmem>>, vector<16x16x128xf32>
      tpu.vector_store %arg7[%c1_59, %c1_60, %c0_61], %64 {strides = array<i32>} : memref<18x18x128xf32, #tpu.memory_space<vmem>>, vector<16x16x128xf32>,
      %c0_62 = arith.constant 0 : index
      %c0_63 = arith.constant 0 : index
      %c0_64 = arith.constant 0 : index
      %74 = tpu.strided_load %arg7[%c0_62, %c0_63, %c0_64] {strides = array<i32: 2, 2, 1>} : memref<18x18x128xf32, #tpu.memory_space<vmem>>, vector<8x8x128xf32>
      %75 = vector.shape_cast %74 : vector<8x8x128xf32> to vector<64x128xf32>
      %76 = arith.truncf %75 : vector<64x128xf32> to vector<64x128xbf16>
      %c0_65 = arith.constant 0 : index
      %c0_66 = arith.constant 0 : index
      %c0_67 = arith.constant 0 : index
      %77 = vector.load %arg8[%c0_65, %c0_66, %c0_67] : memref<3x64x384xbf16, #tpu.memory_space<vmem>>, vector<1x64x128xbf16>
      %78 = vector.shape_cast %77 : vector<1x64x128xbf16> to vector<64x128xbf16>
      %79 = vector.shape_cast %76 : vector<64x128xbf16> to vector<1x64x128xbf16>
      tpu.vector_store %arg8[%c0_65, %c0_66, %c0_67], %79 {strides = array<i32>} : memref<3x64x384xbf16, #tpu.memory_space<vmem>>, vector<1x64x128xbf16>,
      %c0_68 = arith.constant 0 : index
      %c1_69 = arith.constant 1 : index
      %c0_70 = arith.constant 0 : index
      %80 = tpu.strided_load %arg7[%c0_68, %c1_69, %c0_70] {strides = array<i32: 2, 2, 1>} : memref<18x18x128xf32, #tpu.memory_space<vmem>>, vector<8x8x128xf32>
      %81 = vector.shape_cast %80 : vector<8x8x128xf32> to vector<64x128xf32>
      %82 = arith.truncf %81 : vector<64x128xf32> to vector<64x128xbf16>
      %c0_71 = arith.constant 0 : index
      %c0_72 = arith.constant 0 : index
      %c128 = arith.constant 128 : index
      %83 = vector.load %arg8[%c0_71, %c0_72, %c128] : memref<3x64x384xbf16, #tpu.memory_space<vmem>>, vector<1x64x128xbf16>
      %84 = vector.shape_cast %83 : vector<1x64x128xbf16> to vector<64x128xbf16>
      %85 = vector.shape_cast %82 : vector<64x128xbf16> to vector<1x64x128xbf16>
      tpu.vector_store %arg8[%c0_71, %c0_72, %c128], %85 {strides = array<i32>} : memref<3x64x384xbf16, #tpu.memory_space<vmem>>, vector<1x64x128xbf16>,
      %c0_73 = arith.constant 0 : index
      %c2_74 = arith.constant 2 : index
      %c0_75 = arith.constant 0 : index
      %86 = tpu.strided_load %arg7[%c0_73, %c2_74, %c0_75] {strides = array<i32: 2, 2, 1>} : memref<18x18x128xf32, #tpu.memory_space<vmem>>, vector<8x8x128xf32>
      %87 = vector.shape_cast %86 : vector<8x8x128xf32> to vector<64x128xf32>
      %88 = arith.truncf %87 : vector<64x128xf32> to vector<64x128xbf16>
      %c0_76 = arith.constant 0 : index
      %c0_77 = arith.constant 0 : index
      %c256 = arith.constant 256 : index
      %89 = vector.load %arg8[%c0_76, %c0_77, %c256] : memref<3x64x384xbf16, #tpu.memory_space<vmem>>, vector<1x64x128xbf16>
      %90 = vector.shape_cast %89 : vector<1x64x128xbf16> to vector<64x128xbf16>
      %91 = vector.shape_cast %88 : vector<64x128xbf16> to vector<1x64x128xbf16>
      tpu.vector_store %arg8[%c0_76, %c0_77, %c256], %91 {strides = array<i32>} : memref<3x64x384xbf16, #tpu.memory_space<vmem>>, vector<1x64x128xbf16>,
      %c1_78 = arith.constant 1 : index
      %c0_79 = arith.constant 0 : index
      %c0_80 = arith.constant 0 : index
      %92 = tpu.strided_load %arg7[%c1_78, %c0_79, %c0_80] {strides = array<i32: 2, 2, 1>} : memref<18x18x128xf32, #tpu.memory_space<vmem>>, vector<8x8x128xf32>
      %93 = vector.shape_cast %92 : vector<8x8x128xf32> to vector<64x128xf32>
      %94 = arith.truncf %93 : vector<64x128xf32> to vector<64x128xbf16>
      %c1_81 = arith.constant 1 : index
      %c0_82 = arith.constant 0 : index
      %c0_83 = arith.constant 0 : index
      %95 = vector.load %arg8[%c1_81, %c0_82, %c0_83] : memref<3x64x384xbf16, #tpu.memory_space<vmem>>, vector<1x64x128xbf16>
      %96 = vector.shape_cast %95 : vector<1x64x128xbf16> to vector<64x128xbf16>
      %97 = vector.shape_cast %94 : vector<64x128xbf16> to vector<1x64x128xbf16>
      tpu.vector_store %arg8[%c1_81, %c0_82, %c0_83], %97 {strides = array<i32>} : memref<3x64x384xbf16, #tpu.memory_space<vmem>>, vector<1x64x128xbf16>,
      %c1_84 = arith.constant 1 : index
      %c1_85 = arith.constant 1 : index
      %c0_86 = arith.constant 0 : index
      %98 = tpu.strided_load %arg7[%c1_84, %c1_85, %c0_86] {strides = array<i32: 2, 2, 1>} : memref<18x18x128xf32, #tpu.memory_space<vmem>>, vector<8x8x128xf32>
      %99 = vector.shape_cast %98 : vector<8x8x128xf32> to vector<64x128xf32>
      %100 = arith.truncf %99 : vector<64x128xf32> to vector<64x128xbf16>
      %c1_87 = arith.constant 1 : index
      %c0_88 = arith.constant 0 : index
      %c128_89 = arith.constant 128 : index
      %101 = vector.load %arg8[%c1_87, %c0_88, %c128_89] : memref<3x64x384xbf16, #tpu.memory_space<vmem>>, vector<1x64x128xbf16>
      %102 = vector.shape_cast %101 : vector<1x64x128xbf16> to vector<64x128xbf16>
      %103 = vector.shape_cast %100 : vector<64x128xbf16> to vector<1x64x128xbf16>
      tpu.vector_store %arg8[%c1_87, %c0_88, %c128_89], %103 {strides = array<i32>} : memref<3x64x384xbf16, #tpu.memory_space<vmem>>, vector<1x64x128xbf16>,
      %c1_90 = arith.constant 1 : index
      %c2_91 = arith.constant 2 : index
      %c0_92 = arith.constant 0 : index
      %104 = tpu.strided_load %arg7[%c1_90, %c2_91, %c0_92] {strides = array<i32: 2, 2, 1>} : memref<18x18x128xf32, #tpu.memory_space<vmem>>, vector<8x8x128xf32>
      %105 = vector.shape_cast %104 : vector<8x8x128xf32> to vector<64x128xf32>
      %106 = arith.truncf %105 : vector<64x128xf32> to vector<64x128xbf16>
      %c1_93 = arith.constant 1 : index
      %c0_94 = arith.constant 0 : index
      %c256_95 = arith.constant 256 : index
      %107 = vector.load %arg8[%c1_93, %c0_94, %c256_95] : memref<3x64x384xbf16, #tpu.memory_space<vmem>>, vector<1x64x128xbf16>
      %108 = vector.shape_cast %107 : vector<1x64x128xbf16> to vector<64x128xbf16>
      %109 = vector.shape_cast %106 : vector<64x128xbf16> to vector<1x64x128xbf16>
      tpu.vector_store %arg8[%c1_93, %c0_94, %c256_95], %109 {strides = array<i32>} : memref<3x64x384xbf16, #tpu.memory_space<vmem>>, vector<1x64x128xbf16>,
      %c2_96 = arith.constant 2 : index
      %c0_97 = arith.constant 0 : index
      %c0_98 = arith.constant 0 : index
      %110 = tpu.strided_load %arg7[%c2_96, %c0_97, %c0_98] {strides = array<i32: 2, 2, 1>} : memref<18x18x128xf32, #tpu.memory_space<vmem>>, vector<8x8x128xf32>
      %111 = vector.shape_cast %110 : vector<8x8x128xf32> to vector<64x128xf32>
      %112 = arith.truncf %111 : vector<64x128xf32> to vector<64x128xbf16>
      %c2_99 = arith.constant 2 : index
      %c0_100 = arith.constant 0 : index
      %c0_101 = arith.constant 0 : index
      %113 = vector.load %arg8[%c2_99, %c0_100, %c0_101] : memref<3x64x384xbf16, #tpu.memory_space<vmem>>, vector<1x64x128xbf16>
      %114 = vector.shape_cast %113 : vector<1x64x128xbf16> to vector<64x128xbf16>
      %115 = vector.shape_cast %112 : vector<64x128xbf16> to vector<1x64x128xbf16>
      tpu.vector_store %arg8[%c2_99, %c0_100, %c0_101], %115 {strides = array<i32>} : memref<3x64x384xbf16, #tpu.memory_space<vmem>>, vector<1x64x128xbf16>,
      %c2_102 = arith.constant 2 : index
      %c1_103 = arith.constant 1 : index
      %c0_104 = arith.constant 0 : index
      %116 = tpu.strided_load %arg7[%c2_102, %c1_103, %c0_104] {strides = array<i32: 2, 2, 1>} : memref<18x18x128xf32, #tpu.memory_space<vmem>>, vector<8x8x128xf32>
      %117 = vector.shape_cast %116 : vector<8x8x128xf32> to vector<64x128xf32>
      %118 = arith.truncf %117 : vector<64x128xf32> to vector<64x128xbf16>
      %c2_105 = arith.constant 2 : index
      %c0_106 = arith.constant 0 : index
      %c128_107 = arith.constant 128 : index
      %119 = vector.load %arg8[%c2_105, %c0_106, %c128_107] : memref<3x64x384xbf16, #tpu.memory_space<vmem>>, vector<1x64x128xbf16>
      %120 = vector.shape_cast %119 : vector<1x64x128xbf16> to vector<64x128xbf16>
      %121 = vector.shape_cast %118 : vector<64x128xbf16> to vector<1x64x128xbf16>
      tpu.vector_store %arg8[%c2_105, %c0_106, %c128_107], %121 {strides = array<i32>} : memref<3x64x384xbf16, #tpu.memory_space<vmem>>, vector<1x64x128xbf16>,
      %c2_108 = arith.constant 2 : index
      %c2_109 = arith.constant 2 : index
      %c0_110 = arith.constant 0 : index
      %122 = tpu.strided_load %arg7[%c2_108, %c2_109, %c0_110] {strides = array<i32: 2, 2, 1>} : memref<18x18x128xf32, #tpu.memory_space<vmem>>, vector<8x8x128xf32>
      %123 = vector.shape_cast %122 : vector<8x8x128xf32> to vector<64x128xf32>
      %124 = arith.truncf %123 : vector<64x128xf32> to vector<64x128xbf16>
      %c2_111 = arith.constant 2 : index
      %c0_112 = arith.constant 0 : index
      %c256_113 = arith.constant 256 : index
      %125 = vector.load %arg8[%c2_111, %c0_112, %c256_113] : memref<3x64x384xbf16, #tpu.memory_space<vmem>>, vector<1x64x128xbf16>
      %126 = vector.shape_cast %125 : vector<1x64x128xbf16> to vector<64x128xbf16>
      %127 = vector.shape_cast %124 : vector<64x128xbf16> to vector<1x64x128xbf16>
      tpu.vector_store %arg8[%c2_111, %c0_112, %c256_113], %127 {strides = array<i32>} : memref<3x64x384xbf16, #tpu.memory_space<vmem>>, vector<1x64x128xbf16>,
      %cst_114 = arith.constant 0.000000e+00 : f32
      %128 = vector.broadcast %cst_114 : f32 to vector<1x8x128xf32>
      %c0_115 = arith.constant 0 : index
      %c0_116 = arith.constant 0 : index
      %c0_117 = arith.constant 0 : index
      %129 = vector.load %arg6[%c0_115, %c0_116, %c0_117] : memref<1x8x128xf32, #tpu.memory_space<vmem>>, vector<1x8x128xf32>
      tpu.vector_store %arg6[%c0_115, %c0_116, %c0_117], %128 {strides = array<i32>} : memref<1x8x128xf32, #tpu.memory_space<vmem>>, vector<1x8x128xf32>,
    } else {
    }
    %c64_i32 = arith.constant 64 : i32
    %3 = arith.muli %arg1, %c64_i32 : i32
    %4 = tpu.assume_multiple %3, 64 : i32
    %cst = arith.constant 0.000000e+00 : f32
    %5 = vector.broadcast %cst : f32 to vector<64x128xf32>
    %c0 = arith.constant 0 : index
    %6 = arith.index_cast %4 : i32 to index
    %c0_1 = arith.constant 0 : index
    %7 = vector.load %arg8[%c0, %6, %c0_1] : memref<3x64x384xbf16, #tpu.memory_space<vmem>>, vector<1x64x384xbf16>
    %8 = vector.shape_cast %7 : vector<1x64x384xbf16> to vector<64x384xbf16>
    %c0_2 = arith.constant 0 : index
    %c0_3 = arith.constant 0 : index
    %c0_4 = arith.constant 0 : index
    %9 = vector.load %arg4[%c0_2, %c0_3, %c0_4] : memref<3x384x128xbf16, #tpu.memory_space<vmem>>, vector<1x384x128xbf16>
    %10 = vector.shape_cast %9 : vector<1x384x128xbf16> to vector<384x128xbf16>
    %cst_5 = arith.constant dense<0.000000e+00> : vector<64x128xf32>
    %11 = tpu.matmul %8, %10, %cst_5 {dimension_numbers = #tpu.dot_dimension_numbers<[1], [0], [0], [1], [0, 0, 1, 1], [], []>} : vector<64x384xbf16>, vector<384x128xbf16>, vector<64x128xf32> -> vector<64x128xf32>
    %12 = arith.addf %5, %11 : vector<64x128xf32>
    %c1 = arith.constant 1 : index
    %13 = arith.index_cast %4 : i32 to index
    %c0_6 = arith.constant 0 : index
    %14 = vector.load %arg8[%c1, %13, %c0_6] : memref<3x64x384xbf16, #tpu.memory_space<vmem>>, vector<1x64x384xbf16>
    %15 = vector.shape_cast %14 : vector<1x64x384xbf16> to vector<64x384xbf16>
    %c1_7 = arith.constant 1 : index
    %c0_8 = arith.constant 0 : index
    %c0_9 = arith.constant 0 : index
    %16 = vector.load %arg4[%c1_7, %c0_8, %c0_9] : memref<3x384x128xbf16, #tpu.memory_space<vmem>>, vector<1x384x128xbf16>
    %17 = vector.shape_cast %16 : vector<1x384x128xbf16> to vector<384x128xbf16>
    %cst_10 = arith.constant dense<0.000000e+00> : vector<64x128xf32>
    %18 = tpu.matmul %15, %17, %cst_10 {dimension_numbers = #tpu.dot_dimension_numbers<[1], [0], [0], [1], [0, 0, 1, 1], [], []>} : vector<64x384xbf16>, vector<384x128xbf16>, vector<64x128xf32> -> vector<64x128xf32>
    %19 = arith.addf %12, %18 : vector<64x128xf32>
    %c2 = arith.constant 2 : index
    %20 = arith.index_cast %4 : i32 to index
    %c0_11 = arith.constant 0 : index
    %21 = vector.load %arg8[%c2, %20, %c0_11] : memref<3x64x384xbf16, #tpu.memory_space<vmem>>, vector<1x64x384xbf16>
    %22 = vector.shape_cast %21 : vector<1x64x384xbf16> to vector<64x384xbf16>
    %c2_12 = arith.constant 2 : index
    %c0_13 = arith.constant 0 : index
    %c0_14 = arith.constant 0 : index
    %23 = vector.load %arg4[%c2_12, %c0_13, %c0_14] : memref<3x384x128xbf16, #tpu.memory_space<vmem>>, vector<1x384x128xbf16>
    %24 = vector.shape_cast %23 : vector<1x384x128xbf16> to vector<384x128xbf16>
    %cst_15 = arith.constant dense<0.000000e+00> : vector<64x128xf32>
    %25 = tpu.matmul %22, %24, %cst_15 {dimension_numbers = #tpu.dot_dimension_numbers<[1], [0], [0], [1], [0, 0, 1, 1], [], []>} : vector<64x384xbf16>, vector<384x128xbf16>, vector<64x128xf32> -> vector<64x128xf32>
    %26 = arith.addf %19, %25 : vector<64x128xf32>
    %c2_16 = arith.constant 2 : index
    %c0_17 = arith.constant 0 : index
    %27 = vector.load %arg2[%c2_16, %c0_17] : memref<8x128xf32, #tpu.memory_space<vmem>>, vector<1x128xf32>
    %28 = vector.broadcast %27 : vector<1x128xf32> to vector<64x128xf32>
    %29 = arith.addf %26, %28 : vector<64x128xf32>
    %30 = arith.truncf %29 : vector<64x128xf32> to vector<64x128xbf16>
    %c0_18 = arith.constant 0 : index
    %c0_19 = arith.constant 0 : index
    %31 = vector.load %arg5[%c0_18, %c0_19] : memref<64x128xbf16, #tpu.memory_space<vmem>>, vector<64x128xbf16>
    tpu.vector_store %arg5[%c0_18, %c0_19], %30 {strides = array<i32>} : memref<64x128xbf16, #tpu.memory_space<vmem>>, vector<64x128xbf16>,
    %c0_20 = arith.constant 0 : index
    %c0_21 = arith.constant 0 : index
    %c0_22 = arith.constant 0 : index
    %32 = vector.load %arg6[%c0_20, %c0_21, %c0_22] : memref<1x8x128xf32, #tpu.memory_space<vmem>>, vector<1x1x128xf32>
    %33 = vector.shape_cast %32 : vector<1x1x128xf32> to vector<1x128xf32>
    %cst_23 = arith.constant dense<0.000000e+00> : vector<128xf32>
    %34 = vector.multi_reduction <add>, %29, %cst_23 [0] : vector<64x128xf32> to vector<128xf32>
    %35 = vector.shape_cast %34 : vector<128xf32> to vector<1x128xf32>
    %36 = arith.addf %33, %35 : vector<1x128xf32>
    %c0_24 = arith.constant 0 : index
    %c0_25 = arith.constant 0 : index
    %c0_26 = arith.constant 0 : index
    %37 = vector.load %arg6[%c0_24, %c0_25, %c0_26] : memref<1x8x128xf32, #tpu.memory_space<vmem>>, vector<1x1x128xf32>
    %38 = vector.shape_cast %37 : vector<1x1x128xf32> to vector<1x128xf32>
    %39 = vector.shape_cast %36 : vector<1x128xf32> to vector<1x1x128xf32>
    tpu.vector_store %arg6[%c0_24, %c0_25, %c0_26], %39 {strides = array<i32>} : memref<1x8x128xf32, #tpu.memory_space<vmem>>, vector<1x1x128xf32>,
    %c0_27 = arith.constant 0 : index
    %c1_28 = arith.constant 1 : index
    %c0_29 = arith.constant 0 : index
    %40 = vector.load %arg6[%c0_27, %c1_28, %c0_29] : memref<1x8x128xf32, #tpu.memory_space<vmem>>, vector<1x1x128xf32>
    %41 = vector.shape_cast %40 : vector<1x1x128xf32> to vector<1x128xf32>
    %42 = arith.mulf %29, %29 : vector<64x128xf32>
    %cst_30 = arith.constant dense<0.000000e+00> : vector<128xf32>
    %43 = vector.multi_reduction <add>, %42, %cst_30 [0] : vector<64x128xf32> to vector<128xf32>
    %44 = vector.shape_cast %43 : vector<128xf32> to vector<1x128xf32>
    %45 = arith.addf %41, %44 : vector<1x128xf32>
    %c0_31 = arith.constant 0 : index
    %c1_32 = arith.constant 1 : index
    %c0_33 = arith.constant 0 : index
    %46 = vector.load %arg6[%c0_31, %c1_32, %c0_33] : memref<1x8x128xf32, #tpu.memory_space<vmem>>, vector<1x1x128xf32>
    %47 = vector.shape_cast %46 : vector<1x1x128xf32> to vector<1x128xf32>
    %48 = vector.shape_cast %45 : vector<1x128xf32> to vector<1x1x128xf32>
    tpu.vector_store %arg6[%c0_31, %c1_32, %c0_33], %48 {strides = array<i32>} : memref<1x8x128xf32, #tpu.memory_space<vmem>>, vector<1x1x128xf32>,
    return
  }
  func.func @transform_0(%arg0: i32, %arg1: i32) -> (i32, i32) {
    %c0_i32 = arith.constant 0 : i32
    %c0_i32_0 = arith.constant 0 : i32
    %c0_i32_1 = arith.constant 0 : i32
    return %c0_i32, %c0_i32_0 : i32, i32
  }
  func.func @transform_1(%arg0: i32, %arg1: i32) -> (i32, i32, i32, i32) {
    %c0_i32 = arith.constant 0 : i32
    %c0_i32_0 = arith.constant 0 : i32
    %c0_i32_1 = arith.constant 0 : i32
    %c0_i32_2 = arith.constant 0 : i32
    return %arg0, %c0_i32, %c0_i32_0, %c0_i32_1 : i32, i32, i32, i32
  }
  func.func @transform_2(%arg0: i32, %arg1: i32) -> (i32, i32, i32) {
    %c0_i32 = arith.constant 0 : i32
    %c0_i32_0 = arith.constant 0 : i32
    %c0_i32_1 = arith.constant 0 : i32
    %c0_i32_2 = arith.constant 0 : i32
    return %c0_i32, %c0_i32_0, %c0_i32_1 : i32, i32, i32
  }
  func.func @transform_3(%arg0: i32, %arg1: i32) -> (i32, i32) {
    %c1_i32 = arith.constant 1 : i32
    %0 = arith.muli %arg0, %c1_i32 : i32
    %1 = arith.addi %0, %arg1 : i32
    %c0_i32 = arith.constant 0 : i32
    %c0_i32_0 = arith.constant 0 : i32
    return %1, %c0_i32 : i32, i32
  }
  func.func @transform_4(%arg0: i32, %arg1: i32) -> (i32, i32, i32) {
    %c0_i32 = arith.constant 0 : i32
    %c0_i32_0 = arith.constant 0 : i32
    %c0_i32_1 = arith.constant 0 : i32
    return %arg0, %c0_i32, %c0_i32_0 : i32, i32, i32
  }
}

module attributes {stable_mosaic.version = 11 : i64} {
  func.func @_affine_lrelu_kernel(%arg0: i32, %arg1: memref<1x128xf32, #tpu.memory_space<vmem>>, %arg2: memref<1x128xf32, #tpu.memory_space<vmem>>, %arg3: memref<128x128xbf16, #tpu.memory_space<vmem>>, %arg4: memref<128x128xf32, #tpu.memory_space<vmem>>) attributes {dimension_semantics = [#tpu.dimension_semantics<parallel>], iteration_bounds = array<i64: 1>, scalar_prefetch = 0 : i64, scratch_operands = 0 : i64, tpu.core_type = #tpu.core_type<tc>, window_params = [{pipeline_mode = #tpu.pipeline_mode<synchronous>, transform_indices = @transform_0, window_bounds = array<i64: 1, 128>}, {pipeline_mode = #tpu.pipeline_mode<synchronous>, transform_indices = @transform_1, window_bounds = array<i64: 1, 128>}, {transform_indices = @transform_2, window_bounds = array<i64: 128, 128>}, {transform_indices = @transform_3, window_bounds = array<i64: 128, 128>}]} {
    %c0 = arith.constant 0 : index
    %c0_0 = arith.constant 0 : index
    %0 = vector.load %arg3[%c0, %c0_0] : memref<128x128xbf16, #tpu.memory_space<vmem>>, vector<128x128xbf16>
    %1 = arith.extf %0 : vector<128x128xbf16> to vector<128x128xf32>
    %c0_1 = arith.constant 0 : index
    %c0_2 = arith.constant 0 : index
    %2 = vector.load %arg1[%c0_1, %c0_2] : memref<1x128xf32, #tpu.memory_space<vmem>>, vector<1x128xf32>
    %3 = vector.broadcast %2 : vector<1x128xf32> to vector<128x128xf32>
    %4 = arith.mulf %1, %3 : vector<128x128xf32>
    %c0_3 = arith.constant 0 : index
    %c0_4 = arith.constant 0 : index
    %5 = vector.load %arg2[%c0_3, %c0_4] : memref<1x128xf32, #tpu.memory_space<vmem>>, vector<1x128xf32>
    %6 = vector.broadcast %5 : vector<1x128xf32> to vector<128x128xf32>
    %7 = arith.addf %4, %6 : vector<128x128xf32>
    %cst = arith.constant 0.000000e+00 : f32
    %8 = vector.broadcast %cst : f32 to vector<128x128xf32>
    %9 = arith.cmpf oge, %7, %8 : vector<128x128xf32>
    %cst_5 = arith.constant 0.00999999977 : f32
    %10 = vector.broadcast %cst_5 : f32 to vector<128x128xf32>
    %11 = arith.mulf %10, %7 : vector<128x128xf32>
    %12 = arith.select %9, %7, %11 : vector<128x128xi1>, vector<128x128xf32>
    %c0_6 = arith.constant 0 : index
    %c0_7 = arith.constant 0 : index
    %13 = vector.load %arg4[%c0_6, %c0_7] : memref<128x128xf32, #tpu.memory_space<vmem>>, vector<128x128xf32>
    tpu.vector_store %arg4[%c0_6, %c0_7], %12 {strides = array<i32>} : memref<128x128xf32, #tpu.memory_space<vmem>>, vector<128x128xf32>,
    return
  }
  func.func @transform_0(%arg0: i32) -> (i32, i32) {
    %c0_i32 = arith.constant 0 : i32
    %c0_i32_0 = arith.constant 0 : i32
    %c0_i32_1 = arith.constant 0 : i32
    return %c0_i32, %c0_i32_0 : i32, i32
  }
  func.func @transform_1(%arg0: i32) -> (i32, i32) {
    %c0_i32 = arith.constant 0 : i32
    %c0_i32_0 = arith.constant 0 : i32
    %c0_i32_1 = arith.constant 0 : i32
    return %c0_i32, %c0_i32_0 : i32, i32
  }
  func.func @transform_2(%arg0: i32) -> (i32, i32) {
    %c0_i32 = arith.constant 0 : i32
    %c0_i32_0 = arith.constant 0 : i32
    return %arg0, %c0_i32 : i32, i32
  }
  func.func @transform_3(%arg0: i32) -> (i32, i32) {
    %c0_i32 = arith.constant 0 : i32
    %c0_i32_0 = arith.constant 0 : i32
    return %arg0, %c0_i32 : i32, i32
  }
}

</mosaic_0001>

<llo_original>
// kernel: conv_block_forward.5
$region0: #{conv_block_forward.5}
  #allocation0 [shape = 'u32[]', space=smem, size = 0x4, offset = 0x4, fixed_abs, tag = 'smem constant byte address 0x4 - core index']
  #allocation1 [shape = 'u32[72,128]{1,0:T(1,128)}', space=vmem, size = 0x9000, scoped, tag = 'internal scratch']
  %s0 = inlined_call_operand.vmem [shape: f32[1,128], index: 0, kind: input, shape index: {}]
  %s1 = inlined_call_operand.vmem [shape: f32[1,128], index: 1, kind: input, shape index: {}]
  %s2 = inlined_call_operand.vmem [shape: bf16[128,128], index: 2, kind: input, shape index: {}]
  %s3 = inlined_call_operand.vmem [shape: f32[128,128], index: 3, kind: output, shape index: {}]
  %s4 = sld [smem:[#allocation0]]
  $region22: #{conv_block_forward.5} parent=0
    _
  %s6 = ssub.s32 1, %s4
  %s7 = scalar_select 0, %s6, %s4
  // Predicated region
  $region2: #{conv_block_forward.5} parent=0 // pred_check
    _
  $region3: #{conv_block_forward.5} parent=0 // pred_check_branch
    %9 = sbr.rel (0) target = $region5
  $region4: #{conv_block_forward.5} parent=0 // pred_region
    _
  $region5: #{conv_block_forward.5} parent=0 // pred_fallthru
    _
  // Predicated region
  $region6: #{conv_block_forward.5} parent=0 // pred_check
    _
  $region7: #{conv_block_forward.5} parent=0 // pred_check_branch
    %11 = sbr.rel (0) target = $region9
  $region8: #{conv_block_forward.5} parent=0 // pred_region
    _
  $region9: #{conv_block_forward.5} parent=0 // pred_fallthru
    _
  // Predicated region
  $region10: #{conv_block_forward.5} parent=0 // pred_check
    _
  $region11: #{conv_block_forward.5} parent=0 // pred_check_branch
    %13 = sbr.rel (0) target = $region13
  $region12: #{conv_block_forward.5} parent=0 // pred_region
    _
  $region13: #{conv_block_forward.5} parent=0 // pred_fallthru
    _
  %v14 = vld [vmem:[%s2] sm:$0xf]
  %v15 = vld [vmem:[%s2 + $0x4] sm:$0xf]
  %v16 = vld [vmem:[%s2 + $0x8] sm:$0xf]
  %v17 = vld [vmem:[%s2 + $0xc] sm:$0xf]
  %v18 = vld [vmem:[%s2 + $0x10] sm:$0xf]
  %v19 = vld [vmem:[%s2 + $0x14] sm:$0xf]
  %v20 = vld [vmem:[%s2 + $0x18] sm:$0xf]
  %v21 = vld [vmem:[%s2 + $0x1c] sm:$0xf]
  %v22 = vld [vmem:[%s2 + $0x20] sm:$0xf]
  %v23 = vld [vmem:[%s2 + $0x24] sm:$0xf]
  %v24 = vld [vmem:[%s2 + $0x28] sm:$0xf]
  %v25 = vld [vmem:[%s2 + $0x2c] sm:$0xf]
  %v26 = vld [vmem:[%s2 + $0x30] sm:$0xf]
  %v27 = vld [vmem:[%s2 + $0x34] sm:$0xf]
  %v28 = vld [vmem:[%s2 + $0x38] sm:$0xf]
  %v29 = vld [vmem:[%s2 + $0x3c] sm:$0xf]
  %v30 = vunpack.c.l.bf16 %v14
  %v31 = vunpack.c.l.bf16 %v15
  %v32 = vunpack.c.l.bf16 %v16
  %v33 = vunpack.c.l.bf16 %v17
  %v34 = vunpack.c.l.bf16 %v18
  %v35 = vunpack.c.l.bf16 %v19
  %v36 = vunpack.c.l.bf16 %v20
  %v37 = vunpack.c.l.bf16 %v21
  %v38 = vunpack.c.l.bf16 %v22
  %v39 = vunpack.c.l.bf16 %v23
  %v40 = vunpack.c.l.bf16 %v24
  %v41 = vunpack.c.l.bf16 %v25
  %v42 = vunpack.c.l.bf16 %v26
  %v43 = vunpack.c.l.bf16 %v27
  %v44 = vunpack.c.l.bf16 %v28
  %v45 = vunpack.c.l.bf16 %v29
  %v46 = vld [vmem:[%s0] sm:$0x1]
  %v48 = vperm.slane %v46, 0
  %v50 = vmul.f32 %v30, %v48
  %v51 = vmul.f32 %v31, %v48
  %v52 = vmul.f32 %v32, %v48
  %v53 = vmul.f32 %v33, %v48
  %v54 = vmul.f32 %v34, %v48
  %v55 = vmul.f32 %v35, %v48
  %v56 = vmul.f32 %v36, %v48
  %v57 = vmul.f32 %v37, %v48
  %v58 = vmul.f32 %v38, %v48
  %v59 = vmul.f32 %v39, %v48
  %v60 = vmul.f32 %v40, %v48
  %v61 = vmul.f32 %v41, %v48
  %v62 = vmul.f32 %v42, %v48
  %v63 = vmul.f32 %v43, %v48
  %v64 = vmul.f32 %v44, %v48
  %v65 = vmul.f32 %v45, %v48
  %v66 = vld [vmem:[%s1] sm:$0x1]
  %v68 = vperm.slane %v66, 0
  %v70 = vadd.f32 %v50, %v68
  %v71 = vadd.f32 %v51, %v68
  %v72 = vadd.f32 %v52, %v68
  %v73 = vadd.f32 %v53, %v68
  %v74 = vadd.f32 %v54, %v68
  %v75 = vadd.f32 %v55, %v68
  %v76 = vadd.f32 %v56, %v68
  %v77 = vadd.f32 %v57, %v68
  %v78 = vadd.f32 %v58, %v68
  %v79 = vadd.f32 %v59, %v68
  %v80 = vadd.f32 %v60, %v68
  %v81 = vadd.f32 %v61, %v68
  %v82 = vadd.f32 %v62, %v68
  %v83 = vadd.f32 %v63, %v68
  %v84 = vadd.f32 %v64, %v68
  %v85 = vadd.f32 %v65, %v68
  %vm86 = vcmp.ge.f32.partialorder %v70, 0.0
  %vm87 = vcmp.ge.f32.partialorder %v71, 0.0
  %vm88 = vcmp.ge.f32.partialorder %v72, 0.0
  %vm89 = vcmp.ge.f32.partialorder %v73, 0.0
  %vm90 = vcmp.ge.f32.partialorder %v74, 0.0
  %vm91 = vcmp.ge.f32.partialorder %v75, 0.0
  %vm92 = vcmp.ge.f32.partialorder %v76, 0.0
  %vm93 = vcmp.ge.f32.partialorder %v77, 0.0
  %vm94 = vcmp.ge.f32.partialorder %v78, 0.0
  %vm95 = vcmp.ge.f32.partialorder %v79, 0.0
  %vm96 = vcmp.ge.f32.partialorder %v80, 0.0
  %vm97 = vcmp.ge.f32.partialorder %v81, 0.0
  %vm98 = vcmp.ge.f32.partialorder %v82, 0.0
  %vm99 = vcmp.ge.f32.partialorder %v83, 0.0
  %vm100 = vcmp.ge.f32.partialorder %v84, 0.0
  %vm101 = vcmp.ge.f32.partialorder %v85, 0.0
  %v102 = vmul.f32 %v70, 0.01
  %v103 = vmul.f32 %v71, 0.01
  %v104 = vmul.f32 %v72, 0.01
  %v105 = vmul.f32 %v73, 0.01
  %v106 = vmul.f32 %v74, 0.01
  %v107 = vmul.f32 %v75, 0.01
  %v108 = vmul.f32 %v76, 0.01
  %v109 = vmul.f32 %v77, 0.01
  %v110 = vmul.f32 %v78, 0.01
  %v111 = vmul.f32 %v79, 0.01
  %v112 = vmul.f32 %v80, 0.01
  %v113 = vmul.f32 %v81, 0.01
  %v114 = vmul.f32 %v82, 0.01
  %v115 = vmul.f32 %v83, 0.01
  %v116 = vmul.f32 %v84, 0.01
  %v117 = vmul.f32 %v85, 0.01
  %v118 = vsel %vm86, %v70, %v102
  %v119 = vsel %vm87, %v71, %v103
  %v120 = vsel %vm88, %v72, %v104
  %v121 = vsel %vm89, %v73, %v105
  %v122 = vsel %vm90, %v74, %v106
  %v123 = vsel %vm91, %v75, %v107
  %v124 = vsel %vm92, %v76, %v108
  %v125 = vsel %vm93, %v77, %v109
  %v126 = vsel %vm94, %v78, %v110
  %v127 = vsel %vm95, %v79, %v111
  %v128 = vsel %vm96, %v80, %v112
  %v129 = vsel %vm97, %v81, %v113
  %v130 = vsel %vm98, %v82, %v114
  %v131 = vsel %vm99, %v83, %v115
  %v132 = vsel %vm100, %v84, %v116
  %v133 = vsel %vm101, %v85, %v117
  %134 = vst [vmem:[%s3] sm:$0xff] %v118
  %135 = vst [vmem:[%s3 + $0x8] sm:$0xff] %v119
  %136 = vst [vmem:[%s3 + $0x10] sm:$0xff] %v120
  %137 = vst [vmem:[%s3 + $0x18] sm:$0xff] %v121
  %138 = vst [vmem:[%s3 + $0x20] sm:$0xff] %v122
  %139 = vst [vmem:[%s3 + $0x28] sm:$0xff] %v123
  %140 = vst [vmem:[%s3 + $0x30] sm:$0xff] %v124
  %141 = vst [vmem:[%s3 + $0x38] sm:$0xff] %v125
  %142 = vst [vmem:[%s3 + $0x40] sm:$0xff] %v126
  %143 = vst [vmem:[%s3 + $0x48] sm:$0xff] %v127
  %144 = vst [vmem:[%s3 + $0x50] sm:$0xff] %v128
  %145 = vst [vmem:[%s3 + $0x58] sm:$0xff] %v129
  %146 = vst [vmem:[%s3 + $0x60] sm:$0xff] %v130
  %147 = vst [vmem:[%s3 + $0x68] sm:$0xff] %v131
  %148 = vst [vmem:[%s3 + $0x70] sm:$0xff] %v132
  %149 = vst [vmem:[%s3 + $0x78] sm:$0xff] %v133
  // Predicated region
  $region14: #{conv_block_forward.5} parent=0 // pred_check
    _
  $region15: #{conv_block_forward.5} parent=0 // pred_check_branch
    %151 = sbr.rel (0) target = $region17
  $region16: #{conv_block_forward.5} parent=0 // pred_region
    _
  $region17: #{conv_block_forward.5} parent=0 // pred_fallthru
    _
  // Predicated region
  $region18: #{conv_block_forward.5} parent=0 // pred_check
    _
  $region19: #{conv_block_forward.5} parent=0 // pred_check_branch
    %153 = sbr.rel (0) target = $region21
  $region20: #{conv_block_forward.5} parent=0 // pred_region
    _
  $region21: #{conv_block_forward.5} parent=0 // pred_fallthru
    _

// kernel: conv_block_forward.4
$region0: #{conv_block_forward.4}
  #allocation0 [shape = 'u32[]', space=smem, size = 0x4, offset = 0x4, fixed_abs, tag = 'smem constant byte address 0x4 - core index']
  #allocation1 [shape = 'u32[72,128]{1,0:T(1,128)}', space=vmem, size = 0x9000, scoped, tag = 'internal scratch']
  #allocation2 [shape = 'f32[18,18,128]{2,1,0:T(8,128)}', space=vmem, size = 0x36000, scoped, tag = 'scratch operand']
  #allocation3 [shape = 'bf16[3,64,384]{2,1,0:T(8,128)(2,1)}', space=vmem, size = 0x24000, scoped, tag = 'scratch operand']
  %s0 = inlined_call_operand.vmem [shape: f32[8,128], index: 0, kind: input, shape index: {}]
  %s1 = inlined_call_operand.vmem [shape: bf16[2,16,16,128], index: 1, kind: input, shape index: {}]
  %s2 = inlined_call_operand.vmem [shape: bf16[3,384,128], index: 2, kind: input, shape index: {}]
  %s3 = inlined_call_operand.vmem [shape: bf16[128,128], index: 3, kind: output, shape index: {0}]
  %s4 = inlined_call_operand.vmem [shape: f32[2,8,128], index: 4, kind: output, shape index: {1}]
  %5 = xla_tuple %s3, %s4
  %s6 = sld [smem:[#allocation0]]
  $region57: #{conv_block_forward.4} parent=0
    _
  %s8 = ssub.s32 1, %s6
  %s9 = scalar_select 0, %s8, %s6
  loop: start=0, step=1, limit=4
  $region2: #{conv_block_forward.4} parent=0 // loop_pre_header
    _
  $region3: #{conv_block_forward.4} parent=0 // loop_header
    %s11 = sphi 0, %s15
    %p12 = scmp.ge.s32.totalorder %s11, 4
    %s18 = sphi 0, %s30
    %s19 = sphi 0, %s26
    %s20 = sphi 0, %s18
    %s21 = sphi 0, %s19
    %s22 = sphi 0, %s20
    %s23 = sphi 0, %s21
    %s31 = sphi 0, %s31
    %s33 = sphi 0, %s31
    %s34 = sphi 0, %s33
    %s48 = sphi 0, %s34
    %s54 = sphi 0, %s56
    %s57 = sphi 0, %s54
    %s58 = sphi 0, %s57
    %s74 = sphi 0, %s58
    %s78 = sphi 0, %s78
    %s80 = sphi 0, %s78
    %s81 = sphi 0, %s80
    %s95 = sphi 0, %s81
    %s103 = sphi 0, %s105
    %s106 = sphi 0, %s103
    %s107 = sphi 0, %s106
    %s123 = sphi 0, %s107
    %s129 = sphi 0, %s131
    %s132 = sphi 0, %s129
    %s133 = sphi 0, %s132
    %s149 = sphi 0, %s133
  $region4: #{conv_block_forward.4} parent=0 // loop_header_branch
    %14 = sbr.rel (%p12) target = $region8
  $region5: #{conv_block_forward.4} parent=0 // loop_body
    %s16 = ssub.s32 %s11, 1
    %s17 = ssub.s32 %s11, 2
    %s24 = sadd.s32 1, %s19
    %p25 = scmp.ge.s32.totalorder %s24, 1
    %s26 = scalar_select %p25, 0, %s24
    %s27 = sadd.s32 1, %s18
    %s28 = scalar_select %p25, %s27, %s18
    %p29 = scmp.ge.s32.totalorder %s28, 2
    %s30 = scalar_select %p29, 0, %s28
    %s32 = sadd.s32 %s31, 1
    %p35 = scmp.eq.s32.totalorder %s11, 1
    %p36 = scmp.ne.s32.totalorder %s31, %s33
    %p37 = scmp.eq.s32.totalorder %s11, 0
    %p38 = por %p36, %p37
    %p39 = scmp.ne.s32.totalorder %s31, %s33
    %p40 = scmp.eq.s32.totalorder %s16, 1
    %p41 = por %p39, %p40
    %p42 = scmp.ne.s32.totalorder %s33, %s34
    %p43 = scmp.eq.s32.totalorder %s16, 0
    %p44 = por %p42, %p43
    %p45 = scmp.ne.s32.totalorder %s33, %s34
    %p46 = scmp.eq.s32.totalorder %s17, 1
    %p47 = por %p45, %p46
    %p49 = scmp.ne.s32.totalorder %s34, %s48
    %p50 = scmp.eq.s32.totalorder %s17, 0
    %p51 = por %p49, %p50
    %s52 = ssub.s32 %s18, %s30
    %p53 = scmp.eq.s32.totalorder %s52, 0
    %s55 = sadd.s32 %s54, 1
    %s56 = scalar_select %p53, %s54, %s55
    %p59 = pneg %p53
    %p60 = scmp.eq.s32.totalorder %s11, 1
    %p61 = por %p59, %p60
    %p62 = scmp.ne.s32.totalorder %s54, %s57
    %p63 = scmp.eq.s32.totalorder %s11, 0
    %p64 = por %p62, %p63
    %p65 = scmp.ne.s32.totalorder %s54, %s57
    %p66 = scmp.eq.s32.totalorder %s16, 1
    %p67 = por %p65, %p66
    %p68 = scmp.ne.s32.totalorder %s57, %s58
    %p69 = scmp.eq.s32.totalorder %s16, 0
    %p70 = por %p68, %p69
    %p71 = scmp.ne.s32.totalorder %s57, %s58
    %p72 = scmp.eq.s32.totalorder %s17, 1
    %p73 = por %p71, %p72
    %p75 = scmp.ne.s32.totalorder %s58, %s74
    %p76 = scmp.eq.s32.totalorder %s17, 0
    %p77 = por %p75, %p76
    %s79 = sadd.s32 %s78, 1
    %p82 = scmp.eq.s32.totalorder %s11, 1
    %p83 = scmp.ne.s32.totalorder %s78, %s80
    %p84 = scmp.eq.s32.totalorder %s11, 0
    %p85 = por %p83, %p84
    %p86 = scmp.ne.s32.totalorder %s78, %s80
    %p87 = scmp.eq.s32.totalorder %s16, 1
    %p88 = por %p86, %p87
    %p89 = scmp.ne.s32.totalorder %s80, %s81
    %p90 = scmp.eq.s32.totalorder %s16, 0
    %p91 = por %p89, %p90
    %p92 = scmp.ne.s32.totalorder %s80, %s81
    %p93 = scmp.eq.s32.totalorder %s17, 1
    %p94 = por %p92, %p93
    %p96 = scmp.ne.s32.totalorder %s81, %s95
    %p97 = scmp.eq.s32.totalorder %s17, 0
    %p98 = por %p96, %p97
    %s99 = sadd.s32 %s18, %s19
    %s100 = sadd.s32 %s30, %s26
    %s101 = ssub.s32 %s99, %s100
    %p102 = scmp.eq.s32.totalorder %s101, 0
    %s104 = sadd.s32 %s103, 1
    %s105 = scalar_select %p102, %s103, %s104
    %p108 = pneg %p102
    %p109 = scmp.eq.s32.totalorder %s11, 1
    %p110 = por %p108, %p109
    %p111 = scmp.ne.s32.totalorder %s103, %s106
    %p112 = scmp.eq.s32.totalorder %s11, 0
    %p113 = por %p111, %p112
    %p114 = scmp.ne.s32.totalorder %s103, %s106
    %p115 = scmp.eq.s32.totalorder %s16, 1
    %p116 = por %p114, %p115
    %p117 = scmp.ne.s32.totalorder %s106, %s107
    %p118 = scmp.eq.s32.totalorder %s16, 0
    %p119 = por %p117, %p118
    %p120 = scmp.ne.s32.totalorder %s106, %s107
    %p121 = scmp.eq.s32.totalorder %s17, 1
    %p122 = por %p120, %p121
    %p124 = scmp.ne.s32.totalorder %s107, %s123
    %p125 = scmp.eq.s32.totalorder %s17, 0
    %p126 = por %p124, %p125
    %s127 = ssub.s32 %s18, %s30
    %p128 = scmp.eq.s32.totalorder %s127, 0
    %s130 = sadd.s32 %s129, 1
    %s131 = scalar_select %p128, %s129, %s130
    %p134 = pneg %p128
    %p135 = scmp.eq.s32.totalorder %s11, 1
    %p136 = por %p134, %p135
    %p137 = scmp.ne.s32.totalorder %s129, %s132
    %p138 = scmp.eq.s32.totalorder %s11, 0
    %p139 = por %p137, %p138
    %p140 = scmp.ne.s32.totalorder %s129, %s132
    %p141 = scmp.eq.s32.totalorder %s16, 1
    %p142 = por %p140, %p141
    %p143 = scmp.ne.s32.totalorder %s132, %s133
    %p144 = scmp.eq.s32.totalorder %s16, 0
    %p145 = por %p143, %p144
    %p146 = scmp.ne.s32.totalorder %s132, %s133
    %p147 = scmp.eq.s32.totalorder %s17, 1
    %p148 = por %p146, %p147
    %p150 = scmp.ne.s32.totalorder %s133, %s149
    %p151 = scmp.eq.s32.totalorder %s17, 0
    %p152 = por %p150, %p151
    %p153 = scmp.le.s32.totalorder 1, %s11
    %p154 = scmp.lt.s32.totalorder %s11, 3
    %p155 = pnand %p153, %p154
    %p156 = pneg %p155
    // Predicated region
    $region9: #{conv_block_forward.4} parent=5 // pred_check
      _
    $region10: #{conv_block_forward.4} parent=5 // pred_check_branch
      %158 = sbr.rel (%p155) target = $region12
    $region11: #{conv_block_forward.4} parent=5 // pred_region
      %s159 = ssub.s32 %s11, 1
      // Predicated region
      $region13: #{conv_block_forward.4} parent=11 // pred_check
        %p160 = pneg %p44
      $region14: #{conv_block_forward.4} parent=11 // pred_check_branch
        %162 = sbr.rel (%p160) target = $region16
      $region15: #{conv_block_forward.4} parent=11 // pred_region
        _
      $region16: #{conv_block_forward.4} parent=11 // pred_fallthru
        _
      // Predicated region
      $region17: #{conv_block_forward.4} parent=11 // pred_check
        %p163 = pneg %p91
      $region18: #{conv_block_forward.4} parent=11 // pred_check_branch
        %165 = sbr.rel (%p163) target = $region20
      $region19: #{conv_block_forward.4} parent=11 // pred_region
        _
      $region20: #{conv_block_forward.4} parent=11 // pred_fallthru
        _
    $region12: #{conv_block_forward.4} parent=5 // pred_fallthru
      _
    %p166 = scmp.lt.s32.totalorder %s11, 2
    // Predicated region
    $region21: #{conv_block_forward.4} parent=5 // pred_check
      %p167 = pneg %p166
    $region22: #{conv_block_forward.4} parent=5 // pred_check_branch
      %169 = sbr.rel (%p167) target = $region24
    $region23: #{conv_block_forward.4} parent=5 // pred_region
      // Predicated region
      $region25: #{conv_block_forward.4} parent=23 // pred_check
        %p170 = pneg %p64
      $region26: #{conv_block_forward.4} parent=23 // pred_check_branch
        %172 = sbr.rel (%p170) target = $region28
      $region27: #{conv_block_forward.4} parent=23 // pred_region
        %p173 = scmp.lt.s32.totalorder %s18, 1
        %s174 = scalar_select %p173, %s18, 1
        %s175 = smul.addr %s174, 32
        %s176 = smul.addr %s175, 4
        %s177 = scalar_lea.vmem %s1, %s176
      $region28: #{conv_block_forward.4} parent=23 // pred_fallthru
        _
    $region24: #{conv_block_forward.4} parent=5 // pred_fallthru
      _
    %p178 = scmp.le.s32.totalorder 1, %s11
    %p179 = scmp.lt.s32.totalorder %s11, 3
    %p180 = pnand %p178, %p179
    %p181 = pneg %p180
    // Predicated region
    $region29: #{conv_block_forward.4} parent=5 // pred_check
      _
    $region30: #{conv_block_forward.4} parent=5 // pred_check_branch
      %183 = sbr.rel (%p180) target = $region32
    $region31: #{conv_block_forward.4} parent=5 // pred_region
      %s184 = ssub.s32 %s11, 1
      %p185 = pneg %p44
      %p186 = pneg %p41
      %p187 = scmp.lt.s32.totalorder %s20, 1
      %s188 = scalar_select %p187, %s20, 1
      %s189 = smul.addr %s188, 32
      %s190 = smul.addr %s189, 4
      %s191 = scalar_lea.vmem %s1, %s190
      %p192 = pneg %p70
      %p193 = pneg %p67
      %p194 = pneg %p91
      %p195 = pneg %p88
      %p196 = pneg %p119
      %p197 = pneg %p116
      %s198 = sadd.s32 %s20, %s21
      %s199 = smul.u32 8, %s198
      %p200 = scmp.lt.s32.totalorder %s199, 15
      %s201 = scalar_select %p200, %s199, 15
      %s202 = smul.addr %s201, 4
      %s203 = scalar_lea.vmem %s3, %s202
      %p204 = pneg %p145
      %p205 = pneg %p142
      %p206 = scmp.lt.s32.totalorder %s20, 1
      %s207 = scalar_select %p206, %s20, 1
      %s208 = smul.addr %s207, 8
      %s209 = scalar_lea.vmem %s4, %s208
      %p210 = scmp.lt.s32.totalorder %s20, 1
      %s211 = scalar_select %p210, %s20, 1
      %s212 = smul.addr %s211, 32
      %s213 = smul.addr %s212, 4
      %s214 = scalar_lea.vmem %s1, %s213
      %s215 = sadd.s32 %s20, %s21
      %s216 = smul.u32 8, %s215
      %p217 = scmp.lt.s32.totalorder %s216, 15
      %s218 = scalar_select %p217, %s216, 15
      %s219 = smul.addr %s218, 4
      %s220 = scalar_lea.vmem %s3, %s219
      %s221 = sadd.s32 %s20, %s21
      %s222 = smul.u32 8, %s221
      %p223 = scmp.lt.s32.totalorder %s20, 1
      %s224 = scalar_select %p223, %s20, 1
      %s225 = smul.addr %s224, 8
      %s226 = scalar_lea.vmem %s4, %s225
      %p227 = scmp.eq.s32.totalorder %s21, 0
      // Predicated region
      $region33: #{conv_block_forward.4} parent=31 // pred_check
        %p228 = pneg %p227
      $region34: #{conv_block_forward.4} parent=31 // pred_check_branch
        %230 = sbr.rel (%p228) target = $region36
      $region35: #{conv_block_forward.4} parent=31 // pred_region
        %v231 = vld [vmem:[%s214] sm:$0xf]
        %v232 = vld [vmem:[%s214 + $0x4] sm:$0xf]
        %v233 = vld [vmem:[%s214 + $0x8] sm:$0xf]
        %v234 = vld [vmem:[%s214 + $0xc] sm:$0xf]
        %v235 = vld [vmem:[%s214 + $0x10] sm:$0xf]
        %v236 = vld [vmem:[%s214 + $0x14] sm:$0xf]
        %v237 = vld [vmem:[%s214 + $0x18] sm:$0xf]
        %v238 = vld [vmem:[%s214 + $0x1c] sm:$0xf]
        %v239 = vld [vmem:[%s214 + $0x20] sm:$0xf]
        %v240 = vld [vmem:[%s214 + $0x24] sm:$0xf]
        %v241 = vld [vmem:[%s214 + $0x28] sm:$0xf]
        %v242 = vld [vmem:[%s214 + $0x2c] sm:$0xf]
        %v243 = vld [vmem:[%s214 + $0x30] sm:$0xf]
        %v244 = vld [vmem:[%s214 + $0x34] sm:$0xf]
        %v245 = vld [vmem:[%s214 + $0x38] sm:$0xf]
        %v246 = vld [vmem:[%s214 + $0x3c] sm:$0xf]
        %v247 = vld [vmem:[%s214 + $0x40] sm:$0xf]
        %v248 = vld [vmem:[%s214 + $0x44] sm:$0xf]
        %v249 = vld [vmem:[%s214 + $0x48] sm:$0xf]
        %v250 = vld [vmem:[%s214 + $0x4c] sm:$0xf]
        %v251 = vld [vmem:[%s214 + $0x50] sm:$0xf]
        %v252 = vld [vmem:[%s214 + $0x54] sm:$0xf]
        %v253 = vld [vmem:[%s214 + $0x58] sm:$0xf]
        %v254 = vld [vmem:[%s214 + $0x5c] sm:$0xf]
        %v255 = vld [vmem:[%s214 + $0x60] sm:$0xf]
        %v256 = vld [vmem:[%s214 + $0x64] sm:$0xf]
        %v257 = vld [vmem:[%s214 + $0x68] sm:$0xf]
        %v258 = vld [vmem:[%s214 + $0x6c] sm:$0xf]
        %v259 = vld [vmem:[%s214 + $0x70] sm:$0xf]
        %v260 = vld [vmem:[%s214 + $0x74] sm:$0xf]
        %v261 = vld [vmem:[%s214 + $0x78] sm:$0xf]
        %v262 = vld [vmem:[%s214 + $0x7c] sm:$0xf]
        %v263 = vunpack.c.l.bf16 %v231
        %v264 = vunpack.c.l.bf16 %v232
        %v265 = vunpack.c.l.bf16 %v233
        %v266 = vunpack.c.l.bf16 %v234
        %v267 = vunpack.c.l.bf16 %v235
        %v268 = vunpack.c.l.bf16 %v236
        %v269 = vunpack.c.l.bf16 %v237
        %v270 = vunpack.c.l.bf16 %v238
        %v271 = vunpack.c.l.bf16 %v239
        %v272 = vunpack.c.l.bf16 %v240
        %v273 = vunpack.c.l.bf16 %v241
        %v274 = vunpack.c.l.bf16 %v242
        %v275 = vunpack.c.l.bf16 %v243
        %v276 = vunpack.c.l.bf16 %v244
        %v277 = vunpack.c.l.bf16 %v245
        %v278 = vunpack.c.l.bf16 %v246
        %v279 = vunpack.c.l.bf16 %v247
        %v280 = vunpack.c.l.bf16 %v248
        %v281 = vunpack.c.l.bf16 %v249
        %v282 = vunpack.c.l.bf16 %v250
        %v283 = vunpack.c.l.bf16 %v251
        %v284 = vunpack.c.l.bf16 %v252
        %v285 = vunpack.c.l.bf16 %v253
        %v286 = vunpack.c.l.bf16 %v254
        %v287 = vunpack.c.l.bf16 %v255
        %v288 = vunpack.c.l.bf16 %v256
        %v289 = vunpack.c.l.bf16 %v257
        %v290 = vunpack.c.l.bf16 %v258
        %v291 = vunpack.c.l.bf16 %v259
        %v292 = vunpack.c.l.bf16 %v260
        %v293 = vunpack.c.l.bf16 %v261
        %v294 = vunpack.c.l.bf16 %v262
        %v295 = vld [vmem:[%s0] sm:$0x1]
        %v296 = vld [vmem:[%s0 + $0x1] sm:$0x1]
        %v297 = vperm.slane %v295, 0
        %v298 = vmul.f32 %v263, %v297
        %v299 = vmul.f32 %v264, %v297
        %v300 = vmul.f32 %v265, %v297
        %v301 = vmul.f32 %v266, %v297
        %v302 = vmul.f32 %v267, %v297
        %v303 = vmul.f32 %v268, %v297
        %v304 = vmul.f32 %v269, %v297
        %v305 = vmul.f32 %v270, %v297
        %v306 = vmul.f32 %v271, %v297
        %v307 = vmul.f32 %v272, %v297
        %v308 = vmul.f32 %v273, %v297
        %v309 = vmul.f32 %v274, %v297
        %v310 = vmul.f32 %v275, %v297
        %v311 = vmul.f32 %v276, %v297
        %v312 = vmul.f32 %v277, %v297
        %v313 = vmul.f32 %v278, %v297
        %v314 = vmul.f32 %v279, %v297
        %v315 = vmul.f32 %v280, %v297
        %v316 = vmul.f32 %v281, %v297
        %v317 = vmul.f32 %v282, %v297
        %v318 = vmul.f32 %v283, %v297
        %v319 = vmul.f32 %v284, %v297
        %v320 = vmul.f32 %v285, %v297
        %v321 = vmul.f32 %v286, %v297
        %v322 = vmul.f32 %v287, %v297
        %v323 = vmul.f32 %v288, %v297
        %v324 = vmul.f32 %v289, %v297
        %v325 = vmul.f32 %v290, %v297
        %v326 = vmul.f32 %v291, %v297
        %v327 = vmul.f32 %v292, %v297
        %v328 = vmul.f32 %v293, %v297
        %v329 = vmul.f32 %v294, %v297
        %v330 = vperm.slane %v296, 0
        %v331 = vadd.f32 %v298, %v330
        %v332 = vadd.f32 %v299, %v330
        %v333 = vadd.f32 %v300, %v330
        %v334 = vadd.f32 %v301, %v330
        %v335 = vadd.f32 %v302, %v330
        %v336 = vadd.f32 %v303, %v330
        %v337 = vadd.f32 %v304, %v330
        %v338 = vadd.f32 %v305, %v330
        %v339 = vadd.f32 %v306, %v330
        %v340 = vadd.f32 %v307, %v330
        %v341 = vadd.f32 %v308, %v330
        %v342 = vadd.f32 %v309, %v330
        %v343 = vadd.f32 %v310, %v330
        %v344 = vadd.f32 %v311, %v330
        %v345 = vadd.f32 %v312, %v330
        %v346 = vadd.f32 %v313, %v330
        %v347 = vadd.f32 %v314, %v330
        %v348 = vadd.f32 %v315, %v330
        %v349 = vadd.f32 %v316, %v330
        %v350 = vadd.f32 %v317, %v330
        %v351 = vadd.f32 %v318, %v330
        %v352 = vadd.f32 %v319, %v330
        %v353 = vadd.f32 %v320, %v330
        %v354 = vadd.f32 %v321, %v330
        %v355 = vadd.f32 %v322, %v330
        %v356 = vadd.f32 %v323, %v330
        %v357 = vadd.f32 %v324, %v330
        %v358 = vadd.f32 %v325, %v330
        %v359 = vadd.f32 %v326, %v330
        %v360 = vadd.f32 %v327, %v330
        %v361 = vadd.f32 %v328, %v330
        %v362 = vadd.f32 %v329, %v330
        %vm363 = vcmp.ge.f32.partialorder %v331, 0.0
        %vm364 = vcmp.ge.f32.partialorder %v332, 0.0
        %vm365 = vcmp.ge.f32.partialorder %v333, 0.0
        %vm366 = vcmp.ge.f32.partialorder %v334, 0.0
        %vm367 = vcmp.ge.f32.partialorder %v335, 0.0
        %vm368 = vcmp.ge.f32.partialorder %v336, 0.0
        %vm369 = vcmp.ge.f32.partialorder %v337, 0.0
        %vm370 = vcmp.ge.f32.partialorder %v338, 0.0
        %vm371 = vcmp.ge.f32.partialorder %v339, 0.0
        %vm372 = vcmp.ge.f32.partialorder %v340, 0.0
        %vm373 = vcmp.ge.f32.partialorder %v341, 0.0
        %vm374 = vcmp.ge.f32.partialorder %v342, 0.0
        %vm375 = vcmp.ge.f32.partialorder %v343, 0.0
        %vm376 = vcmp.ge.f32.partialorder %v344, 0.0
        %vm377 = vcmp.ge.f32.partialorder %v345, 0.0
        %vm378 = vcmp.ge.f32.partialorder %v346, 0.0
        %vm379 = vcmp.ge.f32.partialorder %v347, 0.0
        %vm380 = vcmp.ge.f32.partialorder %v348, 0.0
        %vm381 = vcmp.ge.f32.partialorder %v349, 0.0
        %vm382 = vcmp.ge.f32.partialorder %v350, 0.0
        %vm383 = vcmp.ge.f32.partialorder %v351, 0.0
        %vm384 = vcmp.ge.f32.partialorder %v352, 0.0
        %vm385 = vcmp.ge.f32.partialorder %v353, 0.0
        %vm386 = vcmp.ge.f32.partialorder %v354, 0.0
        %vm387 = vcmp.ge.f32.partialorder %v355, 0.0
        %vm388 = vcmp.ge.f32.partialorder %v356, 0.0
        %vm389 = vcmp.ge.f32.partialorder %v357, 0.0
        %vm390 = vcmp.ge.f32.partialorder %v358, 0.0
        %vm391 = vcmp.ge.f32.partialorder %v359, 0.0
        %vm392 = vcmp.ge.f32.partialorder %v360, 0.0
        %vm393 = vcmp.ge.f32.partialorder %v361, 0.0
        %vm394 = vcmp.ge.f32.partialorder %v362, 0.0
        %v395 = vmul.f32 %v331, 0.01
        %v396 = vmul.f32 %v332, 0.01
        %v397 = vmul.f32 %v333, 0.01
        %v398 = vmul.f32 %v334, 0.01
        %v399 = vmul.f32 %v335, 0.01
        %v400 = vmul.f32 %v336, 0.01
        %v401 = vmul.f32 %v337, 0.01
        %v402 = vmul.f32 %v338, 0.01
        %v403 = vmul.f32 %v339, 0.01
        %v404 = vmul.f32 %v340, 0.01
        %v405 = vmul.f32 %v341, 0.01
        %v406 = vmul.f32 %v342, 0.01
        %v407 = vmul.f32 %v343, 0.01
        %v408 = vmul.f32 %v344, 0.01
        %v409 = vmul.f32 %v345, 0.01
        %v410 = vmul.f32 %v346, 0.01
        %v411 = vmul.f32 %v347, 0.01
        %v412 = vmul.f32 %v348, 0.01
        %v413 = vmul.f32 %v349, 0.01
        %v414 = vmul.f32 %v350, 0.01
        %v415 = vmul.f32 %v351, 0.01
        %v416 = vmul.f32 %v352, 0.01
        %v417 = vmul.f32 %v353, 0.01
        %v418 = vmul.f32 %v354, 0.01
        %v419 = vmul.f32 %v355, 0.01
        %v420 = vmul.f32 %v356, 0.01
        %v421 = vmul.f32 %v357, 0.01
        %v422 = vmul.f32 %v358, 0.01
        %v423 = vmul.f32 %v359, 0.01
        %v424 = vmul.f32 %v360, 0.01
        %v425 = vmul.f32 %v361, 0.01
        %v426 = vmul.f32 %v362, 0.01
        %v427 = vsel %vm363, %v331, %v395
        %v428 = vsel %vm364, %v332, %v396
        %v429 = vsel %vm365, %v333, %v397
        %v430 = vsel %vm366, %v334, %v398
        %v431 = vsel %vm367, %v335, %v399
        %v432 = vsel %vm368, %v336, %v400
        %v433 = vsel %vm369, %v337, %v401
        %v434 = vsel %vm370, %v338, %v402
        %v435 = vsel %vm371, %v339, %v403
        %v436 = vsel %vm372, %v340, %v404
        %v437 = vsel %vm373, %v341, %v405
        %v438 = vsel %vm374, %v342, %v406
        %v439 = vsel %vm375, %v343, %v407
        %v440 = vsel %vm376, %v344, %v408
        %v441 = vsel %vm377, %v345, %v409
        %v442 = vsel %vm378, %v346, %v410
        %v443 = vsel %vm379, %v347, %v411
        %v444 = vsel %vm380, %v348, %v412
        %v445 = vsel %vm381, %v349, %v413
        %v446 = vsel %vm382, %v350, %v414
        %v447 = vsel %vm383, %v351, %v415
        %v448 = vsel %vm384, %v352, %v416
        %v449 = vsel %vm385, %v353, %v417
        %v450 = vsel %vm386, %v354, %v418
        %v451 = vsel %vm387, %v355, %v419
        %v452 = vsel %vm388, %v356, %v420
        %v453 = vsel %vm389, %v357, %v421
        %v454 = vsel %vm390, %v358, %v422
        %v455 = vsel %vm391, %v359, %v423
        %v456 = vsel %vm392, %v360, %v424
        %v457 = vsel %vm393, %v361, %v425
        %v458 = vsel %vm394, %v362, %v426
        %459 = vst [vmem:[#allocation2] sm:$0xff] 0.0
        %460 = vst [vmem:[#allocation2 + $0x8] sm:$0xff] 0.0
        %461 = vst [vmem:[#allocation2 + $0x10] sm:$0x3] 0.0
        %s462 = scalar_lea.vmem [#allocation2], 408
        %463 = vst [vmem:[%s462] sm:$0xff] 0.0
        %464 = vst [vmem:[%s462 + $0x8] sm:$0xff] 0.0
        %465 = vst [vmem:[%s462 + $0x10] sm:$0x3] 0.0
        %s466 = scalar_lea.vmem [#allocation2], 24
        %467 = vst [vmem:[%s466] sm:$0x1] 0.0
        %468 = vst [vmem:[%s466 + $0x18] sm:$0x1] 0.0
        %469 = vst [vmem:[%s466 + $0x30] sm:$0x1] 0.0
        %470 = vst [vmem:[%s466 + $0x48] sm:$0x1] 0.0
        %471 = vst [vmem:[%s466 + $0x60] sm:$0x1] 0.0
        %472 = vst [vmem:[%s466 + $0x78] sm:$0x1] 0.0
        %473 = vst [vmem:[%s466 + $0x90] sm:$0x1] 0.0
        %474 = vst [vmem:[%s466 + $0xa8] sm:$0x1] 0.0
        %475 = vst [vmem:[%s466 + $0xc0] sm:$0x1] 0.0
        %476 = vst [vmem:[%s466 + $0xd8] sm:$0x1] 0.0
        %477 = vst [vmem:[%s466 + $0xf0] sm:$0x1] 0.0
        %478 = vst [vmem:[%s466 + $0x108] sm:$0x1] 0.0
        %479 = vst [vmem:[%s466 + $0x120] sm:$0x1] 0.0
        %480 = vst [vmem:[%s466 + $0x138] sm:$0x1] 0.0
        %481 = vst [vmem:[%s466 + $0x150] sm:$0x1] 0.0
        %482 = vst [vmem:[%s466 + $0x168] sm:$0x1] 0.0
        %483 = vst [vmem:[%s466 + $0x11] sm:$0x1] 0.0
        %484 = vst [vmem:[%s466 + $0x29] sm:$0x1] 0.0
        %485 = vst [vmem:[%s466 + $0x41] sm:$0x1] 0.0
        %486 = vst [vmem:[%s466 + $0x59] sm:$0x1] 0.0
        %487 = vst [vmem:[%s466 + $0x71] sm:$0x1] 0.0
        %488 = vst [vmem:[%s466 + $0x89] sm:$0x1] 0.0
        %489 = vst [vmem:[%s466 + $0xa1] sm:$0x1] 0.0
        %490 = vst [vmem:[%s466 + $0xb9] sm:$0x1] 0.0
        %491 = vst [vmem:[%s466 + $0xd1] sm:$0x1] 0.0
        %492 = vst [vmem:[%s466 + $0xe9] sm:$0x1] 0.0
        %493 = vst [vmem:[%s466 + $0x101] sm:$0x1] 0.0
        %494 = vst [vmem:[%s466 + $0x119] sm:$0x1] 0.0
        %495 = vst [vmem:[%s466 + $0x131] sm:$0x1] 0.0
        %496 = vst [vmem:[%s466 + $0x149] sm:$0x1] 0.0
        %497 = vst [vmem:[%s466 + $0x161] sm:$0x1] 0.0
        %498 = vst [vmem:[%s466 + $0x179] sm:$0x1] 0.0
        %499 = vst [vmem:[%s466 + $0x1] sm:$0xff] %v427
        %500 = vst [vmem:[%s466 + $0x9] sm:$0xff] %v428
        %501 = vst [vmem:[%s466 + $0x19] sm:$0xff] %v429
        %502 = vst [vmem:[%s466 + $0x21] sm:$0xff] %v430
        %503 = vst [vmem:[%s466 + $0x31] sm:$0xff] %v431
        %504 = vst [vmem:[%s466 + $0x39] sm:$0xff] %v432
        %505 = vst [vmem:[%s466 + $0x49] sm:$0xff] %v433
        %506 = vst [vmem:[%s466 + $0x51] sm:$0xff] %v434
        %507 = vst [vmem:[%s466 + $0x61] sm:$0xff] %v435
        %508 = vst [vmem:[%s466 + $0x69] sm:$0xff] %v436
        %509 = vst [vmem:[%s466 + $0x79] sm:$0xff] %v437
        %510 = vst [vmem:[%s466 + $0x81] sm:$0xff] %v438
        %511 = vst [vmem:[%s466 + $0x91] sm:$0xff] %v439
        %512 = vst [vmem:[%s466 + $0x99] sm:$0xff] %v440
        %513 = vst [vmem:[%s466 + $0xa9] sm:$0xff] %v441
        %514 = vst [vmem:[%s466 + $0xb1] sm:$0xff] %v442
        %515 = vst [vmem:[%s466 + $0xc1] sm:$0xff] %v443
        %516 = vst [vmem:[%s466 + $0xc9] sm:$0xff] %v444
        %517 = vst [vmem:[%s466 + $0xd9] sm:$0xff] %v445
        %518 = vst [vmem:[%s466 + $0xe1] sm:$0xff] %v446
        %519 = vst [vmem:[%s466 + $0xf1] sm:$0xff] %v447
        %520 = vst [vmem:[%s466 + $0xf9] sm:$0xff] %v448
        %521 = vst [vmem:[%s466 + $0x109] sm:$0xff] %v449
        %522 = vst [vmem:[%s466 + $0x111] sm:$0xff] %v450
        %523 = vst [vmem:[%s466 + $0x121] sm:$0xff] %v451
        %524 = vst [vmem:[%s466 + $0x129] sm:$0xff] %v452
        %525 = vst [vmem:[%s466 + $0x139] sm:$0xff] %v453
        %526 = vst [vmem:[%s466 + $0x141] sm:$0xff] %v454
        %527 = vst [vmem:[%s466 + $0x151] sm:$0xff] %v455
        %528 = vst [vmem:[%s466 + $0x159] sm:$0xff] %v456
        %529 = vst [vmem:[%s466 + $0x169] sm:$0xff] %v457
        %530 = vst [vmem:[%s466 + $0x171] sm:$0xff] %v458
        %v531 = vld [vmem:[#allocation2] ss:$2 sm:$0xff]
        %s532 = scalar_lea.vmem [#allocation2], 48
        %v533 = vld [vmem:[%s532] ss:$2 sm:$0xff]
        %s534 = scalar_lea.vmem [#allocation2], 96
        %v535 = vld [vmem:[%s534] ss:$2 sm:$0xff]
        %s536 = scalar_lea.vmem [#allocation2], 144
        %v537 = vld [vmem:[%s536] ss:$2 sm:$0xff]
        %s538 = scalar_lea.vmem [#allocation2], 192
        %v539 = vld [vmem:[%s538] ss:$2 sm:$0xff]
        %s540 = scalar_lea.vmem [#allocation2], 240
        %v541 = vld [vmem:[%s540] ss:$2 sm:$0xff]
        %s542 = scalar_lea.vmem [#allocation2], 288
        %v543 = vld [vmem:[%s542] ss:$2 sm:$0xff]
        %s544 = scalar_lea.vmem [#allocation2], 336
        %v545 = vld [vmem:[%s544] ss:$2 sm:$0xff]
        %v546 = vpack.c.bf16 %v531, %v531
        %v547 = vpack.c.bf16 %v533, %v533
        %v548 = vpack.c.bf16 %v535, %v535
        %v549 = vpack.c.bf16 %v537, %v537
        %v550 = vpack.c.bf16 %v539, %v539
        %v551 = vpack.c.bf16 %v541, %v541
        %v552 = vpack.c.bf16 %v543, %v543
        %v553 = vpack.c.bf16 %v545, %v545
        %554 = vst [vmem:[#allocation3] sm:$0xf] %v546
        %555 = vst [vmem:[#allocation3 + $0xc] sm:$0xf] %v547
        %556 = vst [vmem:[#allocation3 + $0x18] sm:$0xf] %v548
        %557 = vst [vmem:[#allocation3 + $0x24] sm:$0xf] %v549
        %558 = vst [vmem:[#allocation3 + $0x30] sm:$0xf] %v550
        %559 = vst [vmem:[#allocation3 + $0x3c] sm:$0xf] %v551
        %560 = vst [vmem:[#allocation3 + $0x48] sm:$0xf] %v552
        %561 = vst [vmem:[#allocation3 + $0x54] sm:$0xf] %v553
        %s562 = scalar_lea.vmem [#allocation2], 1
        %v563 = vld [vmem:[%s562] ss:$2 sm:$0xff]
        %s564 = scalar_lea.vmem [#allocation2], 49
        %v565 = vld [vmem:[%s564] ss:$2 sm:$0xff]
        %s566 = scalar_lea.vmem [#allocation2], 97
        %v567 = vld [vmem:[%s566] ss:$2 sm:$0xff]
        %s568 = scalar_lea.vmem [#allocation2], 145
        %v569 = vld [vmem:[%s568] ss:$2 sm:$0xff]
        %s570 = scalar_lea.vmem [#allocation2], 193
        %v571 = vld [vmem:[%s570] ss:$2 sm:$0xff]
        %s572 = scalar_lea.vmem [#allocation2], 241
        %v573 = vld [vmem:[%s572] ss:$2 sm:$0xff]
        %s574 = scalar_lea.vmem [#allocation2], 289
        %v575 = vld [vmem:[%s574] ss:$2 sm:$0xff]
        %s576 = scalar_lea.vmem [#allocation2], 337
        %v577 = vld [vmem:[%s576] ss:$2 sm:$0xff]
        %v578 = vpack.c.bf16 %v563, %v563
        %v579 = vpack.c.bf16 %v565, %v565
        %v580 = vpack.c.bf16 %v567, %v567
        %v581 = vpack.c.bf16 %v569, %v569
        %v582 = vpack.c.bf16 %v571, %v571
        %v583 = vpack.c.bf16 %v573, %v573
        %v584 = vpack.c.bf16 %v575, %v575
        %v585 = vpack.c.bf16 %v577, %v577
        %586 = vst [vmem:[#allocation3 + $0x4] sm:$0xf] %v578
        %587 = vst [vmem:[#allocation3 + $0x10] sm:$0xf] %v579
        %588 = vst [vmem:[#allocation3 + $0x1c] sm:$0xf] %v580
        %589 = vst [vmem:[#allocation3 + $0x28] sm:$0xf] %v581
        %590 = vst [vmem:[#allocation3 + $0x34] sm:$0xf] %v582
        %591 = vst [vmem:[#allocation3 + $0x40] sm:$0xf] %v583
        %592 = vst [vmem:[#allocation3 + $0x4c] sm:$0xf] %v584
        %593 = vst [vmem:[#allocation3 + $0x58] sm:$0xf] %v585
        %s594 = scalar_lea.vmem [#allocation2], 2
        %v595 = vld [vmem:[%s594] ss:$2 sm:$0xff]
        %s596 = scalar_lea.vmem [#allocation2], 50
        %v597 = vld [vmem:[%s596] ss:$2 sm:$0xff]
        %s598 = scalar_lea.vmem [#allocation2], 98
        %v599 = vld [vmem:[%s598] ss:$2 sm:$0xff]
        %s600 = scalar_lea.vmem [#allocation2], 146
        %v601 = vld [vmem:[%s600] ss:$2 sm:$0xff]
        %s602 = scalar_lea.vmem [#allocation2], 194
        %v603 = vld [vmem:[%s602] ss:$2 sm:$0xff]
        %s604 = scalar_lea.vmem [#allocation2], 242
        %v605 = vld [vmem:[%s604] ss:$2 sm:$0xff]
        %s606 = scalar_lea.vmem [#allocation2], 290
        %v607 = vld [vmem:[%s606] ss:$2 sm:$0xff]
        %s608 = scalar_lea.vmem [#allocation2], 338
        %v609 = vld [vmem:[%s608] ss:$2 sm:$0xff]
        %v610 = vpack.c.bf16 %v595, %v595
        %v611 = vpack.c.bf16 %v597, %v597
        %v612 = vpack.c.bf16 %v599, %v599
        %v613 = vpack.c.bf16 %v601, %v601
        %v614 = vpack.c.bf16 %v603, %v603
        %v615 = vpack.c.bf16 %v605, %v605
        %v616 = vpack.c.bf16 %v607, %v607
        %v617 = vpack.c.bf16 %v609, %v609
        %618 = vst [vmem:[#allocation3 + $0x8] sm:$0xf] %v610
        %619 = vst [vmem:[#allocation3 + $0x14] sm:$0xf] %v611
        %620 = vst [vmem:[#allocation3 + $0x20] sm:$0xf] %v612
        %621 = vst [vmem:[#allocation3 + $0x2c] sm:$0xf] %v613
        %622 = vst [vmem:[#allocation3 + $0x38] sm:$0xf] %v614
        %623 = vst [vmem:[#allocation3 + $0x44] sm:$0xf] %v615
        %624 = vst [vmem:[#allocation3 + $0x50] sm:$0xf] %v616
        %625 = vst [vmem:[#allocation3 + $0x5c] sm:$0xf] %v617
        %v626 = vld [vmem:[%s466] ss:$2 sm:$0xff]
        %s627 = scalar_lea.vmem %s466, 48 [#allocation2]
        %v628 = vld [vmem:[%s627] ss:$2 sm:$0xff]
        %s629 = scalar_lea.vmem %s466, 96 [#allocation2]
        %v630 = vld [vmem:[%s629] ss:$2 sm:$0xff]
        %s631 = scalar_lea.vmem %s466, 144 [#allocation2]
        %v632 = vld [vmem:[%s631] ss:$2 sm:$0xff]
        %s633 = scalar_lea.vmem %s466, 192 [#allocation2]
        %v634 = vld [vmem:[%s633] ss:$2 sm:$0xff]
        %s635 = scalar_lea.vmem %s466, 240 [#allocation2]
        %v636 = vld [vmem:[%s635] ss:$2 sm:$0xff]
        %s637 = scalar_lea.vmem %s466, 288 [#allocation2]
        %v638 = vld [vmem:[%s637] ss:$2 sm:$0xff]
        %s639 = scalar_lea.vmem %s466, 336 [#allocation2]
        %v640 = vld [vmem:[%s639] ss:$2 sm:$0xff]
        %v641 = vpack.c.bf16 %v626, %v626
        %v642 = vpack.c.bf16 %v628, %v628
        %v643 = vpack.c.bf16 %v630, %v630
        %v644 = vpack.c.bf16 %v632, %v632
        %v645 = vpack.c.bf16 %v634, %v634
        %v646 = vpack.c.bf16 %v636, %v636
        %v647 = vpack.c.bf16 %v638, %v638
        %v648 = vpack.c.bf16 %v640, %v640
        %s649 = scalar_lea.vmem [#allocation3], 96
        %650 = vst [vmem:[%s649] sm:$0xf] %v641
        %651 = vst [vmem:[%s649 + $0xc] sm:$0xf] %v642
        %652 = vst [vmem:[%s649 + $0x18] sm:$0xf] %v643
        %653 = vst [vmem:[%s649 + $0x24] sm:$0xf] %v644
        %654 = vst [vmem:[%s649 + $0x30] sm:$0xf] %v645
        %655 = vst [vmem:[%s649 + $0x3c] sm:$0xf] %v646
        %656 = vst [vmem:[%s649 + $0x48] sm:$0xf] %v647
        %657 = vst [vmem:[%s649 + $0x54] sm:$0xf] %v648
        %s658 = scalar_lea.vmem %s466, 1 [#allocation2]
        %v659 = vld [vmem:[%s658] ss:$2 sm:$0xff]
        %s660 = scalar_lea.vmem %s466, 49 [#allocation2]
        %v661 = vld [vmem:[%s660] ss:$2 sm:$0xff]
        %s662 = scalar_lea.vmem %s466, 97 [#allocation2]
        %v663 = vld [vmem:[%s662] ss:$2 sm:$0xff]
        %s664 = scalar_lea.vmem %s466, 145 [#allocation2]
        %v665 = vld [vmem:[%s664] ss:$2 sm:$0xff]
        %s666 = scalar_lea.vmem %s466, 193 [#allocation2]
        %v667 = vld [vmem:[%s666] ss:$2 sm:$0xff]
        %s668 = scalar_lea.vmem %s466, 241 [#allocation2]
        %v669 = vld [vmem:[%s668] ss:$2 sm:$0xff]
        %s670 = scalar_lea.vmem %s466, 289 [#allocation2]
        %v671 = vld [vmem:[%s670] ss:$2 sm:$0xff]
        %s672 = scalar_lea.vmem %s466, 337 [#allocation2]
        %v673 = vld [vmem:[%s672] ss:$2 sm:$0xff]
        %v674 = vpack.c.bf16 %v659, %v659
        %v675 = vpack.c.bf16 %v661, %v661
        %v676 = vpack.c.bf16 %v663, %v663
        %v677 = vpack.c.bf16 %v665, %v665
        %v678 = vpack.c.bf16 %v667, %v667
        %v679 = vpack.c.bf16 %v669, %v669
        %v680 = vpack.c.bf16 %v671, %v671
        %v681 = vpack.c.bf16 %v673, %v673
        %682 = vst [vmem:[%s649 + $0x4] sm:$0xf] %v674
        %683 = vst [vmem:[%s649 + $0x10] sm:$0xf] %v675
        %684 = vst [vmem:[%s649 + $0x1c] sm:$0xf] %v676
        %685 = vst [vmem:[%s649 + $0x28] sm:$0xf] %v677
        %686 = vst [vmem:[%s649 + $0x34] sm:$0xf] %v678
        %687 = vst [vmem:[%s649 + $0x40] sm:$0xf] %v679
        %688 = vst [vmem:[%s649 + $0x4c] sm:$0xf] %v680
        %689 = vst [vmem:[%s649 + $0x58] sm:$0xf] %v681
        %s690 = scalar_lea.vmem %s466, 2 [#allocation2]
        %v691 = vld [vmem:[%s690] ss:$2 sm:$0xff]
        %s692 = scalar_lea.vmem %s466, 50 [#allocation2]
        %v693 = vld [vmem:[%s692] ss:$2 sm:$0xff]
        %s694 = scalar_lea.vmem %s466, 98 [#allocation2]
        %v695 = vld [vmem:[%s694] ss:$2 sm:$0xff]
        %s696 = scalar_lea.vmem %s466, 146 [#allocation2]
        %v697 = vld [vmem:[%s696] ss:$2 sm:$0xff]
        %s698 = scalar_lea.vmem %s466, 194 [#allocation2]
        %v699 = vld [vmem:[%s698] ss:$2 sm:$0xff]
        %s700 = scalar_lea.vmem %s466, 242 [#allocation2]
        %v701 = vld [vmem:[%s700] ss:$2 sm:$0xff]
        %s702 = scalar_lea.vmem %s466, 290 [#allocation2]
        %v703 = vld [vmem:[%s702] ss:$2 sm:$0xff]
        %s704 = scalar_lea.vmem %s466, 338 [#allocation2]
        %v705 = vld [vmem:[%s704] ss:$2 sm:$0xff]
        %v706 = vpack.c.bf16 %v691, %v691
        %v707 = vpack.c.bf16 %v693, %v693
        %v708 = vpack.c.bf16 %v695, %v695
        %v709 = vpack.c.bf16 %v697, %v697
        %v710 = vpack.c.bf16 %v699, %v699
        %v711 = vpack.c.bf16 %v701, %v701
        %v712 = vpack.c.bf16 %v703, %v703
        %v713 = vpack.c.bf16 %v705, %v705
        %714 = vst [vmem:[%s649 + $0x8] sm:$0xf] %v706
        %715 = vst [vmem:[%s649 + $0x14] sm:$0xf] %v707
        %716 = vst [vmem:[%s649 + $0x20] sm:$0xf] %v708
        %717 = vst [vmem:[%s649 + $0x2c] sm:$0xf] %v709
        %718 = vst [vmem:[%s649 + $0x38] sm:$0xf] %v710
        %719 = vst [vmem:[%s649 + $0x44] sm:$0xf] %v711
        %720 = vst [vmem:[%s649 + $0x50] sm:$0xf] %v712
        %721 = vst [vmem:[%s649 + $0x5c] sm:$0xf] %v713
        %s722 = scalar_lea.vmem [#allocation2], 48
        %v723 = vld [vmem:[%s722] ss:$2 sm:$0xff]
        %s724 = scalar_lea.vmem %s722, 48 [#allocation2]
        %v725 = vld [vmem:[%s724] ss:$2 sm:$0xff]
        %s726 = scalar_lea.vmem %s722, 96 [#allocation2]
        %v727 = vld [vmem:[%s726] ss:$2 sm:$0xff]
        %s728 = scalar_lea.vmem %s722, 144 [#allocation2]
        %v729 = vld [vmem:[%s728] ss:$2 sm:$0xff]
        %s730 = scalar_lea.vmem %s722, 192 [#allocation2]
        %v731 = vld [vmem:[%s730] ss:$2 sm:$0xff]
        %s732 = scalar_lea.vmem %s722, 240 [#allocation2]
        %v733 = vld [vmem:[%s732] ss:$2 sm:$0xff]
        %s734 = scalar_lea.vmem %s722, 288 [#allocation2]
        %v735 = vld [vmem:[%s734] ss:$2 sm:$0xff]
        %s736 = scalar_lea.vmem %s722, 336 [#allocation2]
        %v737 = vld [vmem:[%s736] ss:$2 sm:$0xff]
        %v738 = vpack.c.bf16 %v723, %v723
        %v739 = vpack.c.bf16 %v725, %v725
        %v740 = vpack.c.bf16 %v727, %v727
        %v741 = vpack.c.bf16 %v729, %v729
        %v742 = vpack.c.bf16 %v731, %v731
        %v743 = vpack.c.bf16 %v733, %v733
        %v744 = vpack.c.bf16 %v735, %v735
        %v745 = vpack.c.bf16 %v737, %v737
        %s746 = scalar_lea.vmem [#allocation3], 192
        %747 = vst [vmem:[%s746] sm:$0xf] %v738
        %748 = vst [vmem:[%s746 + $0xc] sm:$0xf] %v739
        %749 = vst [vmem:[%s746 + $0x18] sm:$0xf] %v740
        %750 = vst [vmem:[%s746 + $0x24] sm:$0xf] %v741
        %751 = vst [vmem:[%s746 + $0x30] sm:$0xf] %v742
        %752 = vst [vmem:[%s746 + $0x3c] sm:$0xf] %v743
        %753 = vst [vmem:[%s746 + $0x48] sm:$0xf] %v744
        %754 = vst [vmem:[%s746 + $0x54] sm:$0xf] %v745
        %s755 = scalar_lea.vmem %s722, 1 [#allocation2]
        %v756 = vld [vmem:[%s755] ss:$2 sm:$0xff]
        %s757 = scalar_lea.vmem %s722, 49 [#allocation2]
        %v758 = vld [vmem:[%s757] ss:$2 sm:$0xff]
        %s759 = scalar_lea.vmem %s722, 97 [#allocation2]
        %v760 = vld [vmem:[%s759] ss:$2 sm:$0xff]
        %s761 = scalar_lea.vmem %s722, 145 [#allocation2]
        %v762 = vld [vmem:[%s761] ss:$2 sm:$0xff]
        %s763 = scalar_lea.vmem %s722, 193 [#allocation2]
        %v764 = vld [vmem:[%s763] ss:$2 sm:$0xff]
        %s765 = scalar_lea.vmem %s722, 241 [#allocation2]
        %v766 = vld [vmem:[%s765] ss:$2 sm:$0xff]
        %s767 = scalar_lea.vmem %s722, 289 [#allocation2]
        %v768 = vld [vmem:[%s767] ss:$2 sm:$0xff]
        %s769 = scalar_lea.vmem %s722, 337 [#allocation2]
        %v770 = vld [vmem:[%s769] ss:$2 sm:$0xff]
        %v771 = vpack.c.bf16 %v756, %v756
        %v772 = vpack.c.bf16 %v758, %v758
        %v773 = vpack.c.bf16 %v760, %v760
        %v774 = vpack.c.bf16 %v762, %v762
        %v775 = vpack.c.bf16 %v764, %v764
        %v776 = vpack.c.bf16 %v766, %v766
        %v777 = vpack.c.bf16 %v768, %v768
        %v778 = vpack.c.bf16 %v770, %v770
        %779 = vst [vmem:[%s746 + $0x4] sm:$0xf] %v771
        %780 = vst [vmem:[%s746 + $0x10] sm:$0xf] %v772
        %781 = vst [vmem:[%s746 + $0x1c] sm:$0xf] %v773
        %782 = vst [vmem:[%s746 + $0x28] sm:$0xf] %v774
        %783 = vst [vmem:[%s746 + $0x34] sm:$0xf] %v775
        %784 = vst [vmem:[%s746 + $0x40] sm:$0xf] %v776
        %785 = vst [vmem:[%s746 + $0x4c] sm:$0xf] %v777
        %786 = vst [vmem:[%s746 + $0x58] sm:$0xf] %v778
        %s787 = scalar_lea.vmem %s722, 2 [#allocation2]
        %v788 = vld [vmem:[%s787] ss:$2 sm:$0xff]
        %s789 = scalar_lea.vmem %s722, 50 [#allocation2]
        %v790 = vld [vmem:[%s789] ss:$2 sm:$0xff]
        %s791 = scalar_lea.vmem %s722, 98 [#allocation2]
        %v792 = vld [vmem:[%s791] ss:$2 sm:$0xff]
        %s793 = scalar_lea.vmem %s722, 146 [#allocation2]
        %v794 = vld [vmem:[%s793] ss:$2 sm:$0xff]
        %s795 = scalar_lea.vmem %s722, 194 [#allocation2]
        %v796 = vld [vmem:[%s795] ss:$2 sm:$0xff]
        %s797 = scalar_lea.vmem %s722, 242 [#allocation2]
        %v798 = vld [vmem:[%s797] ss:$2 sm:$0xff]
        %s799 = scalar_lea.vmem %s722, 290 [#allocation2]
        %v800 = vld [vmem:[%s799] ss:$2 sm:$0xff]
        %s801 = scalar_lea.vmem %s722, 338 [#allocation2]
        %v802 = vld [vmem:[%s801] ss:$2 sm:$0xff]
        %v803 = vpack.c.bf16 %v788, %v788
        %v804 = vpack.c.bf16 %v790, %v790
        %v805 = vpack.c.bf16 %v792, %v792
        %v806 = vpack.c.bf16 %v794, %v794
        %v807 = vpack.c.bf16 %v796, %v796
        %v808 = vpack.c.bf16 %v798, %v798
        %v809 = vpack.c.bf16 %v800, %v800
        %v810 = vpack.c.bf16 %v802, %v802
        %811 = vst [vmem:[%s746 + $0x8] sm:$0xf] %v803
        %812 = vst [vmem:[%s746 + $0x14] sm:$0xf] %v804
        %813 = vst [vmem:[%s746 + $0x20] sm:$0xf] %v805
        %814 = vst [vmem:[%s746 + $0x2c] sm:$0xf] %v806
        %815 = vst [vmem:[%s746 + $0x38] sm:$0xf] %v807
        %816 = vst [vmem:[%s746 + $0x44] sm:$0xf] %v808
        %817 = vst [vmem:[%s746 + $0x50] sm:$0xf] %v809
        %818 = vst [vmem:[%s746 + $0x5c] sm:$0xf] %v810
        %819 = vst [vmem:[%s226] sm:$0xff] 0.0
      $region36: #{conv_block_forward.4} parent=31 // pred_fallthru
        _
      %s820 = smul.u32 %s21, 64
      %s821 = sshra.s32 %s820, 3
      %s822 = sand.u32 %s820, 7
      %s823 = smul.u32 %s821, 3
      %s824 = smul.addr %s823, 4
      %s825 = scalar_lea.vmem [#allocation3], %s824
      %v826 = vld [vmem:[%s825] sm:$0xff]
      %v827 = vld [vmem:[%s825 + $0x8] sm:$0xf]
      %v828 = vld [vmem:[%s825 + $0xc] sm:$0xff]
      %v829 = vld [vmem:[%s825 + $0x14] sm:$0xf]
      %v830 = vld [vmem:[%s825 + $0x18] sm:$0xff]
      %v831 = vld [vmem:[%s825 + $0x20] sm:$0xf]
      %v832 = vld [vmem:[%s825 + $0x24] sm:$0xff]
      %v833 = vld [vmem:[%s825 + $0x2c] sm:$0xf]
      %v834 = vld [vmem:[%s825 + $0x30] sm:$0xff]
      %v835 = vld [vmem:[%s825 + $0x38] sm:$0xf]
      %v836 = vld [vmem:[%s825 + $0x3c] sm:$0xff]
      %v837 = vld [vmem:[%s825 + $0x44] sm:$0xf]
      %v838 = vld [vmem:[%s825 + $0x48] sm:$0xff]
      %v839 = vld [vmem:[%s825 + $0x50] sm:$0xf]
      %v840 = vld [vmem:[%s825 + $0x54] sm:$0xff]
      %v841 = vld [vmem:[%s825 + $0x5c] sm:$0xf]
      %v842 = vld [vmem:[%s2] sm:$0xf]
      %v843 = vld [vmem:[%s2 + $0x4] sm:$0xf]
      %v844 = vld [vmem:[%s2 + $0x8] sm:$0xf]
      %v845 = vld [vmem:[%s2 + $0xc] sm:$0xf]
      %v846 = vld [vmem:[%s2 + $0x10] sm:$0xf]
      %v847 = vld [vmem:[%s2 + $0x14] sm:$0xf]
      %v848 = vld [vmem:[%s2 + $0x18] sm:$0xf]
      %v849 = vld [vmem:[%s2 + $0x1c] sm:$0xf]
      %v850 = vld [vmem:[%s2 + $0x20] sm:$0xf]
      %v851 = vld [vmem:[%s2 + $0x24] sm:$0xf]
      %v852 = vld [vmem:[%s2 + $0x28] sm:$0xf]
      %v853 = vld [vmem:[%s2 + $0x2c] sm:$0xf]
      %v854 = vld [vmem:[%s2 + $0x30] sm:$0xf]
      %v855 = vld [vmem:[%s2 + $0x34] sm:$0xf]
      %v856 = vld [vmem:[%s2 + $0x38] sm:$0xf]
      %v857 = vld [vmem:[%s2 + $0x3c] sm:$0xf]
      %v858 = vld [vmem:[%s2 + $0x40] sm:$0xf]
      %v859 = vld [vmem:[%s2 + $0x44] sm:$0xf]
      %v860 = vld [vmem:[%s2 + $0x48] sm:$0xf]
      %v861 = vld [vmem:[%s2 + $0x4c] sm:$0xf]
      %v862 = vld [vmem:[%s2 + $0x50] sm:$0xf]
      %v863 = vld [vmem:[%s2 + $0x54] sm:$0xf]
      %v864 = vld [vmem:[%s2 + $0x58] sm:$0xf]
      %v865 = vld [vmem:[%s2 + $0x5c] sm:$0xf]
      %v866 = vld [vmem:[%s2 + $0x60] sm:$0xf]
      %v867 = vld [vmem:[%s2 + $0x64] sm:$0xf]
      %v868 = vld [vmem:[%s2 + $0x68] sm:$0xf]
      %v869 = vld [vmem:[%s2 + $0x6c] sm:$0xf]
      %v870 = vld [vmem:[%s2 + $0x70] sm:$0xf]
      %v871 = vld [vmem:[%s2 + $0x74] sm:$0xf]
      %v872 = vld [vmem:[%s2 + $0x78] sm:$0xf]
      %v873 = vld [vmem:[%s2 + $0x7c] sm:$0xf]
      %v874 = vld [vmem:[%s2 + $0x80] sm:$0xf]
      %v875 = vld [vmem:[%s2 + $0x84] sm:$0xf]
      %v876 = vld [vmem:[%s2 + $0x88] sm:$0xf]
      %v877 = vld [vmem:[%s2 + $0x8c] sm:$0xf]
      %v878 = vld [vmem:[%s2 + $0x90] sm:$0xf]
      %v879 = vld [vmem:[%s2 + $0x94] sm:$0xf]
      %v880 = vld [vmem:[%s2 + $0x98] sm:$0xf]
      %v881 = vld [vmem:[%s2 + $0x9c] sm:$0xf]
      %v882 = vld [vmem:[%s2 + $0xa0] sm:$0xf]
      %v883 = vld [vmem:[%s2 + $0xa4] sm:$0xf]
      %v884 = vld [vmem:[%s2 + $0xa8] sm:$0xf]
      %v885 = vld [vmem:[%s2 + $0xac] sm:$0xf]
      %v886 = vld [vmem:[%s2 + $0xb0] sm:$0xf]
      %v887 = vld [vmem:[%s2 + $0xb4] sm:$0xf]
      %v888 = vld [vmem:[%s2 + $0xb8] sm:$0xf]
      %v889 = vld [vmem:[%s2 + $0xbc] sm:$0xf]
      %s890 = sadd.s32 %s823, 24
      %s891 = smul.addr %s890, 4
      %s892 = scalar_lea.vmem [#allocation3], %s891
      %v893 = vld [vmem:[%s892] sm:$0xff]
      %v894 = vld [vmem:[%s892 + $0x8] sm:$0xf]
      %v895 = vld [vmem:[%s892 + $0xc] sm:$0xff]
      %v896 = vld [vmem:[%s892 + $0x14] sm:$0xf]
      %v897 = vld [vmem:[%s892 + $0x18] sm:$0xff]
      %v898 = vld [vmem:[%s892 + $0x20] sm:$0xf]
      %v899 = vld [vmem:[%s892 + $0x24] sm:$0xff]
      %v900 = vld [vmem:[%s892 + $0x2c] sm:$0xf]
      %v901 = vld [vmem:[%s892 + $0x30] sm:$0xff]
      %v902 = vld [vmem:[%s892 + $0x38] sm:$0xf]
      %v903 = vld [vmem:[%s892 + $0x3c] sm:$0xff]
      %v904 = vld [vmem:[%s892 + $0x44] sm:$0xf]
      %v905 = vld [vmem:[%s892 + $0x48] sm:$0xff]
      %v906 = vld [vmem:[%s892 + $0x50] sm:$0xf]
      %v907 = vld [vmem:[%s892 + $0x54] sm:$0xff]
      %v908 = vld [vmem:[%s892 + $0x5c] sm:$0xf]
      %s909 = scalar_lea.vmem %s2, 192
      %v910 = vld [vmem:[%s909] sm:$0xf]
      %v911 = vld [vmem:[%s909 + $0x4] sm:$0xf]
      %v912 = vld [vmem:[%s909 + $0x8] sm:$0xf]
      %v913 = vld [vmem:[%s909 + $0xc] sm:$0xf]
      %v914 = vld [vmem:[%s909 + $0x10] sm:$0xf]
      %v915 = vld [vmem:[%s909 + $0x14] sm:$0xf]
      %v916 = vld [vmem:[%s909 + $0x18] sm:$0xf]
      %v917 = vld [vmem:[%s909 + $0x1c] sm:$0xf]
      %v918 = vld [vmem:[%s909 + $0x20] sm:$0xf]
      %v919 = vld [vmem:[%s909 + $0x24] sm:$0xf]
      %v920 = vld [vmem:[%s909 + $0x28] sm:$0xf]
      %v921 = vld [vmem:[%s909 + $0x2c] sm:$0xf]
      %v922 = vld [vmem:[%s909 + $0x30] sm:$0xf]
      %v923 = vld [vmem:[%s909 + $0x34] sm:$0xf]
      %v924 = vld [vmem:[%s909 + $0x38] sm:$0xf]
      %v925 = vld [vmem:[%s909 + $0x3c] sm:$0xf]
      %v926 = vld [vmem:[%s909 + $0x40] sm:$0xf]
      %v927 = vld [vmem:[%s909 + $0x44] sm:$0xf]
      %v928 = vld [vmem:[%s909 + $0x48] sm:$0xf]
      %v929 = vld [vmem:[%s909 + $0x4c] sm:$0xf]
      %v930 = vld [vmem:[%s909 + $0x50] sm:$0xf]
      %v931 = vld [vmem:[%s909 + $0x54] sm:$0xf]
      %v932 = vld [vmem:[%s909 + $0x58] sm:$0xf]
      %v933 = vld [vmem:[%s909 + $0x5c] sm:$0xf]
      %v934 = vld [vmem:[%s909 + $0x60] sm:$0xf]
      %v935 = vld [vmem:[%s909 + $0x64] sm:$0xf]
      %v936 = vld [vmem:[%s909 + $0x68] sm:$0xf]
      %v937 = vld [vmem:[%s909 + $0x6c] sm:$0xf]
      %v938 = vld [vmem:[%s909 + $0x70] sm:$0xf]
      %v939 = vld [vmem:[%s909 + $0x74] sm:$0xf]
      %v940 = vld [vmem:[%s909 + $0x78] sm:$0xf]
      %v941 = vld [vmem:[%s909 + $0x7c] sm:$0xf]
      %v942 = vld [vmem:[%s909 + $0x80] sm:$0xf]
      %v943 = vld [vmem:[%s909 + $0x84] sm:$0xf]
      %v944 = vld [vmem:[%s909 + $0x88] sm:$0xf]
      %v945 = vld [vmem:[%s909 + $0x8c] sm:$0xf]
      %v946 = vld [vmem:[%s909 + $0x90] sm:$0xf]
      %v947 = vld [vmem:[%s909 + $0x94] sm:$0xf]
      %v948 = vld [vmem:[%s909 + $0x98] sm:$0xf]
      %v949 = vld [vmem:[%s909 + $0x9c] sm:$0xf]
      %v950 = vld [vmem:[%s909 + $0xa0] sm:$0xf]
      %v951 = vld [vmem:[%s909 + $0xa4] sm:$0xf]
      %v952 = vld [vmem:[%s909 + $0xa8] sm:$0xf]
      %v953 = vld [vmem:[%s909 + $0xac] sm:$0xf]
      %v954 = vld [vmem:[%s909 + $0xb0] sm:$0xf]
      %v955 = vld [vmem:[%s909 + $0xb4] sm:$0xf]
      %v956 = vld [vmem:[%s909 + $0xb8] sm:$0xf]
      %v957 = vld [vmem:[%s909 + $0xbc] sm:$0xf]
      %v974 = vunpack.c.l.b16 %v893
      %v975 = vunpack.c.h.b16 %v893
      %v976 = vunpack.c.l.b16 %v894
      %v977 = vunpack.c.l.b16 %v895
      %v978 = vunpack.c.h.b16 %v895
      %v979 = vunpack.c.l.b16 %v896
      %v980 = vunpack.c.l.b16 %v897
      %v981 = vunpack.c.h.b16 %v897
      %v982 = vunpack.c.l.b16 %v898
      %v983 = vunpack.c.l.b16 %v899
      %v984 = vunpack.c.h.b16 %v899
      %v985 = vunpack.c.l.b16 %v900
      %v986 = vunpack.c.l.b16 %v901
      %v987 = vunpack.c.h.b16 %v901
      %v988 = vunpack.c.l.b16 %v902
      %v989 = vunpack.c.l.b16 %v903
      %v990 = vunpack.c.h.b16 %v903
      %v991 = vunpack.c.l.b16 %v904
      %v992 = vunpack.c.l.b16 %v905
      %v993 = vunpack.c.h.b16 %v905
      %v994 = vunpack.c.l.b16 %v906
      %v995 = vunpack.c.l.b16 %v907
      %v996 = vunpack.c.h.b16 %v907
      %v997 = vunpack.c.l.b16 %v908
      %v998 = vpack.c.b16 %v977, %v974
      %v999 = vpack.c.b16 %v978, %v975
      %v1000 = vpack.c.b16 %v979, %v976
      %v1001 = vpack.c.b16 %v983, %v980
      %v1002 = vpack.c.b16 %v984, %v981
      %v1003 = vpack.c.b16 %v985, %v982
      %v1004 = vpack.c.b16 %v989, %v986
      %v1005 = vpack.c.b16 %v990, %v987
      %v1006 = vpack.c.b16 %v991, %v988
      %v1007 = vpack.c.b16 %v995, %v992
      %v1008 = vpack.c.b16 %v996, %v993
      %v1009 = vpack.c.b16 %v997, %v994
      %v1070 = vunpack.c.l.b16 %v910
      %v1071 = vunpack.c.l.b16 %v911
      %v1072 = vunpack.c.l.b16 %v912
      %v1073 = vunpack.c.l.b16 %v913
      %v1074 = vunpack.c.l.b16 %v914
      %v1075 = vunpack.c.l.b16 %v915
      %v1076 = vunpack.c.l.b16 %v916
      %v1077 = vunpack.c.l.b16 %v917
      %v1078 = vunpack.c.l.b16 %v918
      %v1079 = vunpack.c.l.b16 %v919
      %v1080 = vunpack.c.l.b16 %v920
      %v1081 = vunpack.c.l.b16 %v921
      %v1082 = vunpack.c.l.b16 %v922
      %v1083 = vunpack.c.l.b16 %v923
      %v1084 = vunpack.c.l.b16 %v924
      %v1085 = vunpack.c.l.b16 %v925
      %v1086 = vunpack.c.l.b16 %v926
      %v1087 = vunpack.c.l.b16 %v927
      %v1088 = vunpack.c.l.b16 %v928
      %v1089 = vunpack.c.l.b16 %v929
      %v1090 = vunpack.c.l.b16 %v930
      %v1091 = vunpack.c.l.b16 %v931
      %v1092 = vunpack.c.l.b16 %v932
      %v1093 = vunpack.c.l.b16 %v933
      %v1094 = vunpack.c.l.b16 %v934
      %v1095 = vunpack.c.l.b16 %v935
      %v1096 = vunpack.c.l.b16 %v936
      %v1097 = vunpack.c.l.b16 %v937
      %v1098 = vunpack.c.l.b16 %v938
      %v1099 = vunpack.c.l.b16 %v939
      %v1100 = vunpack.c.l.b16 %v940
      %v1101 = vunpack.c.l.b16 %v941
      %v1102 = vunpack.c.l.b16 %v942
      %v1103 = vunpack.c.l.b16 %v943
      %v1104 = vunpack.c.l.b16 %v944
      %v1105 = vunpack.c.l.b16 %v945
      %v1106 = vunpack.c.l.b16 %v946
      %v1107 = vunpack.c.l.b16 %v947
      %v1108 = vunpack.c.l.b16 %v948
      %v1109 = vunpack.c.l.b16 %v949
      %v1110 = vunpack.c.l.b16 %v950
      %v1111 = vunpack.c.l.b16 %v951
      %v1112 = vunpack.c.l.b16 %v952
      %v1113 = vunpack.c.l.b16 %v953
      %v1114 = vunpack.c.l.b16 %v954
      %v1115 = vunpack.c.l.b16 %v955
      %v1116 = vunpack.c.l.b16 %v956
      %v1117 = vunpack.c.l.b16 %v957
      %v1118 = vpack.c.b16 %v1071, %v1070
      %v1119 = vpack.c.b16 %v1073, %v1072
      %v1120 = vpack.c.b16 %v1075, %v1074
      %v1121 = vpack.c.b16 %v1077, %v1076
      %v1122 = vpack.c.b16 %v1079, %v1078
      %v1123 = vpack.c.b16 %v1081, %v1080
      %v1124 = vpack.c.b16 %v1083, %v1082
      %v1125 = vpack.c.b16 %v1085, %v1084
      %v1126 = vpack.c.b16 %v1087, %v1086
      %v1127 = vpack.c.b16 %v1089, %v1088
      %v1128 = vpack.c.b16 %v1091, %v1090
      %v1129 = vpack.c.b16 %v1093, %v1092
      %v1130 = vpack.c.b16 %v1095, %v1094
      %v1131 = vpack.c.b16 %v1097, %v1096
      %v1132 = vpack.c.b16 %v1099, %v1098
      %v1133 = vpack.c.b16 %v1101, %v1100
      %v1134 = vpack.c.b16 %v1103, %v1102
      %v1135 = vpack.c.b16 %v1105, %v1104
      %v1136 = vpack.c.b16 %v1107, %v1106
      %v1137 = vpack.c.b16 %v1109, %v1108
      %v1138 = vpack.c.b16 %v1111, %v1110
      %v1139 = vpack.c.b16 %v1113, %v1112
      %v1140 = vpack.c.b16 %v1115, %v1114
      %v1141 = vpack.c.b16 %v1117, %v1116
      %1166 = vmatpush.bf16.msra.mxu0 %v1125
      %1167 = vmatpush.bf16.msra.mxu0 %v1124
      %1168 = vmatpush.bf16.msra.mxu0 %v1123
      %1169 = vmatpush.bf16.msra.mxu0 %v1122
      %1170 = vmatpush.bf16.msra.mxu0 %v1121
      %1171 = vmatpush.bf16.msra.mxu0 %v1120
      %1172 = vmatpush.bf16.msra.mxu0 %v1119
      %1173 = vmatpush.bf16.msra.mxu0 %v1118
      %1174 = vmatmul.bf16.gmra.mxu0 %v998
      %v1175 = vpop.f32.mrf.mxu0
      %v1176 = vadd.f32 0.0, %v1175
      %v1177 = vpop.f32.mrf.mxu0
      %v1178 = vadd.f32 0.0, %v1177
      %1179 = vmatmul.bf16.gmra.mxu0 %v1001
      %v1180 = vpop.f32.mrf.mxu0
      %v1181 = vadd.f32 0.0, %v1180
      %v1182 = vpop.f32.mrf.mxu0
      %v1183 = vadd.f32 0.0, %v1182
      %1184 = vmatmul.bf16.gmra.mxu0 %v1004
      %v1185 = vpop.f32.mrf.mxu0
      %v1186 = vadd.f32 0.0, %v1185
      %v1187 = vpop.f32.mrf.mxu0
      %v1188 = vadd.f32 0.0, %v1187
      %1189 = vmatmul.bf16.gmra.mxu0 %v1007
      %v1190 = vpop.f32.mrf.mxu0
      %v1191 = vadd.f32 0.0, %v1190
      %v1192 = vpop.f32.mrf.mxu0
      %v1193 = vadd.f32 0.0, %v1192
      %1194 = vdwg.mxu0
      %1195 = vmatpush.bf16.msra.mxu0 %v1133
      %1196 = vmatpush.bf16.msra.mxu0 %v1132
      %1197 = vmatpush.bf16.msra.mxu0 %v1131
      %1198 = vmatpush.bf16.msra.mxu0 %v1130
      %1199 = vmatpush.bf16.msra.mxu0 %v1129
      %1200 = vmatpush.bf16.msra.mxu0 %v1128
      %1201 = vmatpush.bf16.msra.mxu0 %v1127
      %1202 = vmatpush.bf16.msra.mxu0 %v1126
      %1203 = vmatmul.bf16.gmra.mxu0 %v999
      %v1204 = vpop.f32.mrf.mxu0
      %v1205 = vadd.f32 %v1176, %v1204
      %v1206 = vpop.f32.mrf.mxu0
      %v1207 = vadd.f32 %v1178, %v1206
      %1208 = vmatmul.bf16.gmra.mxu0 %v1002
      %v1209 = vpop.f32.mrf.mxu0
      %v1210 = vadd.f32 %v1181, %v1209
      %v1211 = vpop.f32.mrf.mxu0
      %v1212 = vadd.f32 %v1183, %v1211
      %1213 = vmatmul.bf16.gmra.mxu0 %v1005
      %v1214 = vpop.f32.mrf.mxu0
      %v1215 = vadd.f32 %v1186, %v1214
      %v1216 = vpop.f32.mrf.mxu0
      %v1217 = vadd.f32 %v1188, %v1216
      %1218 = vmatmul.bf16.gmra.mxu0 %v1008
      %v1219 = vpop.f32.mrf.mxu0
      %v1220 = vadd.f32 %v1191, %v1219
      %v1221 = vpop.f32.mrf.mxu0
      %v1222 = vadd.f32 %v1193, %v1221
      %1223 = vdwg.mxu0
      %1224 = vmatpush.bf16.msra.mxu0 %v1141
      %1225 = vmatpush.bf16.msra.mxu0 %v1140
      %1226 = vmatpush.bf16.msra.mxu0 %v1139
      %1227 = vmatpush.bf16.msra.mxu0 %v1138
      %1228 = vmatpush.bf16.msra.mxu0 %v1137
      %1229 = vmatpush.bf16.msra.mxu0 %v1136
      %1230 = vmatpush.bf16.msra.mxu0 %v1135
      %1231 = vmatpush.bf16.msra.mxu0 %v1134
      %1232 = vmatmul.bf16.gmra.mxu0 %v1000
      %v1233 = vpop.f32.mrf.mxu0
      %v1234 = vadd.f32 %v1205, %v1233
      %v1235 = vpop.f32.mrf.mxu0
      %v1236 = vadd.f32 %v1207, %v1235
      %1237 = vmatmul.bf16.gmra.mxu0 %v1003
      %v1238 = vpop.f32.mrf.mxu0
      %v1239 = vadd.f32 %v1210, %v1238
      %v1240 = vpop.f32.mrf.mxu0
      %v1241 = vadd.f32 %v1212, %v1240
      %1242 = vmatmul.bf16.gmra.mxu0 %v1006
      %v1243 = vpop.f32.mrf.mxu0
      %v1244 = vadd.f32 %v1215, %v1243
      %v1245 = vpop.f32.mrf.mxu0
      %v1246 = vadd.f32 %v1217, %v1245
      %1247 = vmatmul.bf16.gmra.mxu0 %v1009
      %v1248 = vpop.f32.mrf.mxu0
      %v1249 = vadd.f32 %v1220, %v1248
      %v1250 = vpop.f32.mrf.mxu0
      %v1251 = vadd.f32 %v1222, %v1250
      %1252 = vdwg.mxu0
      %v1269 = vunpack.c.l.b16 %v826
      %v1270 = vunpack.c.h.b16 %v826
      %v1271 = vunpack.c.l.b16 %v827
      %v1272 = vunpack.c.l.b16 %v828
      %v1273 = vunpack.c.h.b16 %v828
      %v1274 = vunpack.c.l.b16 %v829
      %v1275 = vunpack.c.l.b16 %v830
      %v1276 = vunpack.c.h.b16 %v830
      %v1277 = vunpack.c.l.b16 %v831
      %v1278 = vunpack.c.l.b16 %v832
      %v1279 = vunpack.c.h.b16 %v832
      %v1280 = vunpack.c.l.b16 %v833
      %v1281 = vunpack.c.l.b16 %v834
      %v1282 = vunpack.c.h.b16 %v834
      %v1283 = vunpack.c.l.b16 %v835
      %v1284 = vunpack.c.l.b16 %v836
      %v1285 = vunpack.c.h.b16 %v836
      %v1286 = vunpack.c.l.b16 %v837
      %v1287 = vunpack.c.l.b16 %v838
      %v1288 = vunpack.c.h.b16 %v838
      %v1289 = vunpack.c.l.b16 %v839
      %v1290 = vunpack.c.l.b16 %v840
      %v1291 = vunpack.c.h.b16 %v840
      %v1292 = vunpack.c.l.b16 %v841
      %v1293 = vpack.c.b16 %v1272, %v1269
      %v1294 = vpack.c.b16 %v1273, %v1270
      %v1295 = vpack.c.b16 %v1274, %v1271
      %v1296 = vpack.c.b16 %v1278, %v1275
      %v1297 = vpack.c.b16 %v1279, %v1276
      %v1298 = vpack.c.b16 %v1280, %v1277
      %v1299 = vpack.c.b16 %v1284, %v1281
      %v1300 = vpack.c.b16 %v1285, %v1282
      %v1301 = vpack.c.b16 %v1286, %v1283
      %v1302 = vpack.c.b16 %v1290, %v1287
      %v1303 = vpack.c.b16 %v1291, %v1288
      %v1304 = vpack.c.b16 %v1292, %v1289
      %v1365 = vunpack.c.l.b16 %v842
      %v1366 = vunpack.c.l.b16 %v843
      %v1367 = vunpack.c.l.b16 %v844
      %v1368 = vunpack.c.l.b16 %v845
      %v1369 = vunpack.c.l.b16 %v846
      %v1370 = vunpack.c.l.b16 %v847
      %v1371 = vunpack.c.l.b16 %v848
      %v1372 = vunpack.c.l.b16 %v849
      %v1373 = vunpack.c.l.b16 %v850
      %v1374 = vunpack.c.l.b16 %v851
      %v1375 = vunpack.c.l.b16 %v852
      %v1376 = vunpack.c.l.b16 %v853
      %v1377 = vunpack.c.l.b16 %v854
      %v1378 = vunpack.c.l.b16 %v855
      %v1379 = vunpack.c.l.b16 %v856
      %v1380 = vunpack.c.l.b16 %v857
      %v1381 = vunpack.c.l.b16 %v858
      %v1382 = vunpack.c.l.b16 %v859
      %v1383 = vunpack.c.l.b16 %v860
      %v1384 = vunpack.c.l.b16 %v861
      %v1385 = vunpack.c.l.b16 %v862
      %v1386 = vunpack.c.l.b16 %v863
      %v1387 = vunpack.c.l.b16 %v864
      %v1388 = vunpack.c.l.b16 %v865
      %v1389 = vunpack.c.l.b16 %v866
      %v1390 = vunpack.c.l.b16 %v867
      %v1391 = vunpack.c.l.b16 %v868
      %v1392 = vunpack.c.l.b16 %v869
      %v1393 = vunpack.c.l.b16 %v870
      %v1394 = vunpack.c.l.b16 %v871
      %v1395 = vunpack.c.l.b16 %v872
      %v1396 = vunpack.c.l.b16 %v873
      %v1397 = vunpack.c.l.b16 %v874
      %v1398 = vunpack.c.l.b16 %v875
      %v1399 = vunpack.c.l.b16 %v876
      %v1400 = vunpack.c.l.b16 %v877
      %v1401 = vunpack.c.l.b16 %v878
      %v1402 = vunpack.c.l.b16 %v879
      %v1403 = vunpack.c.l.b16 %v880
      %v1404 = vunpack.c.l.b16 %v881
      %v1405 = vunpack.c.l.b16 %v882
      %v1406 = vunpack.c.l.b16 %v883
      %v1407 = vunpack.c.l.b16 %v884
      %v1408 = vunpack.c.l.b16 %v885
      %v1409 = vunpack.c.l.b16 %v886
      %v1410 = vunpack.c.l.b16 %v887
      %v1411 = vunpack.c.l.b16 %v888
      %v1412 = vunpack.c.l.b16 %v889
      %v1413 = vpack.c.b16 %v1366, %v1365
      %v1414 = vpack.c.b16 %v1368, %v1367
      %v1415 = vpack.c.b16 %v1370, %v1369
      %v1416 = vpack.c.b16 %v1372, %v1371
      %v1417 = vpack.c.b16 %v1374, %v1373
      %v1418 = vpack.c.b16 %v1376, %v1375
      %v1419 = vpack.c.b16 %v1378, %v1377
      %v1420 = vpack.c.b16 %v1380, %v1379
      %v1421 = vpack.c.b16 %v1382, %v1381
      %v1422 = vpack.c.b16 %v1384, %v1383
      %v1423 = vpack.c.b16 %v1386, %v1385
      %v1424 = vpack.c.b16 %v1388, %v1387
      %v1425 = vpack.c.b16 %v1390, %v1389
      %v1426 = vpack.c.b16 %v1392, %v1391
      %v1427 = vpack.c.b16 %v1394, %v1393
      %v1428 = vpack.c.b16 %v1396, %v1395
      %v1429 = vpack.c.b16 %v1398, %v1397
      %v1430 = vpack.c.b16 %v1400, %v1399
      %v1431 = vpack.c.b16 %v1402, %v1401
      %v1432 = vpack.c.b16 %v1404, %v1403
      %v1433 = vpack.c.b16 %v1406, %v1405
      %v1434 = vpack.c.b16 %v1408, %v1407
      %v1435 = vpack.c.b16 %v1410, %v1409
      %v1436 = vpack.c.b16 %v1412, %v1411
      %1461 = vmatpush.bf16.msra.mxu0 %v1420
      %1462 = vmatpush.bf16.msra.mxu0 %v1419
      %1463 = vmatpush.bf16.msra.mxu0 %v1418
      %1464 = vmatpush.bf16.msra.mxu0 %v1417
      %1465 = vmatpush.bf16.msra.mxu0 %v1416
      %1466 = vmatpush.bf16.msra.mxu0 %v1415
      %1467 = vmatpush.bf16.msra.mxu0 %v1414
      %1468 = vmatpush.bf16.msra.mxu0 %v1413
      %1469 = vmatmul.bf16.gmra.mxu0 %v1293
      %v1470 = vpop.f32.mrf.mxu0
      %v1471 = vadd.f32 %v1234, %v1470
      %v1472 = vpop.f32.mrf.mxu0
      %v1473 = vadd.f32 %v1236, %v1472
      %1474 = vmatmul.bf16.gmra.mxu0 %v1296
      %v1475 = vpop.f32.mrf.mxu0
      %v1476 = vadd.f32 %v1239, %v1475
      %v1477 = vpop.f32.mrf.mxu0
      %v1478 = vadd.f32 %v1241, %v1477
      %1479 = vmatmul.bf16.gmra.mxu0 %v1299
      %v1480 = vpop.f32.mrf.mxu0
      %v1481 = vadd.f32 %v1244, %v1480
      %v1482 = vpop.f32.mrf.mxu0
      %v1483 = vadd.f32 %v1246, %v1482
      %1484 = vmatmul.bf16.gmra.mxu0 %v1302
      %v1485 = vpop.f32.mrf.mxu0
      %v1486 = vadd.f32 %v1249, %v1485
      %v1487 = vpop.f32.mrf.mxu0
      %v1488 = vadd.f32 %v1251, %v1487
      %1489 = vdwg.mxu0
      %1490 = vmatpush.bf16.msra.mxu0 %v1428
      %1491 = vmatpush.bf16.msra.mxu0 %v1427
      %1492 = vmatpush.bf16.msra.mxu0 %v1426
      %1493 = vmatpush.bf16.msra.mxu0 %v1425
      %1494 = vmatpush.bf16.msra.mxu0 %v1424
      %1495 = vmatpush.bf16.msra.mxu0 %v1423
      %1496 = vmatpush.bf16.msra.mxu0 %v1422
      %1497 = vmatpush.bf16.msra.mxu0 %v1421
      %1498 = vmatmul.bf16.gmra.mxu0 %v1294
      %v1499 = vpop.f32.mrf.mxu0
      %v1500 = vadd.f32 %v1471, %v1499
      %v1501 = vpop.f32.mrf.mxu0
      %v1502 = vadd.f32 %v1473, %v1501
      %1503 = vmatmul.bf16.gmra.mxu0 %v1297
      %v1504 = vpop.f32.mrf.mxu0
      %v1505 = vadd.f32 %v1476, %v1504
      %v1506 = vpop.f32.mrf.mxu0
      %v1507 = vadd.f32 %v1478, %v1506
      %1508 = vmatmul.bf16.gmra.mxu0 %v1300
      %v1509 = vpop.f32.mrf.mxu0
      %v1510 = vadd.f32 %v1481, %v1509
      %v1511 = vpop.f32.mrf.mxu0
      %v1512 = vadd.f32 %v1483, %v1511
      %1513 = vmatmul.bf16.gmra.mxu0 %v1303
      %v1514 = vpop.f32.mrf.mxu0
      %v1515 = vadd.f32 %v1486, %v1514
      %v1516 = vpop.f32.mrf.mxu0
      %v1517 = vadd.f32 %v1488, %v1516
      %1518 = vdwg.mxu0
      %1519 = vmatpush.bf16.msra.mxu0 %v1436
      %1520 = vmatpush.bf16.msra.mxu0 %v1435
      %1521 = vmatpush.bf16.msra.mxu0 %v1434
      %1522 = vmatpush.bf16.msra.mxu0 %v1433
      %1523 = vmatpush.bf16.msra.mxu0 %v1432
      %1524 = vmatpush.bf16.msra.mxu0 %v1431
      %1525 = vmatpush.bf16.msra.mxu0 %v1430
      %1526 = vmatpush.bf16.msra.mxu0 %v1429
      %1527 = vmatmul.bf16.gmra.mxu0 %v1295
      %v1528 = vpop.f32.mrf.mxu0
      %v1529 = vadd.f32 %v1500, %v1528
      %v1530 = vpop.f32.mrf.mxu0
      %v1531 = vadd.f32 %v1502, %v1530
      %1532 = vmatmul.bf16.gmra.mxu0 %v1298
      %v1533 = vpop.f32.mrf.mxu0
      %v1534 = vadd.f32 %v1505, %v1533
      %v1535 = vpop.f32.mrf.mxu0
      %v1536 = vadd.f32 %v1507, %v1535
      %1537 = vmatmul.bf16.gmra.mxu0 %v1301
      %v1538 = vpop.f32.mrf.mxu0
      %v1539 = vadd.f32 %v1510, %v1538
      %v1540 = vpop.f32.mrf.mxu0
      %v1541 = vadd.f32 %v1512, %v1540
      %1542 = vmatmul.bf16.gmra.mxu0 %v1304
      %v1543 = vpop.f32.mrf.mxu0
      %v1544 = vadd.f32 %v1515, %v1543
      %v1545 = vpop.f32.mrf.mxu0
      %v1546 = vadd.f32 %v1517, %v1545
      %1547 = vdwg.mxu0
      %s1548 = sadd.s32 %s823, 48
      %s1549 = smul.addr %s1548, 4
      %s1550 = scalar_lea.vmem [#allocation3], %s1549
      %v1551 = vld [vmem:[%s1550] sm:$0xff]
      %v1552 = vld [vmem:[%s1550 + $0x8] sm:$0xf]
      %v1553 = vld [vmem:[%s1550 + $0xc] sm:$0xff]
      %v1554 = vld [vmem:[%s1550 + $0x14] sm:$0xf]
      %v1555 = vld [vmem:[%s1550 + $0x18] sm:$0xff]
      %v1556 = vld [vmem:[%s1550 + $0x20] sm:$0xf]
      %v1557 = vld [vmem:[%s1550 + $0x24] sm:$0xff]
      %v1558 = vld [vmem:[%s1550 + $0x2c] sm:$0xf]
      %v1559 = vld [vmem:[%s1550 + $0x30] sm:$0xff]
      %v1560 = vld [vmem:[%s1550 + $0x38] sm:$0xf]
      %v1561 = vld [vmem:[%s1550 + $0x3c] sm:$0xff]
      %v1562 = vld [vmem:[%s1550 + $0x44] sm:$0xf]
      %v1563 = vld [vmem:[%s1550 + $0x48] sm:$0xff]
      %v1564 = vld [vmem:[%s1550 + $0x50] sm:$0xf]
      %v1565 = vld [vmem:[%s1550 + $0x54] sm:$0xff]
      %v1566 = vld [vmem:[%s1550 + $0x5c] sm:$0xf]
      %s1567 = scalar_lea.vmem %s2, 384
      %v1568 = vld [vmem:[%s1567] sm:$0xf]
      %v1569 = vld [vmem:[%s1567 + $0x4] sm:$0xf]
      %v1570 = vld [vmem:[%s1567 + $0x8] sm:$0xf]
      %v1571 = vld [vmem:[%s1567 + $0xc] sm:$0xf]
      %v1572 = vld [vmem:[%s1567 + $0x10] sm:$0xf]
      %v1573 = vld [vmem:[%s1567 + $0x14] sm:$0xf]
      %v1574 = vld [vmem:[%s1567 + $0x18] sm:$0xf]
      %v1575 = vld [vmem:[%s1567 + $0x1c] sm:$0xf]
      %v1576 = vld [vmem:[%s1567 + $0x20] sm:$0xf]
      %v1577 = vld [vmem:[%s1567 + $0x24] sm:$0xf]
      %v1578 = vld [vmem:[%s1567 + $0x28] sm:$0xf]
      %v1579 = vld [vmem:[%s1567 + $0x2c] sm:$0xf]
      %v1580 = vld [vmem:[%s1567 + $0x30] sm:$0xf]
      %v1581 = vld [vmem:[%s1567 + $0x34] sm:$0xf]
      %v1582 = vld [vmem:[%s1567 + $0x38] sm:$0xf]
      %v1583 = vld [vmem:[%s1567 + $0x3c] sm:$0xf]
      %v1584 = vld [vmem:[%s1567 + $0x40] sm:$0xf]
      %v1585 = vld [vmem:[%s1567 + $0x44] sm:$0xf]
      %v1586 = vld [vmem:[%s1567 + $0x48] sm:$0xf]
      %v1587 = vld [vmem:[%s1567 + $0x4c] sm:$0xf]
      %v1588 = vld [vmem:[%s1567 + $0x50] sm:$0xf]
      %v1589 = vld [vmem:[%s1567 + $0x54] sm:$0xf]
      %v1590 = vld [vmem:[%s1567 + $0x58] sm:$0xf]
      %v1591 = vld [vmem:[%s1567 + $0x5c] sm:$0xf]
      %v1592 = vld [vmem:[%s1567 + $0x60] sm:$0xf]
      %v1593 = vld [vmem:[%s1567 + $0x64] sm:$0xf]
      %v1594 = vld [vmem:[%s1567 + $0x68] sm:$0xf]
      %v1595 = vld [vmem:[%s1567 + $0x6c] sm:$0xf]
      %v1596 = vld [vmem:[%s1567 + $0x70] sm:$0xf]
      %v1597 = vld [vmem:[%s1567 + $0x74] sm:$0xf]
      %v1598 = vld [vmem:[%s1567 + $0x78] sm:$0xf]
      %v1599 = vld [vmem:[%s1567 + $0x7c] sm:$0xf]
      %v1600 = vld [vmem:[%s1567 + $0x80] sm:$0xf]
      %v1601 = vld [vmem:[%s1567 + $0x84] sm:$0xf]
      %v1602 = vld [vmem:[%s1567 + $0x88] sm:$0xf]
      %v1603 = vld [vmem:[%s1567 + $0x8c] sm:$0xf]
      %v1604 = vld [vmem:[%s1567 + $0x90] sm:$0xf]
      %v1605 = vld [vmem:[%s1567 + $0x94] sm:$0xf]
      %v1606 = vld [vmem:[%s1567 + $0x98] sm:$0xf]
      %v1607 = vld [vmem:[%s1567 + $0x9c] sm:$0xf]
      %v1608 = vld [vmem:[%s1567 + $0xa0] sm:$0xf]
      %v1609 = vld [vmem:[%s1567 + $0xa4] sm:$0xf]
      %v1610 = vld [vmem:[%s1567 + $0xa8] sm:$0xf]
      %v1611 = vld [vmem:[%s1567 + $0xac] sm:$0xf]
      %v1612 = vld [vmem:[%s1567 + $0xb0] sm:$0xf]
      %v1613 = vld [vmem:[%s1567 + $0xb4] sm:$0xf]
      %v1614 = vld [vmem:[%s1567 + $0xb8] sm:$0xf]
      %v1615 = vld [vmem:[%s1567 + $0xbc] sm:$0xf]
      %v1632 = vunpack.c.l.b16 %v1551
      %v1633 = vunpack.c.h.b16 %v1551
      %v1634 = vunpack.c.l.b16 %v1552
      %v1635 = vunpack.c.l.b16 %v1553
      %v1636 = vunpack.c.h.b16 %v1553
      %v1637 = vunpack.c.l.b16 %v1554
      %v1638 = vunpack.c.l.b16 %v1555
      %v1639 = vunpack.c.h.b16 %v1555
      %v1640 = vunpack.c.l.b16 %v1556
      %v1641 = vunpack.c.l.b16 %v1557
      %v1642 = vunpack.c.h.b16 %v1557
      %v1643 = vunpack.c.l.b16 %v1558
      %v1644 = vunpack.c.l.b16 %v1559
      %v1645 = vunpack.c.h.b16 %v1559
      %v1646 = vunpack.c.l.b16 %v1560
      %v1647 = vunpack.c.l.b16 %v1561
      %v1648 = vunpack.c.h.b16 %v1561
      %v1649 = vunpack.c.l.b16 %v1562
      %v1650 = vunpack.c.l.b16 %v1563
      %v1651 = vunpack.c.h.b16 %v1563
      %v1652 = vunpack.c.l.b16 %v1564
      %v1653 = vunpack.c.l.b16 %v1565
      %v1654 = vunpack.c.h.b16 %v1565
      %v1655 = vunpack.c.l.b16 %v1566
      %v1656 = vpack.c.b16 %v1635, %v1632
      %v1657 = vpack.c.b16 %v1636, %v1633
      %v1658 = vpack.c.b16 %v1637, %v1634
      %v1659 = vpack.c.b16 %v1641, %v1638
      %v1660 = vpack.c.b16 %v1642, %v1639
      %v1661 = vpack.c.b16 %v1643, %v1640
      %v1662 = vpack.c.b16 %v1647, %v1644
      %v1663 = vpack.c.b16 %v1648, %v1645
      %v1664 = vpack.c.b16 %v1649, %v1646
      %v1665 = vpack.c.b16 %v1653, %v1650
      %v1666 = vpack.c.b16 %v1654, %v1651
      %v1667 = vpack.c.b16 %v1655, %v1652
      %v1728 = vunpack.c.l.b16 %v1568
      %v1729 = vunpack.c.l.b16 %v1569
      %v1730 = vunpack.c.l.b16 %v1570
      %v1731 = vunpack.c.l.b16 %v1571
      %v1732 = vunpack.c.l.b16 %v1572
      %v1733 = vunpack.c.l.b16 %v1573
      %v1734 = vunpack.c.l.b16 %v1574
      %v1735 = vunpack.c.l.b16 %v1575
      %v1736 = vunpack.c.l.b16 %v1576
      %v1737 = vunpack.c.l.b16 %v1577
      %v1738 = vunpack.c.l.b16 %v1578
      %v1739 = vunpack.c.l.b16 %v1579
      %v1740 = vunpack.c.l.b16 %v1580
      %v1741 = vunpack.c.l.b16 %v1581
      %v1742 = vunpack.c.l.b16 %v1582
      %v1743 = vunpack.c.l.b16 %v1583
      %v1744 = vunpack.c.l.b16 %v1584
      %v1745 = vunpack.c.l.b16 %v1585
      %v1746 = vunpack.c.l.b16 %v1586
      %v1747 = vunpack.c.l.b16 %v1587
      %v1748 = vunpack.c.l.b16 %v1588
      %v1749 = vunpack.c.l.b16 %v1589
      %v1750 = vunpack.c.l.b16 %v1590
      %v1751 = vunpack.c.l.b16 %v1591
      %v1752 = vunpack.c.l.b16 %v1592
      %v1753 = vunpack.c.l.b16 %v1593
      %v1754 = vunpack.c.l.b16 %v1594
      %v1755 = vunpack.c.l.b16 %v1595
      %v1756 = vunpack.c.l.b16 %v1596
      %v1757 = vunpack.c.l.b16 %v1597
      %v1758 = vunpack.c.l.b16 %v1598
      %v1759 = vunpack.c.l.b16 %v1599
      %v1760 = vunpack.c.l.b16 %v1600
      %v1761 = vunpack.c.l.b16 %v1601
      %v1762 = vunpack.c.l.b16 %v1602
      %v1763 = vunpack.c.l.b16 %v1603
      %v1764 = vunpack.c.l.b16 %v1604
      %v1765 = vunpack.c.l.b16 %v1605
      %v1766 = vunpack.c.l.b16 %v1606
      %v1767 = vunpack.c.l.b16 %v1607
      %v1768 = vunpack.c.l.b16 %v1608
      %v1769 = vunpack.c.l.b16 %v1609
      %v1770 = vunpack.c.l.b16 %v1610
      %v1771 = vunpack.c.l.b16 %v1611
      %v1772 = vunpack.c.l.b16 %v1612
      %v1773 = vunpack.c.l.b16 %v1613
      %v1774 = vunpack.c.l.b16 %v1614
      %v1775 = vunpack.c.l.b16 %v1615
      %v1776 = vpack.c.b16 %v1729, %v1728
      %v1777 = vpack.c.b16 %v1731, %v1730
      %v1778 = vpack.c.b16 %v1733, %v1732
      %v1779 = vpack.c.b16 %v1735, %v1734
      %v1780 = vpack.c.b16 %v1737, %v1736
      %v1781 = vpack.c.b16 %v1739, %v1738
      %v1782 = vpack.c.b16 %v1741, %v1740
      %v1783 = vpack.c.b16 %v1743, %v1742
      %v1784 = vpack.c.b16 %v1745, %v1744
      %v1785 = vpack.c.b16 %v1747, %v1746
      %v1786 = vpack.c.b16 %v1749, %v1748
      %v1787 = vpack.c.b16 %v1751, %v1750
      %v1788 = vpack.c.b16 %v1753, %v1752
      %v1789 = vpack.c.b16 %v1755, %v1754
      %v1790 = vpack.c.b16 %v1757, %v1756
      %v1791 = vpack.c.b16 %v1759, %v1758
      %v1792 = vpack.c.b16 %v1761, %v1760
      %v1793 = vpack.c.b16 %v1763, %v1762
      %v1794 = vpack.c.b16 %v1765, %v1764
      %v1795 = vpack.c.b16 %v1767, %v1766
      %v1796 = vpack.c.b16 %v1769, %v1768
      %v1797 = vpack.c.b16 %v1771, %v1770
      %v1798 = vpack.c.b16 %v1773, %v1772
      %v1799 = vpack.c.b16 %v1775, %v1774
      %1824 = vmatpush.bf16.msra.mxu0 %v1783
      %1825 = vmatpush.bf16.msra.mxu0 %v1782
      %1826 = vmatpush.bf16.msra.mxu0 %v1781
      %1827 = vmatpush.bf16.msra.mxu0 %v1780
      %1828 = vmatpush.bf16.msra.mxu0 %v1779
      %1829 = vmatpush.bf16.msra.mxu0 %v1778
      %1830 = vmatpush.bf16.msra.mxu0 %v1777
      %1831 = vmatpush.bf16.msra.mxu0 %v1776
      %1832 = vmatmul.bf16.gmra.mxu0 %v1656
      %v1833 = vpop.f32.mrf.mxu0
      %v1834 = vadd.f32 0.0, %v1833
      %v1835 = vpop.f32.mrf.mxu0
      %v1836 = vadd.f32 0.0, %v1835
      %1837 = vmatmul.bf16.gmra.mxu0 %v1659
      %v1838 = vpop.f32.mrf.mxu0
      %v1839 = vadd.f32 0.0, %v1838
      %v1840 = vpop.f32.mrf.mxu0
      %v1841 = vadd.f32 0.0, %v1840
      %1842 = vmatmul.bf16.gmra.mxu0 %v1662
      %v1843 = vpop.f32.mrf.mxu0
      %v1844 = vadd.f32 0.0, %v1843
      %v1845 = vpop.f32.mrf.mxu0
      %v1846 = vadd.f32 0.0, %v1845
      %1847 = vmatmul.bf16.gmra.mxu0 %v1665
      %v1848 = vpop.f32.mrf.mxu0
      %v1849 = vadd.f32 0.0, %v1848
      %v1850 = vpop.f32.mrf.mxu0
      %v1851 = vadd.f32 0.0, %v1850
      %1852 = vdwg.mxu0
      %1853 = vmatpush.bf16.msra.mxu0 %v1791
      %1854 = vmatpush.bf16.msra.mxu0 %v1790
      %1855 = vmatpush.bf16.msra.mxu0 %v1789
      %1856 = vmatpush.bf16.msra.mxu0 %v1788
      %1857 = vmatpush.bf16.msra.mxu0 %v1787
      %1858 = vmatpush.bf16.msra.mxu0 %v1786
      %1859 = vmatpush.bf16.msra.mxu0 %v1785
      %1860 = vmatpush.bf16.msra.mxu0 %v1784
      %1861 = vmatmul.bf16.gmra.mxu0 %v1657
      %v1862 = vpop.f32.mrf.mxu0
      %v1863 = vadd.f32 %v1834, %v1862
      %v1864 = vpop.f32.mrf.mxu0
      %v1865 = vadd.f32 %v1836, %v1864
      %1866 = vmatmul.bf16.gmra.mxu0 %v1660
      %v1867 = vpop.f32.mrf.mxu0
      %v1868 = vadd.f32 %v1839, %v1867
      %v1869 = vpop.f32.mrf.mxu0
      %v1870 = vadd.f32 %v1841, %v1869
      %1871 = vmatmul.bf16.gmra.mxu0 %v1663
      %v1872 = vpop.f32.mrf.mxu0
      %v1873 = vadd.f32 %v1844, %v1872
      %v1874 = vpop.f32.mrf.mxu0
      %v1875 = vadd.f32 %v1846, %v1874
      %1876 = vmatmul.bf16.gmra.mxu0 %v1666
      %v1877 = vpop.f32.mrf.mxu0
      %v1878 = vadd.f32 %v1849, %v1877
      %v1879 = vpop.f32.mrf.mxu0
      %v1880 = vadd.f32 %v1851, %v1879
      %1881 = vdwg.mxu0
      %1882 = vmatpush.bf16.msra.mxu0 %v1799
      %1883 = vmatpush.bf16.msra.mxu0 %v1798
      %1884 = vmatpush.bf16.msra.mxu0 %v1797
      %1885 = vmatpush.bf16.msra.mxu0 %v1796
      %1886 = vmatpush.bf16.msra.mxu0 %v1795
      %1887 = vmatpush.bf16.msra.mxu0 %v1794
      %1888 = vmatpush.bf16.msra.mxu0 %v1793
      %1889 = vmatpush.bf16.msra.mxu0 %v1792
      %1890 = vmatmul.bf16.gmra.mxu0 %v1658
      %v1891 = vpop.f32.mrf.mxu0
      %v1892 = vadd.f32 %v1863, %v1891
      %v1893 = vpop.f32.mrf.mxu0
      %v1894 = vadd.f32 %v1865, %v1893
      %1895 = vmatmul.bf16.gmra.mxu0 %v1661
      %v1896 = vpop.f32.mrf.mxu0
      %v1897 = vadd.f32 %v1868, %v1896
      %v1898 = vpop.f32.mrf.mxu0
      %v1899 = vadd.f32 %v1870, %v1898
      %1900 = vmatmul.bf16.gmra.mxu0 %v1664
      %v1901 = vpop.f32.mrf.mxu0
      %v1902 = vadd.f32 %v1873, %v1901
      %v1903 = vpop.f32.mrf.mxu0
      %v1904 = vadd.f32 %v1875, %v1903
      %1905 = vmatmul.bf16.gmra.mxu0 %v1667
      %v1906 = vpop.f32.mrf.mxu0
      %v1907 = vadd.f32 %v1878, %v1906
      %v1908 = vpop.f32.mrf.mxu0
      %v1909 = vadd.f32 %v1880, %v1908
      %1910 = vdwg.mxu0
      %v1911 = vadd.f32 %v1529, %v1892
      %v1912 = vadd.f32 %v1531, %v1894
      %v1913 = vadd.f32 %v1534, %v1897
      %v1914 = vadd.f32 %v1536, %v1899
      %v1915 = vadd.f32 %v1539, %v1902
      %v1916 = vadd.f32 %v1541, %v1904
      %v1917 = vadd.f32 %v1544, %v1907
      %v1918 = vadd.f32 %v1546, %v1909
      %v1919 = vld [vmem:[%s0 + $0x2] sm:$0x1]
      %v1920 = vperm.slane %v1919, 0
      %v1921 = vadd.f32 %v1911, %v1920
      %v1922 = vadd.f32 %v1912, %v1920
      %v1923 = vadd.f32 %v1913, %v1920
      %v1924 = vadd.f32 %v1914, %v1920
      %v1925 = vadd.f32 %v1915, %v1920
      %v1926 = vadd.f32 %v1916, %v1920
      %v1927 = vadd.f32 %v1917, %v1920
      %v1928 = vadd.f32 %v1918, %v1920
      %v1929 = vpack.c.bf16 %v1921, %v1921
      %v1930 = vpack.c.bf16 %v1922, %v1922
      %v1931 = vpack.c.bf16 %v1923, %v1923
      %v1932 = vpack.c.bf16 %v1924, %v1924
      %v1933 = vpack.c.bf16 %v1925, %v1925
      %v1934 = vpack.c.bf16 %v1926, %v1926
      %v1935 = vpack.c.bf16 %v1927, %v1927
      %v1936 = vpack.c.bf16 %v1928, %v1928
      %1937 = vst [vmem:[%s220] sm:$0xf] %v1929
      %1938 = vst [vmem:[%s220 + $0x4] sm:$0xf] %v1930
      %1939 = vst [vmem:[%s220 + $0x8] sm:$0xf] %v1931
      %1940 = vst [vmem:[%s220 + $0xc] sm:$0xf] %v1932
      %1941 = vst [vmem:[%s220 + $0x10] sm:$0xf] %v1933
      %1942 = vst [vmem:[%s220 + $0x14] sm:$0xf] %v1934
      %1943 = vst [vmem:[%s220 + $0x18] sm:$0xf] %v1935
      %1944 = vst [vmem:[%s220 + $0x1c] sm:$0xf] %v1936
      %v1945 = vld [vmem:[%s226] sm:$0x1]
      %v1946 = vadd.f32 %v1921, %v1922
      %v1947 = vadd.f32 %v1946, %v1923
      %v1948 = vadd.f32 %v1947, %v1924
      %v1949 = vadd.f32 %v1948, %v1925
      %v1950 = vadd.f32 %v1949, %v1926
      %v1951 = vadd.f32 %v1950, %v1927
      %v1952 = vadd.f32 %v1951, %v1928
      %v1953 = vrot.slane %v1952, 4
      %v1954 = vadd.f32 %v1952, %v1953
      %v1955 = vrot.slane %v1954, 2
      %v1956 = vadd.f32 %v1954, %v1955
      %v1957 = vrot.slane %v1956, 1
      %v1958 = vadd.f32 %v1956, %v1957
      %v1959 = vadd.f32 %v1945, %v1958
      %1960 = vst [vmem:[%s226] sm:$0x1] %v1959
      %v1961 = vld [vmem:[%s226 + $0x1] sm:$0x1]
      %v1962 = vmul.f32 %v1921, %v1921
      %v1963 = vmul.f32 %v1922, %v1922
      %v1964 = vmul.f32 %v1923, %v1923
      %v1965 = vmul.f32 %v1924, %v1924
      %v1966 = vmul.f32 %v1925, %v1925
      %v1967 = vmul.f32 %v1926, %v1926
      %v1968 = vmul.f32 %v1927, %v1927
      %v1969 = vmul.f32 %v1928, %v1928
      %v1970 = vadd.f32 %v1962, %v1963
      %v1971 = vadd.f32 %v1970, %v1964
      %v1972 = vadd.f32 %v1971, %v1965
      %v1973 = vadd.f32 %v1972, %v1966
      %v1974 = vadd.f32 %v1973, %v1967
      %v1975 = vadd.f32 %v1974, %v1968
      %v1976 = vadd.f32 %v1975, %v1969
      %v1977 = vrot.slane %v1976, 4
      %v1978 = vadd.f32 %v1976, %v1977
      %v1979 = vrot.slane %v1978, 2
      %v1980 = vadd.f32 %v1978, %v1979
      %v1981 = vrot.slane %v1980, 1
      %v1982 = vadd.f32 %v1980, %v1981
      %v1983 = vadd.f32 %v1961, %v1982
      %1984 = vst [vmem:[%s226 + $0x1] sm:$0x1] %v1983
      %s1985 = sadd.s32 %s20, %s21
      %s1986 = smul.u32 8, %s1985
      %p1987 = scmp.lt.s32.totalorder %s1986, 15
      %s1988 = scalar_select %p1987, %s1986, 15
      %s1989 = smul.addr %s1988, 4
      %s1990 = scalar_lea.vmem %s3, %s1989
      %p1991 = scmp.lt.s32.totalorder %s20, 1
      %s1992 = scalar_select %p1991, %s20, 1
      %s1993 = smul.addr %s1992, 8
      %s1994 = scalar_lea.vmem %s4, %s1993
      // Predicated region
      $region37: #{conv_block_forward.4} parent=31 // pred_check
        %p1995 = pneg %p116
      $region38: #{conv_block_forward.4} parent=31 // pred_check_branch
        %1997 = sbr.rel (%p1995) target = $region40
      $region39: #{conv_block_forward.4} parent=31 // pred_region
        %s1998 = sadd.s32 %s20, %s21
        %s1999 = smul.u32 8, %s1998
      $region40: #{conv_block_forward.4} parent=31 // pred_fallthru
        _
      // Predicated region
      $region41: #{conv_block_forward.4} parent=31 // pred_check
        %p2000 = pneg %p142
      $region42: #{conv_block_forward.4} parent=31 // pred_check_branch
        %2002 = sbr.rel (%p2000) target = $region44
      $region43: #{conv_block_forward.4} parent=31 // pred_region
        _
      $region44: #{conv_block_forward.4} parent=31 // pred_fallthru
        _
    $region32: #{conv_block_forward.4} parent=5 // pred_fallthru
      _
    %p2003 = scmp.le.s32.totalorder 2, %s11
    // Predicated region
    $region45: #{conv_block_forward.4} parent=5 // pred_check
      %p2004 = pneg %p2003
    $region46: #{conv_block_forward.4} parent=5 // pred_check_branch
      %2006 = sbr.rel (%p2004) target = $region48
    $region47: #{conv_block_forward.4} parent=5 // pred_region
      %s2007 = ssub.s32 %s11, 2
      // Predicated region
      $region49: #{conv_block_forward.4} parent=47 // pred_check
        %p2008 = pneg %p122
      $region50: #{conv_block_forward.4} parent=47 // pred_check_branch
        %2010 = sbr.rel (%p2008) target = $region52
      $region51: #{conv_block_forward.4} parent=47 // pred_region
        %s2011 = sadd.s32 %s22, %s23
        %s2012 = smul.u32 8, %s2011
        %p2013 = scmp.lt.s32.totalorder %s2012, 15
        %s2014 = scalar_select %p2013, %s2012, 15
        %s2015 = smul.addr %s2014, 4
        %s2016 = scalar_lea.vmem %s3, %s2015
      $region52: #{conv_block_forward.4} parent=47 // pred_fallthru
        _
      // Predicated region
      $region53: #{conv_block_forward.4} parent=47 // pred_check
        %p2017 = pneg %p148
      $region54: #{conv_block_forward.4} parent=47 // pred_check_branch
        %2019 = sbr.rel (%p2017) target = $region56
      $region55: #{conv_block_forward.4} parent=47 // pred_region
        %p2020 = scmp.lt.s32.totalorder %s22, 1
        %s2021 = scalar_select %p2020, %s22, 1
        %s2022 = smul.addr %s2021, 8
        %s2023 = scalar_lea.vmem %s4, %s2022
      $region56: #{conv_block_forward.4} parent=47 // pred_fallthru
        _
    $region48: #{conv_block_forward.4} parent=5 // pred_fallthru
      _
  $region6: #{conv_block_forward.4} parent=0 // loop_footer
    %s15 = sadd.s32 1, %s11
  $region7: #{conv_block_forward.4} parent=0 // loop_footer_branch
    %10 = sbr.rel target = $region3
  $region8: #{conv_block_forward.4} parent=0 // loop_exit
    _

// kernel: conv_block_forward.3
$region0: #{conv_block_forward.3}
  #allocation0 [shape = 'u32[]', space=smem, size = 0x4, offset = 0x4, fixed_abs, tag = 'smem constant byte address 0x4 - core index']
  #allocation1 [shape = 'u32[72,128]{1,0:T(1,128)}', space=vmem, size = 0x9000, scoped, tag = 'internal scratch']
  #allocation2 [shape = 'f32[18,18,4]{2,1,0:T(8,128)}', space=vmem, size = 0x36000, scoped, tag = 'scratch operand']
  #allocation3 [shape = 'bf16[3,256,12]{2,1,0:T(8,128)(2,1)}', space=vmem, size = 0x30000, scoped, tag = 'scratch operand']
  %s0 = inlined_call_operand.vmem [shape: f32[8,128], index: 0, kind: input, shape index: {}]
  %s1 = inlined_call_operand.vmem [shape: f32[2,16,16,4], index: 1, kind: input, shape index: {}]
  %s2 = inlined_call_operand.vmem [shape: bf16[3,12,128], index: 2, kind: input, shape index: {}]
  %s3 = inlined_call_operand.vmem [shape: bf16[512,128], index: 3, kind: output, shape index: {0}]
  %s4 = inlined_call_operand.vmem [shape: f32[2,8,128], index: 4, kind: output, shape index: {1}]
  %5 = xla_tuple %s3, %s4
  %s6 = sld [smem:[#allocation0]]
  $region57: #{conv_block_forward.3} parent=0
    _
  %s8 = ssub.s32 1, %s6
  %s9 = scalar_select 0, %s8, %s6
  loop: start=0, step=1, limit=4
  $region2: #{conv_block_forward.3} parent=0 // loop_pre_header
    _
  $region3: #{conv_block_forward.3} parent=0 // loop_header
    %s11 = sphi 0, %s15
    %p12 = scmp.ge.s32.totalorder %s11, 4
    %s18 = sphi 0, %s30
    %s19 = sphi 0, %s26
    %s20 = sphi 0, %s18
    %s21 = sphi 0, %s19
    %s22 = sphi 0, %s20
    %s23 = sphi 0, %s21
    %s31 = sphi 0, %s31
    %s33 = sphi 0, %s31
    %s34 = sphi 0, %s33
    %s48 = sphi 0, %s34
    %s54 = sphi 0, %s56
    %s57 = sphi 0, %s54
    %s58 = sphi 0, %s57
    %s74 = sphi 0, %s58
    %s78 = sphi 0, %s78
    %s80 = sphi 0, %s78
    %s81 = sphi 0, %s80
    %s95 = sphi 0, %s81
    %s103 = sphi 0, %s105
    %s106 = sphi 0, %s103
    %s107 = sphi 0, %s106
    %s123 = sphi 0, %s107
    %s129 = sphi 0, %s131
    %s132 = sphi 0, %s129
    %s133 = sphi 0, %s132
    %s149 = sphi 0, %s133
  $region4: #{conv_block_forward.3} parent=0 // loop_header_branch
    %14 = sbr.rel (%p12) target = $region8
  $region5: #{conv_block_forward.3} parent=0 // loop_body
    %s16 = ssub.s32 %s11, 1
    %s17 = ssub.s32 %s11, 2
    %s24 = sadd.s32 1, %s19
    %p25 = scmp.ge.s32.totalorder %s24, 1
    %s26 = scalar_select %p25, 0, %s24
    %s27 = sadd.s32 1, %s18
    %s28 = scalar_select %p25, %s27, %s18
    %p29 = scmp.ge.s32.totalorder %s28, 2
    %s30 = scalar_select %p29, 0, %s28
    %s32 = sadd.s32 %s31, 1
    %p35 = scmp.eq.s32.totalorder %s11, 1
    %p36 = scmp.ne.s32.totalorder %s31, %s33
    %p37 = scmp.eq.s32.totalorder %s11, 0
    %p38 = por %p36, %p37
    %p39 = scmp.ne.s32.totalorder %s31, %s33
    %p40 = scmp.eq.s32.totalorder %s16, 1
    %p41 = por %p39, %p40
    %p42 = scmp.ne.s32.totalorder %s33, %s34
    %p43 = scmp.eq.s32.totalorder %s16, 0
    %p44 = por %p42, %p43
    %p45 = scmp.ne.s32.totalorder %s33, %s34
    %p46 = scmp.eq.s32.totalorder %s17, 1
    %p47 = por %p45, %p46
    %p49 = scmp.ne.s32.totalorder %s34, %s48
    %p50 = scmp.eq.s32.totalorder %s17, 0
    %p51 = por %p49, %p50
    %s52 = ssub.s32 %s18, %s30
    %p53 = scmp.eq.s32.totalorder %s52, 0
    %s55 = sadd.s32 %s54, 1
    %s56 = scalar_select %p53, %s54, %s55
    %p59 = pneg %p53
    %p60 = scmp.eq.s32.totalorder %s11, 1
    %p61 = por %p59, %p60
    %p62 = scmp.ne.s32.totalorder %s54, %s57
    %p63 = scmp.eq.s32.totalorder %s11, 0
    %p64 = por %p62, %p63
    %p65 = scmp.ne.s32.totalorder %s54, %s57
    %p66 = scmp.eq.s32.totalorder %s16, 1
    %p67 = por %p65, %p66
    %p68 = scmp.ne.s32.totalorder %s57, %s58
    %p69 = scmp.eq.s32.totalorder %s16, 0
    %p70 = por %p68, %p69
    %p71 = scmp.ne.s32.totalorder %s57, %s58
    %p72 = scmp.eq.s32.totalorder %s17, 1
    %p73 = por %p71, %p72
    %p75 = scmp.ne.s32.totalorder %s58, %s74
    %p76 = scmp.eq.s32.totalorder %s17, 0
    %p77 = por %p75, %p76
    %s79 = sadd.s32 %s78, 1
    %p82 = scmp.eq.s32.totalorder %s11, 1
    %p83 = scmp.ne.s32.totalorder %s78, %s80
    %p84 = scmp.eq.s32.totalorder %s11, 0
    %p85 = por %p83, %p84
    %p86 = scmp.ne.s32.totalorder %s78, %s80
    %p87 = scmp.eq.s32.totalorder %s16, 1
    %p88 = por %p86, %p87
    %p89 = scmp.ne.s32.totalorder %s80, %s81
    %p90 = scmp.eq.s32.totalorder %s16, 0
    %p91 = por %p89, %p90
    %p92 = scmp.ne.s32.totalorder %s80, %s81
    %p93 = scmp.eq.s32.totalorder %s17, 1
    %p94 = por %p92, %p93
    %p96 = scmp.ne.s32.totalorder %s81, %s95
    %p97 = scmp.eq.s32.totalorder %s17, 0
    %p98 = por %p96, %p97
    %s99 = sadd.s32 %s18, %s19
    %s100 = sadd.s32 %s30, %s26
    %s101 = ssub.s32 %s99, %s100
    %p102 = scmp.eq.s32.totalorder %s101, 0
    %s104 = sadd.s32 %s103, 1
    %s105 = scalar_select %p102, %s103, %s104
    %p108 = pneg %p102
    %p109 = scmp.eq.s32.totalorder %s11, 1
    %p110 = por %p108, %p109
    %p111 = scmp.ne.s32.totalorder %s103, %s106
    %p112 = scmp.eq.s32.totalorder %s11, 0
    %p113 = por %p111, %p112
    %p114 = scmp.ne.s32.totalorder %s103, %s106
    %p115 = scmp.eq.s32.totalorder %s16, 1
    %p116 = por %p114, %p115
    %p117 = scmp.ne.s32.totalorder %s106, %s107
    %p118 = scmp.eq.s32.totalorder %s16, 0
    %p119 = por %p117, %p118
    %p120 = scmp.ne.s32.totalorder %s106, %s107
    %p121 = scmp.eq.s32.totalorder %s17, 1
    %p122 = por %p120, %p121
    %p124 = scmp.ne.s32.totalorder %s107, %s123
    %p125 = scmp.eq.s32.totalorder %s17, 0
    %p126 = por %p124, %p125
    %s127 = ssub.s32 %s18, %s30
    %p128 = scmp.eq.s32.totalorder %s127, 0
    %s130 = sadd.s32 %s129, 1
    %s131 = scalar_select %p128, %s129, %s130
    %p134 = pneg %p128
    %p135 = scmp.eq.s32.totalorder %s11, 1
    %p136 = por %p134, %p135
    %p137 = scmp.ne.s32.totalorder %s129, %s132
    %p138 = scmp.eq.s32.totalorder %s11, 0
    %p139 = por %p137, %p138
    %p140 = scmp.ne.s32.totalorder %s129, %s132
    %p141 = scmp.eq.s32.totalorder %s16, 1
    %p142 = por %p140, %p141
    %p143 = scmp.ne.s32.totalorder %s132, %s133
    %p144 = scmp.eq.s32.totalorder %s16, 0
    %p145 = por %p143, %p144
    %p146 = scmp.ne.s32.totalorder %s132, %s133
    %p147 = scmp.eq.s32.totalorder %s17, 1
    %p148 = por %p146, %p147
    %p150 = scmp.ne.s32.totalorder %s133, %s149
    %p151 = scmp.eq.s32.totalorder %s17, 0
    %p152 = por %p150, %p151
    %p153 = scmp.le.s32.totalorder 1, %s11
    %p154 = scmp.lt.s32.totalorder %s11, 3
    %p155 = pnand %p153, %p154
    %p156 = pneg %p155
    // Predicated region
    $region9: #{conv_block_forward.3} parent=5 // pred_check
      _
    $region10: #{conv_block_forward.3} parent=5 // pred_check_branch
      %158 = sbr.rel (%p155) target = $region12
    $region11: #{conv_block_forward.3} parent=5 // pred_region
      %s159 = ssub.s32 %s11, 1
      // Predicated region
      $region13: #{conv_block_forward.3} parent=11 // pred_check
        %p160 = pneg %p44
      $region14: #{conv_block_forward.3} parent=11 // pred_check_branch
        %162 = sbr.rel (%p160) target = $region16
      $region15: #{conv_block_forward.3} parent=11 // pred_region
        _
      $region16: #{conv_block_forward.3} parent=11 // pred_fallthru
        _
      // Predicated region
      $region17: #{conv_block_forward.3} parent=11 // pred_check
        %p163 = pneg %p91
      $region18: #{conv_block_forward.3} parent=11 // pred_check_branch
        %165 = sbr.rel (%p163) target = $region20
      $region19: #{conv_block_forward.3} parent=11 // pred_region
        _
      $region20: #{conv_block_forward.3} parent=11 // pred_fallthru
        _
    $region12: #{conv_block_forward.3} parent=5 // pred_fallthru
      _
    %p166 = scmp.lt.s32.totalorder %s11, 2
    // Predicated region
    $region21: #{conv_block_forward.3} parent=5 // pred_check
      %p167 = pneg %p166
    $region22: #{conv_block_forward.3} parent=5 // pred_check_branch
      %169 = sbr.rel (%p167) target = $region24
    $region23: #{conv_block_forward.3} parent=5 // pred_region
      // Predicated region
      $region25: #{conv_block_forward.3} parent=23 // pred_check
        %p170 = pneg %p64
      $region26: #{conv_block_forward.3} parent=23 // pred_check_branch
        %172 = sbr.rel (%p170) target = $region28
      $region27: #{conv_block_forward.3} parent=23 // pred_region
        %p173 = scmp.lt.s32.totalorder %s18, 1
        %s174 = scalar_select %p173, %s18, 1
        %s175 = smul.addr %s174, 32
        %s176 = smul.addr %s175, 8
        %s177 = scalar_lea.vmem %s1, %s176
      $region28: #{conv_block_forward.3} parent=23 // pred_fallthru
        _
    $region24: #{conv_block_forward.3} parent=5 // pred_fallthru
      _
    %p178 = scmp.le.s32.totalorder 1, %s11
    %p179 = scmp.lt.s32.totalorder %s11, 3
    %p180 = pnand %p178, %p179
    %p181 = pneg %p180
    // Predicated region
    $region29: #{conv_block_forward.3} parent=5 // pred_check
      _
    $region30: #{conv_block_forward.3} parent=5 // pred_check_branch
      %183 = sbr.rel (%p180) target = $region32
    $region31: #{conv_block_forward.3} parent=5 // pred_region
      %s184 = ssub.s32 %s11, 1
      %p185 = pneg %p44
      %p186 = pneg %p41
      %p187 = scmp.lt.s32.totalorder %s20, 1
      %s188 = scalar_select %p187, %s20, 1
      %s189 = smul.addr %s188, 32
      %s190 = smul.addr %s189, 8
      %s191 = scalar_lea.vmem %s1, %s190
      %p192 = pneg %p70
      %p193 = pneg %p67
      %p194 = pneg %p91
      %p195 = pneg %p88
      %p196 = pneg %p119
      %p197 = pneg %p116
      %s198 = sadd.s32 %s20, %s21
      %s199 = smul.u32 32, %s198
      %p200 = scmp.lt.s32.totalorder %s199, 63
      %s201 = scalar_select %p200, %s199, 63
      %s202 = smul.addr %s201, 4
      %s203 = scalar_lea.vmem %s3, %s202
      %p204 = pneg %p145
      %p205 = pneg %p142
      %p206 = scmp.lt.s32.totalorder %s20, 1
      %s207 = scalar_select %p206, %s20, 1
      %s208 = smul.addr %s207, 8
      %s209 = scalar_lea.vmem %s4, %s208
      %p210 = scmp.lt.s32.totalorder %s20, 1
      %s211 = scalar_select %p210, %s20, 1
      %s212 = smul.addr %s211, 32
      %s213 = smul.addr %s212, 8
      %s214 = scalar_lea.vmem %s1, %s213
      %s215 = sadd.s32 %s20, %s21
      %s216 = smul.u32 32, %s215
      %p217 = scmp.lt.s32.totalorder %s216, 63
      %s218 = scalar_select %p217, %s216, 63
      %s219 = smul.addr %s218, 4
      %s220 = scalar_lea.vmem %s3, %s219
      %s221 = sadd.s32 %s20, %s21
      %s222 = smul.u32 32, %s221
      %p223 = scmp.lt.s32.totalorder %s20, 1
      %s224 = scalar_select %p223, %s20, 1
      %s225 = smul.addr %s224, 8
      %s226 = scalar_lea.vmem %s4, %s225
      %p228 = scmp.eq.s32.totalorder %s21, 0
      // Predicated region
      $region33: #{conv_block_forward.3} parent=31 // pred_check
        %p229 = pneg %p228
      $region34: #{conv_block_forward.3} parent=31 // pred_check_branch
        %231 = sbr.rel (%p229) target = $region36
      $region35: #{conv_block_forward.3} parent=31 // pred_region
        %v232 = vld [vmem:[%s214] sm:$0xff]
        %v233 = vld [vmem:[%s214 + $0x8] sm:$0xff]
        %v234 = vld [vmem:[%s214 + $0x10] sm:$0xff]
        %v235 = vld [vmem:[%s214 + $0x18] sm:$0xff]
        %v236 = vld [vmem:[%s214 + $0x20] sm:$0xff]
        %v237 = vld [vmem:[%s214 + $0x28] sm:$0xff]
        %v238 = vld [vmem:[%s214 + $0x30] sm:$0xff]
        %v239 = vld [vmem:[%s214 + $0x38] sm:$0xff]
        %v240 = vld [vmem:[%s214 + $0x40] sm:$0xff]
        %v241 = vld [vmem:[%s214 + $0x48] sm:$0xff]
        %v242 = vld [vmem:[%s214 + $0x50] sm:$0xff]
        %v243 = vld [vmem:[%s214 + $0x58] sm:$0xff]
        %v244 = vld [vmem:[%s214 + $0x60] sm:$0xff]
        %v245 = vld [vmem:[%s214 + $0x68] sm:$0xff]
        %v246 = vld [vmem:[%s214 + $0x70] sm:$0xff]
        %v247 = vld [vmem:[%s214 + $0x78] sm:$0xff]
        %v248 = vld [vmem:[%s214 + $0x80] sm:$0xff]
        %v249 = vld [vmem:[%s214 + $0x88] sm:$0xff]
        %v250 = vld [vmem:[%s214 + $0x90] sm:$0xff]
        %v251 = vld [vmem:[%s214 + $0x98] sm:$0xff]
        %v252 = vld [vmem:[%s214 + $0xa0] sm:$0xff]
        %v253 = vld [vmem:[%s214 + $0xa8] sm:$0xff]
        %v254 = vld [vmem:[%s214 + $0xb0] sm:$0xff]
        %v255 = vld [vmem:[%s214 + $0xb8] sm:$0xff]
        %v256 = vld [vmem:[%s214 + $0xc0] sm:$0xff]
        %v257 = vld [vmem:[%s214 + $0xc8] sm:$0xff]
        %v258 = vld [vmem:[%s214 + $0xd0] sm:$0xff]
        %v259 = vld [vmem:[%s214 + $0xd8] sm:$0xff]
        %v260 = vld [vmem:[%s214 + $0xe0] sm:$0xff]
        %v261 = vld [vmem:[%s214 + $0xe8] sm:$0xff]
        %v262 = vld [vmem:[%s214 + $0xf0] sm:$0xff]
        %v263 = vld [vmem:[%s214 + $0xf8] sm:$0xff]
        %vm264 = vcmask 31744
        %265 = vst.msk [vmem:[#allocation2] sm:$0xff] %vm264, 0.0
        %266 = vst.msk [vmem:[#allocation2 + $0x8] sm:$0xff] %vm264, 0.0
        %vm267 = vcmask 25600
        %268 = vst.msk [vmem:[#allocation2 + $0x10] sm:$0x3] %vm267, 0.0
        %s269 = scalar_lea.vmem [#allocation2], 408
        %270 = vst.msk [vmem:[%s269] sm:$0xff] %vm264, 0.0
        %271 = vst.msk [vmem:[%s269 + $0x8] sm:$0xff] %vm264, 0.0
        %272 = vst.msk [vmem:[%s269 + $0x10] sm:$0x3] %vm267, 0.0
        %s273 = scalar_lea.vmem [#allocation2], 24
        %vm274 = vcmask 24576
        %275 = vst.msk [vmem:[%s273] sm:$0x1] %vm274, 0.0
        %276 = vst.msk [vmem:[%s273 + $0x18] sm:$0x1] %vm274, 0.0
        %277 = vst.msk [vmem:[%s273 + $0x30] sm:$0x1] %vm274, 0.0
        %278 = vst.msk [vmem:[%s273 + $0x48] sm:$0x1] %vm274, 0.0
        %279 = vst.msk [vmem:[%s273 + $0x60] sm:$0x1] %vm274, 0.0
        %280 = vst.msk [vmem:[%s273 + $0x78] sm:$0x1] %vm274, 0.0
        %281 = vst.msk [vmem:[%s273 + $0x90] sm:$0x1] %vm274, 0.0
        %282 = vst.msk [vmem:[%s273 + $0xa8] sm:$0x1] %vm274, 0.0
        %283 = vst.msk [vmem:[%s273 + $0xc0] sm:$0x1] %vm274, 0.0
        %284 = vst.msk [vmem:[%s273 + $0xd8] sm:$0x1] %vm274, 0.0
        %285 = vst.msk [vmem:[%s273 + $0xf0] sm:$0x1] %vm274, 0.0
        %286 = vst.msk [vmem:[%s273 + $0x108] sm:$0x1] %vm274, 0.0
        %287 = vst.msk [vmem:[%s273 + $0x120] sm:$0x1] %vm274, 0.0
        %288 = vst.msk [vmem:[%s273 + $0x138] sm:$0x1] %vm274, 0.0
        %289 = vst.msk [vmem:[%s273 + $0x150] sm:$0x1] %vm274, 0.0
        %290 = vst.msk [vmem:[%s273 + $0x168] sm:$0x1] %vm274, 0.0
        %291 = vst.msk [vmem:[%s273 + $0x11] sm:$0x1] %vm274, 0.0
        %292 = vst.msk [vmem:[%s273 + $0x29] sm:$0x1] %vm274, 0.0
        %293 = vst.msk [vmem:[%s273 + $0x41] sm:$0x1] %vm274, 0.0
        %294 = vst.msk [vmem:[%s273 + $0x59] sm:$0x1] %vm274, 0.0
        %295 = vst.msk [vmem:[%s273 + $0x71] sm:$0x1] %vm274, 0.0
        %296 = vst.msk [vmem:[%s273 + $0x89] sm:$0x1] %vm274, 0.0
        %297 = vst.msk [vmem:[%s273 + $0xa1] sm:$0x1] %vm274, 0.0
        %298 = vst.msk [vmem:[%s273 + $0xb9] sm:$0x1] %vm274, 0.0
        %299 = vst.msk [vmem:[%s273 + $0xd1] sm:$0x1] %vm274, 0.0
        %300 = vst.msk [vmem:[%s273 + $0xe9] sm:$0x1] %vm274, 0.0
        %301 = vst.msk [vmem:[%s273 + $0x101] sm:$0x1] %vm274, 0.0
        %302 = vst.msk [vmem:[%s273 + $0x119] sm:$0x1] %vm274, 0.0
        %303 = vst.msk [vmem:[%s273 + $0x131] sm:$0x1] %vm274, 0.0
        %304 = vst.msk [vmem:[%s273 + $0x149] sm:$0x1] %vm274, 0.0
        %305 = vst.msk [vmem:[%s273 + $0x161] sm:$0x1] %vm274, 0.0
        %306 = vst.msk [vmem:[%s273 + $0x179] sm:$0x1] %vm274, 0.0
        %307 = vst.msk [vmem:[%s273 + $0x1] sm:$0xff] %vm264, %v232
        %308 = vst.msk [vmem:[%s273 + $0x9] sm:$0xff] %vm264, %v233
        %309 = vst.msk [vmem:[%s273 + $0x19] sm:$0xff] %vm264, %v234
        %310 = vst.msk [vmem:[%s273 + $0x21] sm:$0xff] %vm264, %v235
        %311 = vst.msk [vmem:[%s273 + $0x31] sm:$0xff] %vm264, %v236
        %312 = vst.msk [vmem:[%s273 + $0x39] sm:$0xff] %vm264, %v237
        %313 = vst.msk [vmem:[%s273 + $0x49] sm:$0xff] %vm264, %v238
        %314 = vst.msk [vmem:[%s273 + $0x51] sm:$0xff] %vm264, %v239
        %315 = vst.msk [vmem:[%s273 + $0x61] sm:$0xff] %vm264, %v240
        %316 = vst.msk [vmem:[%s273 + $0x69] sm:$0xff] %vm264, %v241
        %317 = vst.msk [vmem:[%s273 + $0x79] sm:$0xff] %vm264, %v242
        %318 = vst.msk [vmem:[%s273 + $0x81] sm:$0xff] %vm264, %v243
        %319 = vst.msk [vmem:[%s273 + $0x91] sm:$0xff] %vm264, %v244
        %320 = vst.msk [vmem:[%s273 + $0x99] sm:$0xff] %vm264, %v245
        %321 = vst.msk [vmem:[%s273 + $0xa9] sm:$0xff] %vm264, %v246
        %322 = vst.msk [vmem:[%s273 + $0xb1] sm:$0xff] %vm264, %v247
        %323 = vst.msk [vmem:[%s273 + $0xc1] sm:$0xff] %vm264, %v248
        %324 = vst.msk [vmem:[%s273 + $0xc9] sm:$0xff] %vm264, %v249
        %325 = vst.msk [vmem:[%s273 + $0xd9] sm:$0xff] %vm264, %v250
        %326 = vst.msk [vmem:[%s273 + $0xe1] sm:$0xff] %vm264, %v251
        %327 = vst.msk [vmem:[%s273 + $0xf1] sm:$0xff] %vm264, %v252
        %328 = vst.msk [vmem:[%s273 + $0xf9] sm:$0xff] %vm264, %v253
        %329 = vst.msk [vmem:[%s273 + $0x109] sm:$0xff] %vm264, %v254
        %330 = vst.msk [vmem:[%s273 + $0x111] sm:$0xff] %vm264, %v255
        %331 = vst.msk [vmem:[%s273 + $0x121] sm:$0xff] %vm264, %v256
        %332 = vst.msk [vmem:[%s273 + $0x129] sm:$0xff] %vm264, %v257
        %333 = vst.msk [vmem:[%s273 + $0x139] sm:$0xff] %vm264, %v258
        %334 = vst.msk [vmem:[%s273 + $0x141] sm:$0xff] %vm264, %v259
        %335 = vst.msk [vmem:[%s273 + $0x151] sm:$0xff] %vm264, %v260
        %336 = vst.msk [vmem:[%s273 + $0x159] sm:$0xff] %vm264, %v261
        %337 = vst.msk [vmem:[%s273 + $0x169] sm:$0xff] %vm264, %v262
        %338 = vst.msk [vmem:[%s273 + $0x171] sm:$0xff] %vm264, %v263
        %v339 = vld [vmem:[#allocation2] sm:$0xff]
        %v340 = vld [vmem:[#allocation2 + $0x8] sm:$0xff]
        %v341 = vld [vmem:[#allocation2 + $0x18] sm:$0xff]
        %v342 = vld [vmem:[#allocation2 + $0x20] sm:$0xff]
        %v343 = vld [vmem:[#allocation2 + $0x30] sm:$0xff]
        %v344 = vld [vmem:[#allocation2 + $0x38] sm:$0xff]
        %v345 = vld [vmem:[#allocation2 + $0x48] sm:$0xff]
        %v346 = vld [vmem:[#allocation2 + $0x50] sm:$0xff]
        %v347 = vld [vmem:[#allocation2 + $0x60] sm:$0xff]
        %v348 = vld [vmem:[#allocation2 + $0x68] sm:$0xff]
        %v349 = vld [vmem:[#allocation2 + $0x78] sm:$0xff]
        %v350 = vld [vmem:[#allocation2 + $0x80] sm:$0xff]
        %v351 = vld [vmem:[#allocation2 + $0x90] sm:$0xff]
        %v352 = vld [vmem:[#allocation2 + $0x98] sm:$0xff]
        %v353 = vld [vmem:[#allocation2 + $0xa8] sm:$0xff]
        %v354 = vld [vmem:[#allocation2 + $0xb0] sm:$0xff]
        %v355 = vld [vmem:[#allocation2 + $0xc0] sm:$0xff]
        %v356 = vld [vmem:[#allocation2 + $0xc8] sm:$0xff]
        %v357 = vld [vmem:[#allocation2 + $0xd8] sm:$0xff]
        %v358 = vld [vmem:[#allocation2 + $0xe0] sm:$0xff]
        %v359 = vld [vmem:[#allocation2 + $0xf0] sm:$0xff]
        %v360 = vld [vmem:[#allocation2 + $0xf8] sm:$0xff]
        %v361 = vld [vmem:[#allocation2 + $0x108] sm:$0xff]
        %v362 = vld [vmem:[#allocation2 + $0x110] sm:$0xff]
        %v363 = vld [vmem:[#allocation2 + $0x120] sm:$0xff]
        %v364 = vld [vmem:[#allocation2 + $0x128] sm:$0xff]
        %v365 = vld [vmem:[#allocation2 + $0x138] sm:$0xff]
        %v366 = vld [vmem:[#allocation2 + $0x140] sm:$0xff]
        %v367 = vld [vmem:[#allocation2 + $0x150] sm:$0xff]
        %v368 = vld [vmem:[#allocation2 + $0x158] sm:$0xff]
        %v369 = vld [vmem:[#allocation2 + $0x168] sm:$0xff]
        %v370 = vld [vmem:[#allocation2 + $0x170] sm:$0xff]
        %v371 = vpack.c.bf16 %v339, %v339
        %v372 = vpack.c.bf16 %v340, %v340
        %v373 = vpack.c.bf16 %v341, %v341
        %v374 = vpack.c.bf16 %v342, %v342
        %v375 = vpack.c.bf16 %v343, %v343
        %v376 = vpack.c.bf16 %v344, %v344
        %v377 = vpack.c.bf16 %v345, %v345
        %v378 = vpack.c.bf16 %v346, %v346
        %v379 = vpack.c.bf16 %v347, %v347
        %v380 = vpack.c.bf16 %v348, %v348
        %v381 = vpack.c.bf16 %v349, %v349
        %v382 = vpack.c.bf16 %v350, %v350
        %v383 = vpack.c.bf16 %v351, %v351
        %v384 = vpack.c.bf16 %v352, %v352
        %v385 = vpack.c.bf16 %v353, %v353
        %v386 = vpack.c.bf16 %v354, %v354
        %v387 = vpack.c.bf16 %v355, %v355
        %v388 = vpack.c.bf16 %v356, %v356
        %v389 = vpack.c.bf16 %v357, %v357
        %v390 = vpack.c.bf16 %v358, %v358
        %v391 = vpack.c.bf16 %v359, %v359
        %v392 = vpack.c.bf16 %v360, %v360
        %v393 = vpack.c.bf16 %v361, %v361
        %v394 = vpack.c.bf16 %v362, %v362
        %v395 = vpack.c.bf16 %v363, %v363
        %v396 = vpack.c.bf16 %v364, %v364
        %v397 = vpack.c.bf16 %v365, %v365
        %v398 = vpack.c.bf16 %v366, %v366
        %v399 = vpack.c.bf16 %v367, %v367
        %v400 = vpack.c.bf16 %v368, %v368
        %v401 = vpack.c.bf16 %v369, %v369
        %v402 = vpack.c.bf16 %v370, %v370
        %vm403 = vcmask 27648
        %404 = vst.msk [vmem:[#allocation3] sm:$0xf] %vm403, %v371
        %405 = vst.msk [vmem:[#allocation3 + $0x4] sm:$0xf] %vm403, %v372
        %406 = vst.msk [vmem:[#allocation3 + $0x8] sm:$0xf] %vm403, %v373
        %407 = vst.msk [vmem:[#allocation3 + $0xc] sm:$0xf] %vm403, %v374
        %408 = vst.msk [vmem:[#allocation3 + $0x10] sm:$0xf] %vm403, %v375
        %409 = vst.msk [vmem:[#allocation3 + $0x14] sm:$0xf] %vm403, %v376
        %410 = vst.msk [vmem:[#allocation3 + $0x18] sm:$0xf] %vm403, %v377
        %411 = vst.msk [vmem:[#allocation3 + $0x1c] sm:$0xf] %vm403, %v378
        %412 = vst.msk [vmem:[#allocation3 + $0x20] sm:$0xf] %vm403, %v379
        %413 = vst.msk [vmem:[#allocation3 + $0x24] sm:$0xf] %vm403, %v380
        %414 = vst.msk [vmem:[#allocation3 + $0x28] sm:$0xf] %vm403, %v381
        %415 = vst.msk [vmem:[#allocation3 + $0x2c] sm:$0xf] %vm403, %v382
        %416 = vst.msk [vmem:[#allocation3 + $0x30] sm:$0xf] %vm403, %v383
        %417 = vst.msk [vmem:[#allocation3 + $0x34] sm:$0xf] %vm403, %v384
        %418 = vst.msk [vmem:[#allocation3 + $0x38] sm:$0xf] %vm403, %v385
        %419 = vst.msk [vmem:[#allocation3 + $0x3c] sm:$0xf] %vm403, %v386
        %420 = vst.msk [vmem:[#allocation3 + $0x40] sm:$0xf] %vm403, %v387
        %421 = vst.msk [vmem:[#allocation3 + $0x44] sm:$0xf] %vm403, %v388
        %422 = vst.msk [vmem:[#allocation3 + $0x48] sm:$0xf] %vm403, %v389
        %423 = vst.msk [vmem:[#allocation3 + $0x4c] sm:$0xf] %vm403, %v390
        %424 = vst.msk [vmem:[#allocation3 + $0x50] sm:$0xf] %vm403, %v391
        %425 = vst.msk [vmem:[#allocation3 + $0x54] sm:$0xf] %vm403, %v392
        %426 = vst.msk [vmem:[#allocation3 + $0x58] sm:$0xf] %vm403, %v393
        %427 = vst.msk [vmem:[#allocation3 + $0x5c] sm:$0xf] %vm403, %v394
        %428 = vst.msk [vmem:[#allocation3 + $0x60] sm:$0xf] %vm403, %v395
        %429 = vst.msk [vmem:[#allocation3 + $0x64] sm:$0xf] %vm403, %v396
        %430 = vst.msk [vmem:[#allocation3 + $0x68] sm:$0xf] %vm403, %v397
        %431 = vst.msk [vmem:[#allocation3 + $0x6c] sm:$0xf] %vm403, %v398
        %432 = vst.msk [vmem:[#allocation3 + $0x70] sm:$0xf] %vm403, %v399
        %433 = vst.msk [vmem:[#allocation3 + $0x74] sm:$0xf] %vm403, %v400
        %434 = vst.msk [vmem:[#allocation3 + $0x78] sm:$0xf] %vm403, %v401
        %435 = vst.msk [vmem:[#allocation3 + $0x7c] sm:$0xf] %vm403, %v402
        %v436 = vld [vmem:[#allocation2 + $0x1] sm:$0xff]
        %v437 = vld [vmem:[#allocation2 + $0x9] sm:$0xff]
        %v438 = vld [vmem:[#allocation2 + $0x19] sm:$0xff]
        %v439 = vld [vmem:[#allocation2 + $0x21] sm:$0xff]
        %v440 = vld [vmem:[#allocation2 + $0x31] sm:$0xff]
        %v441 = vld [vmem:[#allocation2 + $0x39] sm:$0xff]
        %v442 = vld [vmem:[#allocation2 + $0x49] sm:$0xff]
        %v443 = vld [vmem:[#allocation2 + $0x51] sm:$0xff]
        %v444 = vld [vmem:[#allocation2 + $0x61] sm:$0xff]
        %v445 = vld [vmem:[#allocation2 + $0x69] sm:$0xff]
        %v446 = vld [vmem:[#allocation2 + $0x79] sm:$0xff]
        %v447 = vld [vmem:[#allocation2 + $0x81] sm:$0xff]
        %v448 = vld [vmem:[#allocation2 + $0x91] sm:$0xff]
        %v449 = vld [vmem:[#allocation2 + $0x99] sm:$0xff]
        %v450 = vld [vmem:[#allocation2 + $0xa9] sm:$0xff]
        %v451 = vld [vmem:[#allocation2 + $0xb1] sm:$0xff]
        %v452 = vld [vmem:[#allocation2 + $0xc1] sm:$0xff]
        %v453 = vld [vmem:[#allocation2 + $0xc9] sm:$0xff]
        %v454 = vld [vmem:[#allocation2 + $0xd9] sm:$0xff]
        %v455 = vld [vmem:[#allocation2 + $0xe1] sm:$0xff]
        %v456 = vld [vmem:[#allocation2 + $0xf1] sm:$0xff]
        %v457 = vld [vmem:[#allocation2 + $0xf9] sm:$0xff]
        %v458 = vld [vmem:[#allocation2 + $0x109] sm:$0xff]
        %v459 = vld [vmem:[#allocation2 + $0x111] sm:$0xff]
        %v460 = vld [vmem:[#allocation2 + $0x121] sm:$0xff]
        %v461 = vld [vmem:[#allocation2 + $0x129] sm:$0xff]
        %v462 = vld [vmem:[#allocation2 + $0x139] sm:$0xff]
        %v463 = vld [vmem:[#allocation2 + $0x141] sm:$0xff]
        %v464 = vld [vmem:[#allocation2 + $0x151] sm:$0xff]
        %v465 = vld [vmem:[#allocation2 + $0x159] sm:$0xff]
        %v466 = vld [vmem:[#allocation2 + $0x169] sm:$0xff]
        %v467 = vld [vmem:[#allocation2 + $0x171] sm:$0xff]
        %v468 = vpack.c.bf16 %v436, %v436
        %v469 = vpack.c.bf16 %v437, %v437
        %v470 = vpack.c.bf16 %v438, %v438
        %v471 = vpack.c.bf16 %v439, %v439
        %v472 = vpack.c.bf16 %v440, %v440
        %v473 = vpack.c.bf16 %v441, %v441
        %v474 = vpack.c.bf16 %v442, %v442
        %v475 = vpack.c.bf16 %v443, %v443
        %v476 = vpack.c.bf16 %v444, %v444
        %v477 = vpack.c.bf16 %v445, %v445
        %v478 = vpack.c.bf16 %v446, %v446
        %v479 = vpack.c.bf16 %v447, %v447
        %v480 = vpack.c.bf16 %v448, %v448
        %v481 = vpack.c.bf16 %v449, %v449
        %v482 = vpack.c.bf16 %v450, %v450
        %v483 = vpack.c.bf16 %v451, %v451
        %v484 = vpack.c.bf16 %v452, %v452
        %v485 = vpack.c.bf16 %v453, %v453
        %v486 = vpack.c.bf16 %v454, %v454
        %v487 = vpack.c.bf16 %v455, %v455
        %v488 = vpack.c.bf16 %v456, %v456
        %v489 = vpack.c.bf16 %v457, %v457
        %v490 = vpack.c.bf16 %v458, %v458
        %v491 = vpack.c.bf16 %v459, %v459
        %v492 = vpack.c.bf16 %v460, %v460
        %v493 = vpack.c.bf16 %v461, %v461
        %v494 = vpack.c.bf16 %v462, %v462
        %v495 = vpack.c.bf16 %v463, %v463
        %v496 = vpack.c.bf16 %v464, %v464
        %v497 = vpack.c.bf16 %v465, %v465
        %v498 = vpack.c.bf16 %v466, %v466
        %v499 = vpack.c.bf16 %v467, %v467
        %532 = vrot.lane.b32.xlu0 %v468, 4
        %v533 = vpop.permute.xlu0 %532
        %534 = vrot.lane.b32.xlu0 %v469, 4
        %v535 = vpop.permute.xlu0 %534
        %536 = vrot.lane.b32.xlu0 %v470, 4
        %v537 = vpop.permute.xlu0 %536
        %538 = vrot.lane.b32.xlu0 %v471, 4
        %v539 = vpop.permute.xlu0 %538
        %540 = vrot.lane.b32.xlu0 %v472, 4
        %v541 = vpop.permute.xlu0 %540
        %542 = vrot.lane.b32.xlu0 %v473, 4
        %v543 = vpop.permute.xlu0 %542
        %544 = vrot.lane.b32.xlu0 %v474, 4
        %v545 = vpop.permute.xlu0 %544
        %546 = vrot.lane.b32.xlu0 %v475, 4
        %v547 = vpop.permute.xlu0 %546
        %548 = vrot.lane.b32.xlu0 %v476, 4
        %v549 = vpop.permute.xlu0 %548
        %550 = vrot.lane.b32.xlu0 %v477, 4
        %v551 = vpop.permute.xlu0 %550
        %552 = vrot.lane.b32.xlu0 %v478, 4
        %v553 = vpop.permute.xlu0 %552
        %554 = vrot.lane.b32.xlu0 %v479, 4
        %v555 = vpop.permute.xlu0 %554
        %556 = vrot.lane.b32.xlu0 %v480, 4
        %v557 = vpop.permute.xlu0 %556
        %558 = vrot.lane.b32.xlu0 %v481, 4
        %v559 = vpop.permute.xlu0 %558
        %560 = vrot.lane.b32.xlu0 %v482, 4
        %v561 = vpop.permute.xlu0 %560
        %562 = vrot.lane.b32.xlu0 %v483, 4
        %v563 = vpop.permute.xlu0 %562
        %564 = vrot.lane.b32.xlu0 %v484, 4
        %v565 = vpop.permute.xlu0 %564
        %566 = vrot.lane.b32.xlu0 %v485, 4
        %v567 = vpop.permute.xlu0 %566
        %568 = vrot.lane.b32.xlu0 %v486, 4
        %v569 = vpop.permute.xlu0 %568
        %570 = vrot.lane.b32.xlu0 %v487, 4
        %v571 = vpop.permute.xlu0 %570
        %572 = vrot.lane.b32.xlu0 %v488, 4
        %v573 = vpop.permute.xlu0 %572
        %574 = vrot.lane.b32.xlu0 %v489, 4
        %v575 = vpop.permute.xlu0 %574
        %576 = vrot.lane.b32.xlu0 %v490, 4
        %v577 = vpop.permute.xlu0 %576
        %578 = vrot.lane.b32.xlu0 %v491, 4
        %v579 = vpop.permute.xlu0 %578
        %580 = vrot.lane.b32.xlu0 %v492, 4
        %v581 = vpop.permute.xlu0 %580
        %582 = vrot.lane.b32.xlu0 %v493, 4
        %v583 = vpop.permute.xlu0 %582
        %584 = vrot.lane.b32.xlu0 %v494, 4
        %v585 = vpop.permute.xlu0 %584
        %586 = vrot.lane.b32.xlu0 %v495, 4
        %v587 = vpop.permute.xlu0 %586
        %588 = vrot.lane.b32.xlu0 %v496, 4
        %v589 = vpop.permute.xlu0 %588
        %590 = vrot.lane.b32.xlu0 %v497, 4
        %v591 = vpop.permute.xlu0 %590
        %592 = vrot.lane.b32.xlu0 %v498, 4
        %v593 = vpop.permute.xlu0 %592
        %594 = vrot.lane.b32.xlu0 %v499, 4
        %v595 = vpop.permute.xlu0 %594
        %vm628 = vcmask 60448
        %629 = vst.msk [vmem:[#allocation3] sm:$0xf] %vm628, %v533
        %630 = vst.msk [vmem:[#allocation3 + $0x4] sm:$0xf] %vm628, %v535
        %631 = vst.msk [vmem:[#allocation3 + $0x8] sm:$0xf] %vm628, %v537
        %632 = vst.msk [vmem:[#allocation3 + $0xc] sm:$0xf] %vm628, %v539
        %633 = vst.msk [vmem:[#allocation3 + $0x10] sm:$0xf] %vm628, %v541
        %634 = vst.msk [vmem:[#allocation3 + $0x14] sm:$0xf] %vm628, %v543
        %635 = vst.msk [vmem:[#allocation3 + $0x18] sm:$0xf] %vm628, %v545
        %636 = vst.msk [vmem:[#allocation3 + $0x1c] sm:$0xf] %vm628, %v547
        %637 = vst.msk [vmem:[#allocation3 + $0x20] sm:$0xf] %vm628, %v549
        %638 = vst.msk [vmem:[#allocation3 + $0x24] sm:$0xf] %vm628, %v551
        %639 = vst.msk [vmem:[#allocation3 + $0x28] sm:$0xf] %vm628, %v553
        %640 = vst.msk [vmem:[#allocation3 + $0x2c] sm:$0xf] %vm628, %v555
        %641 = vst.msk [vmem:[#allocation3 + $0x30] sm:$0xf] %vm628, %v557
        %642 = vst.msk [vmem:[#allocation3 + $0x34] sm:$0xf] %vm628, %v559
        %643 = vst.msk [vmem:[#allocation3 + $0x38] sm:$0xf] %vm628, %v561
        %644 = vst.msk [vmem:[#allocation3 + $0x3c] sm:$0xf] %vm628, %v563
        %645 = vst.msk [vmem:[#allocation3 + $0x40] sm:$0xf] %vm628, %v565
        %646 = vst.msk [vmem:[#allocation3 + $0x44] sm:$0xf] %vm628, %v567
        %647 = vst.msk [vmem:[#allocation3 + $0x48] sm:$0xf] %vm628, %v569
        %648 = vst.msk [vmem:[#allocation3 + $0x4c] sm:$0xf] %vm628, %v571
        %649 = vst.msk [vmem:[#allocation3 + $0x50] sm:$0xf] %vm628, %v573
        %650 = vst.msk [vmem:[#allocation3 + $0x54] sm:$0xf] %vm628, %v575
        %651 = vst.msk [vmem:[#allocation3 + $0x58] sm:$0xf] %vm628, %v577
        %652 = vst.msk [vmem:[#allocation3 + $0x5c] sm:$0xf] %vm628, %v579
        %653 = vst.msk [vmem:[#allocation3 + $0x60] sm:$0xf] %vm628, %v581
        %654 = vst.msk [vmem:[#allocation3 + $0x64] sm:$0xf] %vm628, %v583
        %655 = vst.msk [vmem:[#allocation3 + $0x68] sm:$0xf] %vm628, %v585
        %656 = vst.msk [vmem:[#allocation3 + $0x6c] sm:$0xf] %vm628, %v587
        %657 = vst.msk [vmem:[#allocation3 + $0x70] sm:$0xf] %vm628, %v589
        %658 = vst.msk [vmem:[#allocation3 + $0x74] sm:$0xf] %vm628, %v591
        %659 = vst.msk [vmem:[#allocation3 + $0x78] sm:$0xf] %vm628, %v593
        %660 = vst.msk [vmem:[#allocation3 + $0x7c] sm:$0xf] %vm628, %v595
        %v661 = vld [vmem:[#allocation2 + $0x2] sm:$0xff]
        %v662 = vld [vmem:[#allocation2 + $0xa] sm:$0xff]
        %v663 = vld [vmem:[#allocation2 + $0x1a] sm:$0xff]
        %v664 = vld [vmem:[#allocation2 + $0x22] sm:$0xff]
        %v665 = vld [vmem:[#allocation2 + $0x32] sm:$0xff]
        %v666 = vld [vmem:[#allocation2 + $0x3a] sm:$0xff]
        %v667 = vld [vmem:[#allocation2 + $0x4a] sm:$0xff]
        %v668 = vld [vmem:[#allocation2 + $0x52] sm:$0xff]
        %v669 = vld [vmem:[#allocation2 + $0x62] sm:$0xff]
        %v670 = vld [vmem:[#allocation2 + $0x6a] sm:$0xff]
        %v671 = vld [vmem:[#allocation2 + $0x7a] sm:$0xff]
        %v672 = vld [vmem:[#allocation2 + $0x82] sm:$0xff]
        %v673 = vld [vmem:[#allocation2 + $0x92] sm:$0xff]
        %v674 = vld [vmem:[#allocation2 + $0x9a] sm:$0xff]
        %v675 = vld [vmem:[#allocation2 + $0xaa] sm:$0xff]
        %v676 = vld [vmem:[#allocation2 + $0xb2] sm:$0xff]
        %v677 = vld [vmem:[#allocation2 + $0xc2] sm:$0xff]
        %v678 = vld [vmem:[#allocation2 + $0xca] sm:$0xff]
        %v679 = vld [vmem:[#allocation2 + $0xda] sm:$0xff]
        %v680 = vld [vmem:[#allocation2 + $0xe2] sm:$0xff]
        %v681 = vld [vmem:[#allocation2 + $0xf2] sm:$0xff]
        %v682 = vld [vmem:[#allocation2 + $0xfa] sm:$0xff]
        %v683 = vld [vmem:[#allocation2 + $0x10a] sm:$0xff]
        %v684 = vld [vmem:[#allocation2 + $0x112] sm:$0xff]
        %v685 = vld [vmem:[#allocation2 + $0x122] sm:$0xff]
        %v686 = vld [vmem:[#allocation2 + $0x12a] sm:$0xff]
        %v687 = vld [vmem:[#allocation2 + $0x13a] sm:$0xff]
        %v688 = vld [vmem:[#allocation2 + $0x142] sm:$0xff]
        %v689 = vld [vmem:[#allocation2 + $0x152] sm:$0xff]
        %v690 = vld [vmem:[#allocation2 + $0x15a] sm:$0xff]
        %v691 = vld [vmem:[#allocation2 + $0x16a] sm:$0xff]
        %v692 = vld [vmem:[#allocation2 + $0x172] sm:$0xff]
        %v693 = vpack.c.bf16 %v661, %v661
        %v694 = vpack.c.bf16 %v662, %v662
        %v695 = vpack.c.bf16 %v663, %v663
        %v696 = vpack.c.bf16 %v664, %v664
        %v697 = vpack.c.bf16 %v665, %v665
        %v698 = vpack.c.bf16 %v666, %v666
        %v699 = vpack.c.bf16 %v667, %v667
        %v700 = vpack.c.bf16 %v668, %v668
        %v701 = vpack.c.bf16 %v669, %v669
        %v702 = vpack.c.bf16 %v670, %v670
        %v703 = vpack.c.bf16 %v671, %v671
        %v704 = vpack.c.bf16 %v672, %v672
        %v705 = vpack.c.bf16 %v673, %v673
        %v706 = vpack.c.bf16 %v674, %v674
        %v707 = vpack.c.bf16 %v675, %v675
        %v708 = vpack.c.bf16 %v676, %v676
        %v709 = vpack.c.bf16 %v677, %v677
        %v710 = vpack.c.bf16 %v678, %v678
        %v711 = vpack.c.bf16 %v679, %v679
        %v712 = vpack.c.bf16 %v680, %v680
        %v713 = vpack.c.bf16 %v681, %v681
        %v714 = vpack.c.bf16 %v682, %v682
        %v715 = vpack.c.bf16 %v683, %v683
        %v716 = vpack.c.bf16 %v684, %v684
        %v717 = vpack.c.bf16 %v685, %v685
        %v718 = vpack.c.bf16 %v686, %v686
        %v719 = vpack.c.bf16 %v687, %v687
        %v720 = vpack.c.bf16 %v688, %v688
        %v721 = vpack.c.bf16 %v689, %v689
        %v722 = vpack.c.bf16 %v690, %v690
        %v723 = vpack.c.bf16 %v691, %v691
        %v724 = vpack.c.bf16 %v692, %v692
        %757 = vrot.lane.b32.xlu0 %v693, 8
        %v758 = vpop.permute.xlu0 %757
        %759 = vrot.lane.b32.xlu0 %v694, 8
        %v760 = vpop.permute.xlu0 %759
        %761 = vrot.lane.b32.xlu0 %v695, 8
        %v762 = vpop.permute.xlu0 %761
        %763 = vrot.lane.b32.xlu0 %v696, 8
        %v764 = vpop.permute.xlu0 %763
        %765 = vrot.lane.b32.xlu0 %v697, 8
        %v766 = vpop.permute.xlu0 %765
        %767 = vrot.lane.b32.xlu0 %v698, 8
        %v768 = vpop.permute.xlu0 %767
        %769 = vrot.lane.b32.xlu0 %v699, 8
        %v770 = vpop.permute.xlu0 %769
        %771 = vrot.lane.b32.xlu0 %v700, 8
        %v772 = vpop.permute.xlu0 %771
        %773 = vrot.lane.b32.xlu0 %v701, 8
        %v774 = vpop.permute.xlu0 %773
        %775 = vrot.lane.b32.xlu0 %v702, 8
        %v776 = vpop.permute.xlu0 %775
        %777 = vrot.lane.b32.xlu0 %v703, 8
        %v778 = vpop.permute.xlu0 %777
        %779 = vrot.lane.b32.xlu0 %v704, 8
        %v780 = vpop.permute.xlu0 %779
        %781 = vrot.lane.b32.xlu0 %v705, 8
        %v782 = vpop.permute.xlu0 %781
        %783 = vrot.lane.b32.xlu0 %v706, 8
        %v784 = vpop.permute.xlu0 %783
        %785 = vrot.lane.b32.xlu0 %v707, 8
        %v786 = vpop.permute.xlu0 %785
        %787 = vrot.lane.b32.xlu0 %v708, 8
        %v788 = vpop.permute.xlu0 %787
        %789 = vrot.lane.b32.xlu0 %v709, 8
        %v790 = vpop.permute.xlu0 %789
        %791 = vrot.lane.b32.xlu0 %v710, 8
        %v792 = vpop.permute.xlu0 %791
        %793 = vrot.lane.b32.xlu0 %v711, 8
        %v794 = vpop.permute.xlu0 %793
        %795 = vrot.lane.b32.xlu0 %v712, 8
        %v796 = vpop.permute.xlu0 %795
        %797 = vrot.lane.b32.xlu0 %v713, 8
        %v798 = vpop.permute.xlu0 %797
        %799 = vrot.lane.b32.xlu0 %v714, 8
        %v800 = vpop.permute.xlu0 %799
        %801 = vrot.lane.b32.xlu0 %v715, 8
        %v802 = vpop.permute.xlu0 %801
        %803 = vrot.lane.b32.xlu0 %v716, 8
        %v804 = vpop.permute.xlu0 %803
        %805 = vrot.lane.b32.xlu0 %v717, 8
        %v806 = vpop.permute.xlu0 %805
        %807 = vrot.lane.b32.xlu0 %v718, 8
        %v808 = vpop.permute.xlu0 %807
        %809 = vrot.lane.b32.xlu0 %v719, 8
        %v810 = vpop.permute.xlu0 %809
        %811 = vrot.lane.b32.xlu0 %v720, 8
        %v812 = vpop.permute.xlu0 %811
        %813 = vrot.lane.b32.xlu0 %v721, 8
        %v814 = vpop.permute.xlu0 %813
        %815 = vrot.lane.b32.xlu0 %v722, 8
        %v816 = vpop.permute.xlu0 %815
        %817 = vrot.lane.b32.xlu0 %v723, 8
        %v818 = vpop.permute.xlu0 %817
        %819 = vrot.lane.b32.xlu0 %v724, 8
        %v820 = vpop.permute.xlu0 %819
        %vm853 = vcmask 93248
        %854 = vst.msk [vmem:[#allocation3] sm:$0xf] %vm853, %v758
        %855 = vst.msk [vmem:[#allocation3 + $0x4] sm:$0xf] %vm853, %v760
        %856 = vst.msk [vmem:[#allocation3 + $0x8] sm:$0xf] %vm853, %v762
        %857 = vst.msk [vmem:[#allocation3 + $0xc] sm:$0xf] %vm853, %v764
        %858 = vst.msk [vmem:[#allocation3 + $0x10] sm:$0xf] %vm853, %v766
        %859 = vst.msk [vmem:[#allocation3 + $0x14] sm:$0xf] %vm853, %v768
        %860 = vst.msk [vmem:[#allocation3 + $0x18] sm:$0xf] %vm853, %v770
        %861 = vst.msk [vmem:[#allocation3 + $0x1c] sm:$0xf] %vm853, %v772
        %862 = vst.msk [vmem:[#allocation3 + $0x20] sm:$0xf] %vm853, %v774
        %863 = vst.msk [vmem:[#allocation3 + $0x24] sm:$0xf] %vm853, %v776
        %864 = vst.msk [vmem:[#allocation3 + $0x28] sm:$0xf] %vm853, %v778
        %865 = vst.msk [vmem:[#allocation3 + $0x2c] sm:$0xf] %vm853, %v780
        %866 = vst.msk [vmem:[#allocation3 + $0x30] sm:$0xf] %vm853, %v782
        %867 = vst.msk [vmem:[#allocation3 + $0x34] sm:$0xf] %vm853, %v784
        %868 = vst.msk [vmem:[#allocation3 + $0x38] sm:$0xf] %vm853, %v786
        %869 = vst.msk [vmem:[#allocation3 + $0x3c] sm:$0xf] %vm853, %v788
        %870 = vst.msk [vmem:[#allocation3 + $0x40] sm:$0xf] %vm853, %v790
        %871 = vst.msk [vmem:[#allocation3 + $0x44] sm:$0xf] %vm853, %v792
        %872 = vst.msk [vmem:[#allocation3 + $0x48] sm:$0xf] %vm853, %v794
        %873 = vst.msk [vmem:[#allocation3 + $0x4c] sm:$0xf] %vm853, %v796
        %874 = vst.msk [vmem:[#allocation3 + $0x50] sm:$0xf] %vm853, %v798
        %875 = vst.msk [vmem:[#allocation3 + $0x54] sm:$0xf] %vm853, %v800
        %876 = vst.msk [vmem:[#allocation3 + $0x58] sm:$0xf] %vm853, %v802
        %877 = vst.msk [vmem:[#allocation3 + $0x5c] sm:$0xf] %vm853, %v804
        %878 = vst.msk [vmem:[#allocation3 + $0x60] sm:$0xf] %vm853, %v806
        %879 = vst.msk [vmem:[#allocation3 + $0x64] sm:$0xf] %vm853, %v808
        %880 = vst.msk [vmem:[#allocation3 + $0x68] sm:$0xf] %vm853, %v810
        %881 = vst.msk [vmem:[#allocation3 + $0x6c] sm:$0xf] %vm853, %v812
        %882 = vst.msk [vmem:[#allocation3 + $0x70] sm:$0xf] %vm853, %v814
        %883 = vst.msk [vmem:[#allocation3 + $0x74] sm:$0xf] %vm853, %v816
        %884 = vst.msk [vmem:[#allocation3 + $0x78] sm:$0xf] %vm853, %v818
        %885 = vst.msk [vmem:[#allocation3 + $0x7c] sm:$0xf] %vm853, %v820
        %v886 = vld [vmem:[%s273] sm:$0xff]
        %v887 = vld [vmem:[%s273 + $0x8] sm:$0xff]
        %v888 = vld [vmem:[%s273 + $0x18] sm:$0xff]
        %v889 = vld [vmem:[%s273 + $0x20] sm:$0xff]
        %v890 = vld [vmem:[%s273 + $0x30] sm:$0xff]
        %v891 = vld [vmem:[%s273 + $0x38] sm:$0xff]
        %v892 = vld [vmem:[%s273 + $0x48] sm:$0xff]
        %v893 = vld [vmem:[%s273 + $0x50] sm:$0xff]
        %v894 = vld [vmem:[%s273 + $0x60] sm:$0xff]
        %v895 = vld [vmem:[%s273 + $0x68] sm:$0xff]
        %v896 = vld [vmem:[%s273 + $0x78] sm:$0xff]
        %v897 = vld [vmem:[%s273 + $0x80] sm:$0xff]
        %v898 = vld [vmem:[%s273 + $0x90] sm:$0xff]
        %v899 = vld [vmem:[%s273 + $0x98] sm:$0xff]
        %v900 = vld [vmem:[%s273 + $0xa8] sm:$0xff]
        %v901 = vld [vmem:[%s273 + $0xb0] sm:$0xff]
        %v902 = vld [vmem:[%s273 + $0xc0] sm:$0xff]
        %v903 = vld [vmem:[%s273 + $0xc8] sm:$0xff]
        %v904 = vld [vmem:[%s273 + $0xd8] sm:$0xff]
        %v905 = vld [vmem:[%s273 + $0xe0] sm:$0xff]
        %v906 = vld [vmem:[%s273 + $0xf0] sm:$0xff]
        %v907 = vld [vmem:[%s273 + $0xf8] sm:$0xff]
        %v908 = vld [vmem:[%s273 + $0x108] sm:$0xff]
        %v909 = vld [vmem:[%s273 + $0x110] sm:$0xff]
        %v910 = vld [vmem:[%s273 + $0x120] sm:$0xff]
        %v911 = vld [vmem:[%s273 + $0x128] sm:$0xff]
        %v912 = vld [vmem:[%s273 + $0x138] sm:$0xff]
        %v913 = vld [vmem:[%s273 + $0x140] sm:$0xff]
        %v914 = vld [vmem:[%s273 + $0x150] sm:$0xff]
        %v915 = vld [vmem:[%s273 + $0x158] sm:$0xff]
        %v916 = vld [vmem:[%s273 + $0x168] sm:$0xff]
        %v917 = vld [vmem:[%s273 + $0x170] sm:$0xff]
        %v918 = vpack.c.bf16 %v886, %v886
        %v919 = vpack.c.bf16 %v887, %v887
        %v920 = vpack.c.bf16 %v888, %v888
        %v921 = vpack.c.bf16 %v889, %v889
        %v922 = vpack.c.bf16 %v890, %v890
        %v923 = vpack.c.bf16 %v891, %v891
        %v924 = vpack.c.bf16 %v892, %v892
        %v925 = vpack.c.bf16 %v893, %v893
        %v926 = vpack.c.bf16 %v894, %v894
        %v927 = vpack.c.bf16 %v895, %v895
        %v928 = vpack.c.bf16 %v896, %v896
        %v929 = vpack.c.bf16 %v897, %v897
        %v930 = vpack.c.bf16 %v898, %v898
        %v931 = vpack.c.bf16 %v899, %v899
        %v932 = vpack.c.bf16 %v900, %v900
        %v933 = vpack.c.bf16 %v901, %v901
        %v934 = vpack.c.bf16 %v902, %v902
        %v935 = vpack.c.bf16 %v903, %v903
        %v936 = vpack.c.bf16 %v904, %v904
        %v937 = vpack.c.bf16 %v905, %v905
        %v938 = vpack.c.bf16 %v906, %v906
        %v939 = vpack.c.bf16 %v907, %v907
        %v940 = vpack.c.bf16 %v908, %v908
        %v941 = vpack.c.bf16 %v909, %v909
        %v942 = vpack.c.bf16 %v910, %v910
        %v943 = vpack.c.bf16 %v911, %v911
        %v944 = vpack.c.bf16 %v912, %v912
        %v945 = vpack.c.bf16 %v913, %v913
        %v946 = vpack.c.bf16 %v914, %v914
        %v947 = vpack.c.bf16 %v915, %v915
        %v948 = vpack.c.bf16 %v916, %v916
        %v949 = vpack.c.bf16 %v917, %v917
        %s950 = scalar_lea.vmem [#allocation3], 128
        %951 = vst.msk [vmem:[%s950] sm:$0xf] %vm403, %v918
        %952 = vst.msk [vmem:[%s950 + $0x4] sm:$0xf] %vm403, %v919
        %953 = vst.msk [vmem:[%s950 + $0x8] sm:$0xf] %vm403, %v920
        %954 = vst.msk [vmem:[%s950 + $0xc] sm:$0xf] %vm403, %v921
        %955 = vst.msk [vmem:[%s950 + $0x10] sm:$0xf] %vm403, %v922
        %956 = vst.msk [vmem:[%s950 + $0x14] sm:$0xf] %vm403, %v923
        %957 = vst.msk [vmem:[%s950 + $0x18] sm:$0xf] %vm403, %v924
        %958 = vst.msk [vmem:[%s950 + $0x1c] sm:$0xf] %vm403, %v925
        %959 = vst.msk [vmem:[%s950 + $0x20] sm:$0xf] %vm403, %v926
        %960 = vst.msk [vmem:[%s950 + $0x24] sm:$0xf] %vm403, %v927
        %961 = vst.msk [vmem:[%s950 + $0x28] sm:$0xf] %vm403, %v928
        %962 = vst.msk [vmem:[%s950 + $0x2c] sm:$0xf] %vm403, %v929
        %963 = vst.msk [vmem:[%s950 + $0x30] sm:$0xf] %vm403, %v930
        %964 = vst.msk [vmem:[%s950 + $0x34] sm:$0xf] %vm403, %v931
        %965 = vst.msk [vmem:[%s950 + $0x38] sm:$0xf] %vm403, %v932
        %966 = vst.msk [vmem:[%s950 + $0x3c] sm:$0xf] %vm403, %v933
        %967 = vst.msk [vmem:[%s950 + $0x40] sm:$0xf] %vm403, %v934
        %968 = vst.msk [vmem:[%s950 + $0x44] sm:$0xf] %vm403, %v935
        %969 = vst.msk [vmem:[%s950 + $0x48] sm:$0xf] %vm403, %v936
        %970 = vst.msk [vmem:[%s950 + $0x4c] sm:$0xf] %vm403, %v937
        %971 = vst.msk [vmem:[%s950 + $0x50] sm:$0xf] %vm403, %v938
        %972 = vst.msk [vmem:[%s950 + $0x54] sm:$0xf] %vm403, %v939
        %973 = vst.msk [vmem:[%s950 + $0x58] sm:$0xf] %vm403, %v940
        %974 = vst.msk [vmem:[%s950 + $0x5c] sm:$0xf] %vm403, %v941
        %975 = vst.msk [vmem:[%s950 + $0x60] sm:$0xf] %vm403, %v942
        %976 = vst.msk [vmem:[%s950 + $0x64] sm:$0xf] %vm403, %v943
        %977 = vst.msk [vmem:[%s950 + $0x68] sm:$0xf] %vm403, %v944
        %978 = vst.msk [vmem:[%s950 + $0x6c] sm:$0xf] %vm403, %v945
        %979 = vst.msk [vmem:[%s950 + $0x70] sm:$0xf] %vm403, %v946
        %980 = vst.msk [vmem:[%s950 + $0x74] sm:$0xf] %vm403, %v947
        %981 = vst.msk [vmem:[%s950 + $0x78] sm:$0xf] %vm403, %v948
        %982 = vst.msk [vmem:[%s950 + $0x7c] sm:$0xf] %vm403, %v949
        %v983 = vld [vmem:[%s273 + $0x1] sm:$0xff]
        %v984 = vld [vmem:[%s273 + $0x9] sm:$0xff]
        %v985 = vld [vmem:[%s273 + $0x19] sm:$0xff]
        %v986 = vld [vmem:[%s273 + $0x21] sm:$0xff]
        %v987 = vld [vmem:[%s273 + $0x31] sm:$0xff]
        %v988 = vld [vmem:[%s273 + $0x39] sm:$0xff]
        %v989 = vld [vmem:[%s273 + $0x49] sm:$0xff]
        %v990 = vld [vmem:[%s273 + $0x51] sm:$0xff]
        %v991 = vld [vmem:[%s273 + $0x61] sm:$0xff]
        %v992 = vld [vmem:[%s273 + $0x69] sm:$0xff]
        %v993 = vld [vmem:[%s273 + $0x79] sm:$0xff]
        %v994 = vld [vmem:[%s273 + $0x81] sm:$0xff]
        %v995 = vld [vmem:[%s273 + $0x91] sm:$0xff]
        %v996 = vld [vmem:[%s273 + $0x99] sm:$0xff]
        %v997 = vld [vmem:[%s273 + $0xa9] sm:$0xff]
        %v998 = vld [vmem:[%s273 + $0xb1] sm:$0xff]
        %v999 = vld [vmem:[%s273 + $0xc1] sm:$0xff]
        %v1000 = vld [vmem:[%s273 + $0xc9] sm:$0xff]
        %v1001 = vld [vmem:[%s273 + $0xd9] sm:$0xff]
        %v1002 = vld [vmem:[%s273 + $0xe1] sm:$0xff]
        %v1003 = vld [vmem:[%s273 + $0xf1] sm:$0xff]
        %v1004 = vld [vmem:[%s273 + $0xf9] sm:$0xff]
        %v1005 = vld [vmem:[%s273 + $0x109] sm:$0xff]
        %v1006 = vld [vmem:[%s273 + $0x111] sm:$0xff]
        %v1007 = vld [vmem:[%s273 + $0x121] sm:$0xff]
        %v1008 = vld [vmem:[%s273 + $0x129] sm:$0xff]
        %v1009 = vld [vmem:[%s273 + $0x139] sm:$0xff]
        %v1010 = vld [vmem:[%s273 + $0x141] sm:$0xff]
        %v1011 = vld [vmem:[%s273 + $0x151] sm:$0xff]
        %v1012 = vld [vmem:[%s273 + $0x159] sm:$0xff]
        %v1013 = vld [vmem:[%s273 + $0x169] sm:$0xff]
        %v1014 = vld [vmem:[%s273 + $0x171] sm:$0xff]
        %v1015 = vpack.c.bf16 %v983, %v983
        %v1016 = vpack.c.bf16 %v984, %v984
        %v1017 = vpack.c.bf16 %v985, %v985
        %v1018 = vpack.c.bf16 %v986, %v986
        %v1019 = vpack.c.bf16 %v987, %v987
        %v1020 = vpack.c.bf16 %v988, %v988
        %v1021 = vpack.c.bf16 %v989, %v989
        %v1022 = vpack.c.bf16 %v990, %v990
        %v1023 = vpack.c.bf16 %v991, %v991
        %v1024 = vpack.c.bf16 %v992, %v992
        %v1025 = vpack.c.bf16 %v993, %v993
        %v1026 = vpack.c.bf16 %v994, %v994
        %v1027 = vpack.c.bf16 %v995, %v995
        %v1028 = vpack.c.bf16 %v996, %v996
        %v1029 = vpack.c.bf16 %v997, %v997
        %v1030 = vpack.c.bf16 %v998, %v998
        %v1031 = vpack.c.bf16 %v999, %v999
        %v1032 = vpack.c.bf16 %v1000, %v1000
        %v1033 = vpack.c.bf16 %v1001, %v1001
        %v1034 = vpack.c.bf16 %v1002, %v1002
        %v1035 = vpack.c.bf16 %v1003, %v1003
        %v1036 = vpack.c.bf16 %v1004, %v1004
        %v1037 = vpack.c.bf16 %v1005, %v1005
        %v1038 = vpack.c.bf16 %v1006, %v1006
        %v1039 = vpack.c.bf16 %v1007, %v1007
        %v1040 = vpack.c.bf16 %v1008, %v1008
        %v1041 = vpack.c.bf16 %v1009, %v1009
        %v1042 = vpack.c.bf16 %v1010, %v1010
        %v1043 = vpack.c.bf16 %v1011, %v1011
        %v1044 = vpack.c.bf16 %v1012, %v1012
        %v1045 = vpack.c.bf16 %v1013, %v1013
        %v1046 = vpack.c.bf16 %v1014, %v1014
        %1079 = vrot.lane.b32.xlu0 %v1015, 4
        %v1080 = vpop.permute.xlu0 %1079
        %1081 = vrot.lane.b32.xlu0 %v1016, 4
        %v1082 = vpop.permute.xlu0 %1081
        %1083 = vrot.lane.b32.xlu0 %v1017, 4
        %v1084 = vpop.permute.xlu0 %1083
        %1085 = vrot.lane.b32.xlu0 %v1018, 4
        %v1086 = vpop.permute.xlu0 %1085
        %1087 = vrot.lane.b32.xlu0 %v1019, 4
        %v1088 = vpop.permute.xlu0 %1087
        %1089 = vrot.lane.b32.xlu0 %v1020, 4
        %v1090 = vpop.permute.xlu0 %1089
        %1091 = vrot.lane.b32.xlu0 %v1021, 4
        %v1092 = vpop.permute.xlu0 %1091
        %1093 = vrot.lane.b32.xlu0 %v1022, 4
        %v1094 = vpop.permute.xlu0 %1093
        %1095 = vrot.lane.b32.xlu0 %v1023, 4
        %v1096 = vpop.permute.xlu0 %1095
        %1097 = vrot.lane.b32.xlu0 %v1024, 4
        %v1098 = vpop.permute.xlu0 %1097
        %1099 = vrot.lane.b32.xlu0 %v1025, 4
        %v1100 = vpop.permute.xlu0 %1099
        %1101 = vrot.lane.b32.xlu0 %v1026, 4
        %v1102 = vpop.permute.xlu0 %1101
        %1103 = vrot.lane.b32.xlu0 %v1027, 4
        %v1104 = vpop.permute.xlu0 %1103
        %1105 = vrot.lane.b32.xlu0 %v1028, 4
        %v1106 = vpop.permute.xlu0 %1105
        %1107 = vrot.lane.b32.xlu0 %v1029, 4
        %v1108 = vpop.permute.xlu0 %1107
        %1109 = vrot.lane.b32.xlu0 %v1030, 4
        %v1110 = vpop.permute.xlu0 %1109
        %1111 = vrot.lane.b32.xlu0 %v1031, 4
        %v1112 = vpop.permute.xlu0 %1111
        %1113 = vrot.lane.b32.xlu0 %v1032, 4
        %v1114 = vpop.permute.xlu0 %1113
        %1115 = vrot.lane.b32.xlu0 %v1033, 4
        %v1116 = vpop.permute.xlu0 %1115
        %1117 = vrot.lane.b32.xlu0 %v1034, 4
        %v1118 = vpop.permute.xlu0 %1117
        %1119 = vrot.lane.b32.xlu0 %v1035, 4
        %v1120 = vpop.permute.xlu0 %1119
        %1121 = vrot.lane.b32.xlu0 %v1036, 4
        %v1122 = vpop.permute.xlu0 %1121
        %1123 = vrot.lane.b32.xlu0 %v1037, 4
        %v1124 = vpop.permute.xlu0 %1123
        %1125 = vrot.lane.b32.xlu0 %v1038, 4
        %v1126 = vpop.permute.xlu0 %1125
        %1127 = vrot.lane.b32.xlu0 %v1039, 4
        %v1128 = vpop.permute.xlu0 %1127
        %1129 = vrot.lane.b32.xlu0 %v1040, 4
        %v1130 = vpop.permute.xlu0 %1129
        %1131 = vrot.lane.b32.xlu0 %v1041, 4
        %v1132 = vpop.permute.xlu0 %1131
        %1133 = vrot.lane.b32.xlu0 %v1042, 4
        %v1134 = vpop.permute.xlu0 %1133
        %1135 = vrot.lane.b32.xlu0 %v1043, 4
        %v1136 = vpop.permute.xlu0 %1135
        %1137 = vrot.lane.b32.xlu0 %v1044, 4
        %v1138 = vpop.permute.xlu0 %1137
        %1139 = vrot.lane.b32.xlu0 %v1045, 4
        %v1140 = vpop.permute.xlu0 %1139
        %1141 = vrot.lane.b32.xlu0 %v1046, 4
        %v1142 = vpop.permute.xlu0 %1141
        %1175 = vst.msk [vmem:[%s950] sm:$0xf] %vm628, %v1080
        %1176 = vst.msk [vmem:[%s950 + $0x4] sm:$0xf] %vm628, %v1082
        %1177 = vst.msk [vmem:[%s950 + $0x8] sm:$0xf] %vm628, %v1084
        %1178 = vst.msk [vmem:[%s950 + $0xc] sm:$0xf] %vm628, %v1086
        %1179 = vst.msk [vmem:[%s950 + $0x10] sm:$0xf] %vm628, %v1088
        %1180 = vst.msk [vmem:[%s950 + $0x14] sm:$0xf] %vm628, %v1090
        %1181 = vst.msk [vmem:[%s950 + $0x18] sm:$0xf] %vm628, %v1092
        %1182 = vst.msk [vmem:[%s950 + $0x1c] sm:$0xf] %vm628, %v1094
        %1183 = vst.msk [vmem:[%s950 + $0x20] sm:$0xf] %vm628, %v1096
        %1184 = vst.msk [vmem:[%s950 + $0x24] sm:$0xf] %vm628, %v1098
        %1185 = vst.msk [vmem:[%s950 + $0x28] sm:$0xf] %vm628, %v1100
        %1186 = vst.msk [vmem:[%s950 + $0x2c] sm:$0xf] %vm628, %v1102
        %1187 = vst.msk [vmem:[%s950 + $0x30] sm:$0xf] %vm628, %v1104
        %1188 = vst.msk [vmem:[%s950 + $0x34] sm:$0xf] %vm628, %v1106
        %1189 = vst.msk [vmem:[%s950 + $0x38] sm:$0xf] %vm628, %v1108
        %1190 = vst.msk [vmem:[%s950 + $0x3c] sm:$0xf] %vm628, %v1110
        %1191 = vst.msk [vmem:[%s950 + $0x40] sm:$0xf] %vm628, %v1112
        %1192 = vst.msk [vmem:[%s950 + $0x44] sm:$0xf] %vm628, %v1114
        %1193 = vst.msk [vmem:[%s950 + $0x48] sm:$0xf] %vm628, %v1116
        %1194 = vst.msk [vmem:[%s950 + $0x4c] sm:$0xf] %vm628, %v1118
        %1195 = vst.msk [vmem:[%s950 + $0x50] sm:$0xf] %vm628, %v1120
        %1196 = vst.msk [vmem:[%s950 + $0x54] sm:$0xf] %vm628, %v1122
        %1197 = vst.msk [vmem:[%s950 + $0x58] sm:$0xf] %vm628, %v1124
        %1198 = vst.msk [vmem:[%s950 + $0x5c] sm:$0xf] %vm628, %v1126
        %1199 = vst.msk [vmem:[%s950 + $0x60] sm:$0xf] %vm628, %v1128
        %1200 = vst.msk [vmem:[%s950 + $0x64] sm:$0xf] %vm628, %v1130
        %1201 = vst.msk [vmem:[%s950 + $0x68] sm:$0xf] %vm628, %v1132
        %1202 = vst.msk [vmem:[%s950 + $0x6c] sm:$0xf] %vm628, %v1134
        %1203 = vst.msk [vmem:[%s950 + $0x70] sm:$0xf] %vm628, %v1136
        %1204 = vst.msk [vmem:[%s950 + $0x74] sm:$0xf] %vm628, %v1138
        %1205 = vst.msk [vmem:[%s950 + $0x78] sm:$0xf] %vm628, %v1140
        %1206 = vst.msk [vmem:[%s950 + $0x7c] sm:$0xf] %vm628, %v1142
        %v1207 = vld [vmem:[%s273 + $0x2] sm:$0xff]
        %v1208 = vld [vmem:[%s273 + $0xa] sm:$0xff]
        %v1209 = vld [vmem:[%s273 + $0x1a] sm:$0xff]
        %v1210 = vld [vmem:[%s273 + $0x22] sm:$0xff]
        %v1211 = vld [vmem:[%s273 + $0x32] sm:$0xff]
        %v1212 = vld [vmem:[%s273 + $0x3a] sm:$0xff]
        %v1213 = vld [vmem:[%s273 + $0x4a] sm:$0xff]
        %v1214 = vld [vmem:[%s273 + $0x52] sm:$0xff]
        %v1215 = vld [vmem:[%s273 + $0x62] sm:$0xff]
        %v1216 = vld [vmem:[%s273 + $0x6a] sm:$0xff]
        %v1217 = vld [vmem:[%s273 + $0x7a] sm:$0xff]
        %v1218 = vld [vmem:[%s273 + $0x82] sm:$0xff]
        %v1219 = vld [vmem:[%s273 + $0x92] sm:$0xff]
        %v1220 = vld [vmem:[%s273 + $0x9a] sm:$0xff]
        %v1221 = vld [vmem:[%s273 + $0xaa] sm:$0xff]
        %v1222 = vld [vmem:[%s273 + $0xb2] sm:$0xff]
        %v1223 = vld [vmem:[%s273 + $0xc2] sm:$0xff]
        %v1224 = vld [vmem:[%s273 + $0xca] sm:$0xff]
        %v1225 = vld [vmem:[%s273 + $0xda] sm:$0xff]
        %v1226 = vld [vmem:[%s273 + $0xe2] sm:$0xff]
        %v1227 = vld [vmem:[%s273 + $0xf2] sm:$0xff]
        %v1228 = vld [vmem:[%s273 + $0xfa] sm:$0xff]
        %v1229 = vld [vmem:[%s273 + $0x10a] sm:$0xff]
        %v1230 = vld [vmem:[%s273 + $0x112] sm:$0xff]
        %v1231 = vld [vmem:[%s273 + $0x122] sm:$0xff]
        %v1232 = vld [vmem:[%s273 + $0x12a] sm:$0xff]
        %v1233 = vld [vmem:[%s273 + $0x13a] sm:$0xff]
        %v1234 = vld [vmem:[%s273 + $0x142] sm:$0xff]
        %v1235 = vld [vmem:[%s273 + $0x152] sm:$0xff]
        %v1236 = vld [vmem:[%s273 + $0x15a] sm:$0xff]
        %v1237 = vld [vmem:[%s273 + $0x16a] sm:$0xff]
        %v1238 = vld [vmem:[%s273 + $0x172] sm:$0xff]
        %v1239 = vpack.c.bf16 %v1207, %v1207
        %v1240 = vpack.c.bf16 %v1208, %v1208
        %v1241 = vpack.c.bf16 %v1209, %v1209
        %v1242 = vpack.c.bf16 %v1210, %v1210
        %v1243 = vpack.c.bf16 %v1211, %v1211
        %v1244 = vpack.c.bf16 %v1212, %v1212
        %v1245 = vpack.c.bf16 %v1213, %v1213
        %v1246 = vpack.c.bf16 %v1214, %v1214
        %v1247 = vpack.c.bf16 %v1215, %v1215
        %v1248 = vpack.c.bf16 %v1216, %v1216
        %v1249 = vpack.c.bf16 %v1217, %v1217
        %v1250 = vpack.c.bf16 %v1218, %v1218
        %v1251 = vpack.c.bf16 %v1219, %v1219
        %v1252 = vpack.c.bf16 %v1220, %v1220
        %v1253 = vpack.c.bf16 %v1221, %v1221
        %v1254 = vpack.c.bf16 %v1222, %v1222
        %v1255 = vpack.c.bf16 %v1223, %v1223
        %v1256 = vpack.c.bf16 %v1224, %v1224
        %v1257 = vpack.c.bf16 %v1225, %v1225
        %v1258 = vpack.c.bf16 %v1226, %v1226
        %v1259 = vpack.c.bf16 %v1227, %v1227
        %v1260 = vpack.c.bf16 %v1228, %v1228
        %v1261 = vpack.c.bf16 %v1229, %v1229
        %v1262 = vpack.c.bf16 %v1230, %v1230
        %v1263 = vpack.c.bf16 %v1231, %v1231
        %v1264 = vpack.c.bf16 %v1232, %v1232
        %v1265 = vpack.c.bf16 %v1233, %v1233
        %v1266 = vpack.c.bf16 %v1234, %v1234
        %v1267 = vpack.c.bf16 %v1235, %v1235
        %v1268 = vpack.c.bf16 %v1236, %v1236
        %v1269 = vpack.c.bf16 %v1237, %v1237
        %v1270 = vpack.c.bf16 %v1238, %v1238
        %1303 = vrot.lane.b32.xlu0 %v1239, 8
        %v1304 = vpop.permute.xlu0 %1303
        %1305 = vrot.lane.b32.xlu0 %v1240, 8
        %v1306 = vpop.permute.xlu0 %1305
        %1307 = vrot.lane.b32.xlu0 %v1241, 8
        %v1308 = vpop.permute.xlu0 %1307
        %1309 = vrot.lane.b32.xlu0 %v1242, 8
        %v1310 = vpop.permute.xlu0 %1309
        %1311 = vrot.lane.b32.xlu0 %v1243, 8
        %v1312 = vpop.permute.xlu0 %1311
        %1313 = vrot.lane.b32.xlu0 %v1244, 8
        %v1314 = vpop.permute.xlu0 %1313
        %1315 = vrot.lane.b32.xlu0 %v1245, 8
        %v1316 = vpop.permute.xlu0 %1315
        %1317 = vrot.lane.b32.xlu0 %v1246, 8
        %v1318 = vpop.permute.xlu0 %1317
        %1319 = vrot.lane.b32.xlu0 %v1247, 8
        %v1320 = vpop.permute.xlu0 %1319
        %1321 = vrot.lane.b32.xlu0 %v1248, 8
        %v1322 = vpop.permute.xlu0 %1321
        %1323 = vrot.lane.b32.xlu0 %v1249, 8
        %v1324 = vpop.permute.xlu0 %1323
        %1325 = vrot.lane.b32.xlu0 %v1250, 8
        %v1326 = vpop.permute.xlu0 %1325
        %1327 = vrot.lane.b32.xlu0 %v1251, 8
        %v1328 = vpop.permute.xlu0 %1327
        %1329 = vrot.lane.b32.xlu0 %v1252, 8
        %v1330 = vpop.permute.xlu0 %1329
        %1331 = vrot.lane.b32.xlu0 %v1253, 8
        %v1332 = vpop.permute.xlu0 %1331
        %1333 = vrot.lane.b32.xlu0 %v1254, 8
        %v1334 = vpop.permute.xlu0 %1333
        %1335 = vrot.lane.b32.xlu0 %v1255, 8
        %v1336 = vpop.permute.xlu0 %1335
        %1337 = vrot.lane.b32.xlu0 %v1256, 8
        %v1338 = vpop.permute.xlu0 %1337
        %1339 = vrot.lane.b32.xlu0 %v1257, 8
        %v1340 = vpop.permute.xlu0 %1339
        %1341 = vrot.lane.b32.xlu0 %v1258, 8
        %v1342 = vpop.permute.xlu0 %1341
        %1343 = vrot.lane.b32.xlu0 %v1259, 8
        %v1344 = vpop.permute.xlu0 %1343
        %1345 = vrot.lane.b32.xlu0 %v1260, 8
        %v1346 = vpop.permute.xlu0 %1345
        %1347 = vrot.lane.b32.xlu0 %v1261, 8
        %v1348 = vpop.permute.xlu0 %1347
        %1349 = vrot.lane.b32.xlu0 %v1262, 8
        %v1350 = vpop.permute.xlu0 %1349
        %1351 = vrot.lane.b32.xlu0 %v1263, 8
        %v1352 = vpop.permute.xlu0 %1351
        %1353 = vrot.lane.b32.xlu0 %v1264, 8
        %v1354 = vpop.permute.xlu0 %1353
        %1355 = vrot.lane.b32.xlu0 %v1265, 8
        %v1356 = vpop.permute.xlu0 %1355
        %1357 = vrot.lane.b32.xlu0 %v1266, 8
        %v1358 = vpop.permute.xlu0 %1357
        %1359 = vrot.lane.b32.xlu0 %v1267, 8
        %v1360 = vpop.permute.xlu0 %1359
        %1361 = vrot.lane.b32.xlu0 %v1268, 8
        %v1362 = vpop.permute.xlu0 %1361
        %1363 = vrot.lane.b32.xlu0 %v1269, 8
        %v1364 = vpop.permute.xlu0 %1363
        %1365 = vrot.lane.b32.xlu0 %v1270, 8
        %v1366 = vpop.permute.xlu0 %1365
        %1399 = vst.msk [vmem:[%s950] sm:$0xf] %vm853, %v1304
        %1400 = vst.msk [vmem:[%s950 + $0x4] sm:$0xf] %vm853, %v1306
        %1401 = vst.msk [vmem:[%s950 + $0x8] sm:$0xf] %vm853, %v1308
        %1402 = vst.msk [vmem:[%s950 + $0xc] sm:$0xf] %vm853, %v1310
        %1403 = vst.msk [vmem:[%s950 + $0x10] sm:$0xf] %vm853, %v1312
        %1404 = vst.msk [vmem:[%s950 + $0x14] sm:$0xf] %vm853, %v1314
        %1405 = vst.msk [vmem:[%s950 + $0x18] sm:$0xf] %vm853, %v1316
        %1406 = vst.msk [vmem:[%s950 + $0x1c] sm:$0xf] %vm853, %v1318
        %1407 = vst.msk [vmem:[%s950 + $0x20] sm:$0xf] %vm853, %v1320
        %1408 = vst.msk [vmem:[%s950 + $0x24] sm:$0xf] %vm853, %v1322
        %1409 = vst.msk [vmem:[%s950 + $0x28] sm:$0xf] %vm853, %v1324
        %1410 = vst.msk [vmem:[%s950 + $0x2c] sm:$0xf] %vm853, %v1326
        %1411 = vst.msk [vmem:[%s950 + $0x30] sm:$0xf] %vm853, %v1328
        %1412 = vst.msk [vmem:[%s950 + $0x34] sm:$0xf] %vm853, %v1330
        %1413 = vst.msk [vmem:[%s950 + $0x38] sm:$0xf] %vm853, %v1332
        %1414 = vst.msk [vmem:[%s950 + $0x3c] sm:$0xf] %vm853, %v1334
        %1415 = vst.msk [vmem:[%s950 + $0x40] sm:$0xf] %vm853, %v1336
        %1416 = vst.msk [vmem:[%s950 + $0x44] sm:$0xf] %vm853, %v1338
        %1417 = vst.msk [vmem:[%s950 + $0x48] sm:$0xf] %vm853, %v1340
        %1418 = vst.msk [vmem:[%s950 + $0x4c] sm:$0xf] %vm853, %v1342
        %1419 = vst.msk [vmem:[%s950 + $0x50] sm:$0xf] %vm853, %v1344
        %1420 = vst.msk [vmem:[%s950 + $0x54] sm:$0xf] %vm853, %v1346
        %1421 = vst.msk [vmem:[%s950 + $0x58] sm:$0xf] %vm853, %v1348
        %1422 = vst.msk [vmem:[%s950 + $0x5c] sm:$0xf] %vm853, %v1350
        %1423 = vst.msk [vmem:[%s950 + $0x60] sm:$0xf] %vm853, %v1352
        %1424 = vst.msk [vmem:[%s950 + $0x64] sm:$0xf] %vm853, %v1354
        %1425 = vst.msk [vmem:[%s950 + $0x68] sm:$0xf] %vm853, %v1356
        %1426 = vst.msk [vmem:[%s950 + $0x6c] sm:$0xf] %vm853, %v1358
        %1427 = vst.msk [vmem:[%s950 + $0x70] sm:$0xf] %vm853, %v1360
        %1428 = vst.msk [vmem:[%s950 + $0x74] sm:$0xf] %vm853, %v1362
        %1429 = vst.msk [vmem:[%s950 + $0x78] sm:$0xf] %vm853, %v1364
        %1430 = vst.msk [vmem:[%s950 + $0x7c] sm:$0xf] %vm853, %v1366
        %s1431 = scalar_lea.vmem [#allocation2], 48
        %v1432 = vld [vmem:[%s1431] sm:$0xff]
        %v1433 = vld [vmem:[%s1431 + $0x8] sm:$0xff]
        %v1434 = vld [vmem:[%s1431 + $0x18] sm:$0xff]
        %v1435 = vld [vmem:[%s1431 + $0x20] sm:$0xff]
        %v1436 = vld [vmem:[%s1431 + $0x30] sm:$0xff]
        %v1437 = vld [vmem:[%s1431 + $0x38] sm:$0xff]
        %v1438 = vld [vmem:[%s1431 + $0x48] sm:$0xff]
        %v1439 = vld [vmem:[%s1431 + $0x50] sm:$0xff]
        %v1440 = vld [vmem:[%s1431 + $0x60] sm:$0xff]
        %v1441 = vld [vmem:[%s1431 + $0x68] sm:$0xff]
        %v1442 = vld [vmem:[%s1431 + $0x78] sm:$0xff]
        %v1443 = vld [vmem:[%s1431 + $0x80] sm:$0xff]
        %v1444 = vld [vmem:[%s1431 + $0x90] sm:$0xff]
        %v1445 = vld [vmem:[%s1431 + $0x98] sm:$0xff]
        %v1446 = vld [vmem:[%s1431 + $0xa8] sm:$0xff]
        %v1447 = vld [vmem:[%s1431 + $0xb0] sm:$0xff]
        %v1448 = vld [vmem:[%s1431 + $0xc0] sm:$0xff]
        %v1449 = vld [vmem:[%s1431 + $0xc8] sm:$0xff]
        %v1450 = vld [vmem:[%s1431 + $0xd8] sm:$0xff]
        %v1451 = vld [vmem:[%s1431 + $0xe0] sm:$0xff]
        %v1452 = vld [vmem:[%s1431 + $0xf0] sm:$0xff]
        %v1453 = vld [vmem:[%s1431 + $0xf8] sm:$0xff]
        %v1454 = vld [vmem:[%s1431 + $0x108] sm:$0xff]
        %v1455 = vld [vmem:[%s1431 + $0x110] sm:$0xff]
        %v1456 = vld [vmem:[%s1431 + $0x120] sm:$0xff]
        %v1457 = vld [vmem:[%s1431 + $0x128] sm:$0xff]
        %v1458 = vld [vmem:[%s1431 + $0x138] sm:$0xff]
        %v1459 = vld [vmem:[%s1431 + $0x140] sm:$0xff]
        %v1460 = vld [vmem:[%s1431 + $0x150] sm:$0xff]
        %v1461 = vld [vmem:[%s1431 + $0x158] sm:$0xff]
        %v1462 = vld [vmem:[%s1431 + $0x168] sm:$0xff]
        %v1463 = vld [vmem:[%s1431 + $0x170] sm:$0xff]
        %v1464 = vpack.c.bf16 %v1432, %v1432
        %v1465 = vpack.c.bf16 %v1433, %v1433
        %v1466 = vpack.c.bf16 %v1434, %v1434
        %v1467 = vpack.c.bf16 %v1435, %v1435
        %v1468 = vpack.c.bf16 %v1436, %v1436
        %v1469 = vpack.c.bf16 %v1437, %v1437
        %v1470 = vpack.c.bf16 %v1438, %v1438
        %v1471 = vpack.c.bf16 %v1439, %v1439
        %v1472 = vpack.c.bf16 %v1440, %v1440
        %v1473 = vpack.c.bf16 %v1441, %v1441
        %v1474 = vpack.c.bf16 %v1442, %v1442
        %v1475 = vpack.c.bf16 %v1443, %v1443
        %v1476 = vpack.c.bf16 %v1444, %v1444
        %v1477 = vpack.c.bf16 %v1445, %v1445
        %v1478 = vpack.c.bf16 %v1446, %v1446
        %v1479 = vpack.c.bf16 %v1447, %v1447
        %v1480 = vpack.c.bf16 %v1448, %v1448
        %v1481 = vpack.c.bf16 %v1449, %v1449
        %v1482 = vpack.c.bf16 %v1450, %v1450
        %v1483 = vpack.c.bf16 %v1451, %v1451
        %v1484 = vpack.c.bf16 %v1452, %v1452
        %v1485 = vpack.c.bf16 %v1453, %v1453
        %v1486 = vpack.c.bf16 %v1454, %v1454
        %v1487 = vpack.c.bf16 %v1455, %v1455
        %v1488 = vpack.c.bf16 %v1456, %v1456
        %v1489 = vpack.c.bf16 %v1457, %v1457
        %v1490 = vpack.c.bf16 %v1458, %v1458
        %v1491 = vpack.c.bf16 %v1459, %v1459
        %v1492 = vpack.c.bf16 %v1460, %v1460
        %v1493 = vpack.c.bf16 %v1461, %v1461
        %v1494 = vpack.c.bf16 %v1462, %v1462
        %v1495 = vpack.c.bf16 %v1463, %v1463
        %s1496 = scalar_lea.vmem [#allocation3], 256
        %1497 = vst.msk [vmem:[%s1496] sm:$0xf] %vm403, %v1464
        %1498 = vst.msk [vmem:[%s1496 + $0x4] sm:$0xf] %vm403, %v1465
        %1499 = vst.msk [vmem:[%s1496 + $0x8] sm:$0xf] %vm403, %v1466
        %1500 = vst.msk [vmem:[%s1496 + $0xc] sm:$0xf] %vm403, %v1467
        %1501 = vst.msk [vmem:[%s1496 + $0x10] sm:$0xf] %vm403, %v1468
        %1502 = vst.msk [vmem:[%s1496 + $0x14] sm:$0xf] %vm403, %v1469
        %1503 = vst.msk [vmem:[%s1496 + $0x18] sm:$0xf] %vm403, %v1470
        %1504 = vst.msk [vmem:[%s1496 + $0x1c] sm:$0xf] %vm403, %v1471
        %1505 = vst.msk [vmem:[%s1496 + $0x20] sm:$0xf] %vm403, %v1472
        %1506 = vst.msk [vmem:[%s1496 + $0x24] sm:$0xf] %vm403, %v1473
        %1507 = vst.msk [vmem:[%s1496 + $0x28] sm:$0xf] %vm403, %v1474
        %1508 = vst.msk [vmem:[%s1496 + $0x2c] sm:$0xf] %vm403, %v1475
        %1509 = vst.msk [vmem:[%s1496 + $0x30] sm:$0xf] %vm403, %v1476
        %1510 = vst.msk [vmem:[%s1496 + $0x34] sm:$0xf] %vm403, %v1477
        %1511 = vst.msk [vmem:[%s1496 + $0x38] sm:$0xf] %vm403, %v1478
        %1512 = vst.msk [vmem:[%s1496 + $0x3c] sm:$0xf] %vm403, %v1479
        %1513 = vst.msk [vmem:[%s1496 + $0x40] sm:$0xf] %vm403, %v1480
        %1514 = vst.msk [vmem:[%s1496 + $0x44] sm:$0xf] %vm403, %v1481
        %1515 = vst.msk [vmem:[%s1496 + $0x48] sm:$0xf] %vm403, %v1482
        %1516 = vst.msk [vmem:[%s1496 + $0x4c] sm:$0xf] %vm403, %v1483
        %1517 = vst.msk [vmem:[%s1496 + $0x50] sm:$0xf] %vm403, %v1484
        %1518 = vst.msk [vmem:[%s1496 + $0x54] sm:$0xf] %vm403, %v1485
        %1519 = vst.msk [vmem:[%s1496 + $0x58] sm:$0xf] %vm403, %v1486
        %1520 = vst.msk [vmem:[%s1496 + $0x5c] sm:$0xf] %vm403, %v1487
        %1521 = vst.msk [vmem:[%s1496 + $0x60] sm:$0xf] %vm403, %v1488
        %1522 = vst.msk [vmem:[%s1496 + $0x64] sm:$0xf] %vm403, %v1489
        %1523 = vst.msk [vmem:[%s1496 + $0x68] sm:$0xf] %vm403, %v1490
        %1524 = vst.msk [vmem:[%s1496 + $0x6c] sm:$0xf] %vm403, %v1491
        %1525 = vst.msk [vmem:[%s1496 + $0x70] sm:$0xf] %vm403, %v1492
        %1526 = vst.msk [vmem:[%s1496 + $0x74] sm:$0xf] %vm403, %v1493
        %1527 = vst.msk [vmem:[%s1496 + $0x78] sm:$0xf] %vm403, %v1494
        %1528 = vst.msk [vmem:[%s1496 + $0x7c] sm:$0xf] %vm403, %v1495
        %v1529 = vld [vmem:[%s1431 + $0x1] sm:$0xff]
        %v1530 = vld [vmem:[%s1431 + $0x9] sm:$0xff]
        %v1531 = vld [vmem:[%s1431 + $0x19] sm:$0xff]
        %v1532 = vld [vmem:[%s1431 + $0x21] sm:$0xff]
        %v1533 = vld [vmem:[%s1431 + $0x31] sm:$0xff]
        %v1534 = vld [vmem:[%s1431 + $0x39] sm:$0xff]
        %v1535 = vld [vmem:[%s1431 + $0x49] sm:$0xff]
        %v1536 = vld [vmem:[%s1431 + $0x51] sm:$0xff]
        %v1537 = vld [vmem:[%s1431 + $0x61] sm:$0xff]
        %v1538 = vld [vmem:[%s1431 + $0x69] sm:$0xff]
        %v1539 = vld [vmem:[%s1431 + $0x79] sm:$0xff]
        %v1540 = vld [vmem:[%s1431 + $0x81] sm:$0xff]
        %v1541 = vld [vmem:[%s1431 + $0x91] sm:$0xff]
        %v1542 = vld [vmem:[%s1431 + $0x99] sm:$0xff]
        %v1543 = vld [vmem:[%s1431 + $0xa9] sm:$0xff]
        %v1544 = vld [vmem:[%s1431 + $0xb1] sm:$0xff]
        %v1545 = vld [vmem:[%s1431 + $0xc1] sm:$0xff]
        %v1546 = vld [vmem:[%s1431 + $0xc9] sm:$0xff]
        %v1547 = vld [vmem:[%s1431 + $0xd9] sm:$0xff]
        %v1548 = vld [vmem:[%s1431 + $0xe1] sm:$0xff]
        %v1549 = vld [vmem:[%s1431 + $0xf1] sm:$0xff]
        %v1550 = vld [vmem:[%s1431 + $0xf9] sm:$0xff]
        %v1551 = vld [vmem:[%s1431 + $0x109] sm:$0xff]
        %v1552 = vld [vmem:[%s1431 + $0x111] sm:$0xff]
        %v1553 = vld [vmem:[%s1431 + $0x121] sm:$0xff]
        %v1554 = vld [vmem:[%s1431 + $0x129] sm:$0xff]
        %v1555 = vld [vmem:[%s1431 + $0x139] sm:$0xff]
        %v1556 = vld [vmem:[%s1431 + $0x141] sm:$0xff]
        %v1557 = vld [vmem:[%s1431 + $0x151] sm:$0xff]
        %v1558 = vld [vmem:[%s1431 + $0x159] sm:$0xff]
        %v1559 = vld [vmem:[%s1431 + $0x169] sm:$0xff]
        %v1560 = vld [vmem:[%s1431 + $0x171] sm:$0xff]
        %v1561 = vpack.c.bf16 %v1529, %v1529
        %v1562 = vpack.c.bf16 %v1530, %v1530
        %v1563 = vpack.c.bf16 %v1531, %v1531
        %v1564 = vpack.c.bf16 %v1532, %v1532
        %v1565 = vpack.c.bf16 %v1533, %v1533
        %v1566 = vpack.c.bf16 %v1534, %v1534
        %v1567 = vpack.c.bf16 %v1535, %v1535
        %v1568 = vpack.c.bf16 %v1536, %v1536
        %v1569 = vpack.c.bf16 %v1537, %v1537
        %v1570 = vpack.c.bf16 %v1538, %v1538
        %v1571 = vpack.c.bf16 %v1539, %v1539
        %v1572 = vpack.c.bf16 %v1540, %v1540
        %v1573 = vpack.c.bf16 %v1541, %v1541
        %v1574 = vpack.c.bf16 %v1542, %v1542
        %v1575 = vpack.c.bf16 %v1543, %v1543
        %v1576 = vpack.c.bf16 %v1544, %v1544
        %v1577 = vpack.c.bf16 %v1545, %v1545
        %v1578 = vpack.c.bf16 %v1546, %v1546
        %v1579 = vpack.c.bf16 %v1547, %v1547
        %v1580 = vpack.c.bf16 %v1548, %v1548
        %v1581 = vpack.c.bf16 %v1549, %v1549
        %v1582 = vpack.c.bf16 %v1550, %v1550
        %v1583 = vpack.c.bf16 %v1551, %v1551
        %v1584 = vpack.c.bf16 %v1552, %v1552
        %v1585 = vpack.c.bf16 %v1553, %v1553
        %v1586 = vpack.c.bf16 %v1554, %v1554
        %v1587 = vpack.c.bf16 %v1555, %v1555
        %v1588 = vpack.c.bf16 %v1556, %v1556
        %v1589 = vpack.c.bf16 %v1557, %v1557
        %v1590 = vpack.c.bf16 %v1558, %v1558
        %v1591 = vpack.c.bf16 %v1559, %v1559
        %v1592 = vpack.c.bf16 %v1560, %v1560
        %1625 = vrot.lane.b32.xlu0 %v1561, 4
        %v1626 = vpop.permute.xlu0 %1625
        %1627 = vrot.lane.b32.xlu0 %v1562, 4
        %v1628 = vpop.permute.xlu0 %1627
        %1629 = vrot.lane.b32.xlu0 %v1563, 4
        %v1630 = vpop.permute.xlu0 %1629
        %1631 = vrot.lane.b32.xlu0 %v1564, 4
        %v1632 = vpop.permute.xlu0 %1631
        %1633 = vrot.lane.b32.xlu0 %v1565, 4
        %v1634 = vpop.permute.xlu0 %1633
        %1635 = vrot.lane.b32.xlu0 %v1566, 4
        %v1636 = vpop.permute.xlu0 %1635
        %1637 = vrot.lane.b32.xlu0 %v1567, 4
        %v1638 = vpop.permute.xlu0 %1637
        %1639 = vrot.lane.b32.xlu0 %v1568, 4
        %v1640 = vpop.permute.xlu0 %1639
        %1641 = vrot.lane.b32.xlu0 %v1569, 4
        %v1642 = vpop.permute.xlu0 %1641
        %1643 = vrot.lane.b32.xlu0 %v1570, 4
        %v1644 = vpop.permute.xlu0 %1643
        %1645 = vrot.lane.b32.xlu0 %v1571, 4
        %v1646 = vpop.permute.xlu0 %1645
        %1647 = vrot.lane.b32.xlu0 %v1572, 4
        %v1648 = vpop.permute.xlu0 %1647
        %1649 = vrot.lane.b32.xlu0 %v1573, 4
        %v1650 = vpop.permute.xlu0 %1649
        %1651 = vrot.lane.b32.xlu0 %v1574, 4
        %v1652 = vpop.permute.xlu0 %1651
        %1653 = vrot.lane.b32.xlu0 %v1575, 4
        %v1654 = vpop.permute.xlu0 %1653
        %1655 = vrot.lane.b32.xlu0 %v1576, 4
        %v1656 = vpop.permute.xlu0 %1655
        %1657 = vrot.lane.b32.xlu0 %v1577, 4
        %v1658 = vpop.permute.xlu0 %1657
        %1659 = vrot.lane.b32.xlu0 %v1578, 4
        %v1660 = vpop.permute.xlu0 %1659
        %1661 = vrot.lane.b32.xlu0 %v1579, 4
        %v1662 = vpop.permute.xlu0 %1661
        %1663 = vrot.lane.b32.xlu0 %v1580, 4
        %v1664 = vpop.permute.xlu0 %1663
        %1665 = vrot.lane.b32.xlu0 %v1581, 4
        %v1666 = vpop.permute.xlu0 %1665
        %1667 = vrot.lane.b32.xlu0 %v1582, 4
        %v1668 = vpop.permute.xlu0 %1667
        %1669 = vrot.lane.b32.xlu0 %v1583, 4
        %v1670 = vpop.permute.xlu0 %1669
        %1671 = vrot.lane.b32.xlu0 %v1584, 4
        %v1672 = vpop.permute.xlu0 %1671
        %1673 = vrot.lane.b32.xlu0 %v1585, 4
        %v1674 = vpop.permute.xlu0 %1673
        %1675 = vrot.lane.b32.xlu0 %v1586, 4
        %v1676 = vpop.permute.xlu0 %1675
        %1677 = vrot.lane.b32.xlu0 %v1587, 4
        %v1678 = vpop.permute.xlu0 %1677
        %1679 = vrot.lane.b32.xlu0 %v1588, 4
        %v1680 = vpop.permute.xlu0 %1679
        %1681 = vrot.lane.b32.xlu0 %v1589, 4
        %v1682 = vpop.permute.xlu0 %1681
        %1683 = vrot.lane.b32.xlu0 %v1590, 4
        %v1684 = vpop.permute.xlu0 %1683
        %1685 = vrot.lane.b32.xlu0 %v1591, 4
        %v1686 = vpop.permute.xlu0 %1685
        %1687 = vrot.lane.b32.xlu0 %v1592, 4
        %v1688 = vpop.permute.xlu0 %1687
        %1721 = vst.msk [vmem:[%s1496] sm:$0xf] %vm628, %v1626
        %1722 = vst.msk [vmem:[%s1496 + $0x4] sm:$0xf] %vm628, %v1628
        %1723 = vst.msk [vmem:[%s1496 + $0x8] sm:$0xf] %vm628, %v1630
        %1724 = vst.msk [vmem:[%s1496 + $0xc] sm:$0xf] %vm628, %v1632
        %1725 = vst.msk [vmem:[%s1496 + $0x10] sm:$0xf] %vm628, %v1634
        %1726 = vst.msk [vmem:[%s1496 + $0x14] sm:$0xf] %vm628, %v1636
        %1727 = vst.msk [vmem:[%s1496 + $0x18] sm:$0xf] %vm628, %v1638
        %1728 = vst.msk [vmem:[%s1496 + $0x1c] sm:$0xf] %vm628, %v1640
        %1729 = vst.msk [vmem:[%s1496 + $0x20] sm:$0xf] %vm628, %v1642
        %1730 = vst.msk [vmem:[%s1496 + $0x24] sm:$0xf] %vm628, %v1644
        %1731 = vst.msk [vmem:[%s1496 + $0x28] sm:$0xf] %vm628, %v1646
        %1732 = vst.msk [vmem:[%s1496 + $0x2c] sm:$0xf] %vm628, %v1648
        %1733 = vst.msk [vmem:[%s1496 + $0x30] sm:$0xf] %vm628, %v1650
        %1734 = vst.msk [vmem:[%s1496 + $0x34] sm:$0xf] %vm628, %v1652
        %1735 = vst.msk [vmem:[%s1496 + $0x38] sm:$0xf] %vm628, %v1654
        %1736 = vst.msk [vmem:[%s1496 + $0x3c] sm:$0xf] %vm628, %v1656
        %1737 = vst.msk [vmem:[%s1496 + $0x40] sm:$0xf] %vm628, %v1658
        %1738 = vst.msk [vmem:[%s1496 + $0x44] sm:$0xf] %vm628, %v1660
        %1739 = vst.msk [vmem:[%s1496 + $0x48] sm:$0xf] %vm628, %v1662
        %1740 = vst.msk [vmem:[%s1496 + $0x4c] sm:$0xf] %vm628, %v1664
        %1741 = vst.msk [vmem:[%s1496 + $0x50] sm:$0xf] %vm628, %v1666
        %1742 = vst.msk [vmem:[%s1496 + $0x54] sm:$0xf] %vm628, %v1668
        %1743 = vst.msk [vmem:[%s1496 + $0x58] sm:$0xf] %vm628, %v1670
        %1744 = vst.msk [vmem:[%s1496 + $0x5c] sm:$0xf] %vm628, %v1672
        %1745 = vst.msk [vmem:[%s1496 + $0x60] sm:$0xf] %vm628, %v1674
        %1746 = vst.msk [vmem:[%s1496 + $0x64] sm:$0xf] %vm628, %v1676
        %1747 = vst.msk [vmem:[%s1496 + $0x68] sm:$0xf] %vm628, %v1678
        %1748 = vst.msk [vmem:[%s1496 + $0x6c] sm:$0xf] %vm628, %v1680
        %1749 = vst.msk [vmem:[%s1496 + $0x70] sm:$0xf] %vm628, %v1682
        %1750 = vst.msk [vmem:[%s1496 + $0x74] sm:$0xf] %vm628, %v1684
        %1751 = vst.msk [vmem:[%s1496 + $0x78] sm:$0xf] %vm628, %v1686
        %1752 = vst.msk [vmem:[%s1496 + $0x7c] sm:$0xf] %vm628, %v1688
        %v1753 = vld [vmem:[%s1431 + $0x2] sm:$0xff]
        %v1754 = vld [vmem:[%s1431 + $0xa] sm:$0xff]
        %v1755 = vld [vmem:[%s1431 + $0x1a] sm:$0xff]
        %v1756 = vld [vmem:[%s1431 + $0x22] sm:$0xff]
        %v1757 = vld [vmem:[%s1431 + $0x32] sm:$0xff]
        %v1758 = vld [vmem:[%s1431 + $0x3a] sm:$0xff]
        %v1759 = vld [vmem:[%s1431 + $0x4a] sm:$0xff]
        %v1760 = vld [vmem:[%s1431 + $0x52] sm:$0xff]
        %v1761 = vld [vmem:[%s1431 + $0x62] sm:$0xff]
        %v1762 = vld [vmem:[%s1431 + $0x6a] sm:$0xff]
        %v1763 = vld [vmem:[%s1431 + $0x7a] sm:$0xff]
        %v1764 = vld [vmem:[%s1431 + $0x82] sm:$0xff]
        %v1765 = vld [vmem:[%s1431 + $0x92] sm:$0xff]
        %v1766 = vld [vmem:[%s1431 + $0x9a] sm:$0xff]
        %v1767 = vld [vmem:[%s1431 + $0xaa] sm:$0xff]
        %v1768 = vld [vmem:[%s1431 + $0xb2] sm:$0xff]
        %v1769 = vld [vmem:[%s1431 + $0xc2] sm:$0xff]
        %v1770 = vld [vmem:[%s1431 + $0xca] sm:$0xff]
        %v1771 = vld [vmem:[%s1431 + $0xda] sm:$0xff]
        %v1772 = vld [vmem:[%s1431 + $0xe2] sm:$0xff]
        %v1773 = vld [vmem:[%s1431 + $0xf2] sm:$0xff]
        %v1774 = vld [vmem:[%s1431 + $0xfa] sm:$0xff]
        %v1775 = vld [vmem:[%s1431 + $0x10a] sm:$0xff]
        %v1776 = vld [vmem:[%s1431 + $0x112] sm:$0xff]
        %v1777 = vld [vmem:[%s1431 + $0x122] sm:$0xff]
        %v1778 = vld [vmem:[%s1431 + $0x12a] sm:$0xff]
        %v1779 = vld [vmem:[%s1431 + $0x13a] sm:$0xff]
        %v1780 = vld [vmem:[%s1431 + $0x142] sm:$0xff]
        %v1781 = vld [vmem:[%s1431 + $0x152] sm:$0xff]
        %v1782 = vld [vmem:[%s1431 + $0x15a] sm:$0xff]
        %v1783 = vld [vmem:[%s1431 + $0x16a] sm:$0xff]
        %v1784 = vld [vmem:[%s1431 + $0x172] sm:$0xff]
        %v1785 = vpack.c.bf16 %v1753, %v1753
        %v1786 = vpack.c.bf16 %v1754, %v1754
        %v1787 = vpack.c.bf16 %v1755, %v1755
        %v1788 = vpack.c.bf16 %v1756, %v1756
        %v1789 = vpack.c.bf16 %v1757, %v1757
        %v1790 = vpack.c.bf16 %v1758, %v1758
        %v1791 = vpack.c.bf16 %v1759, %v1759
        %v1792 = vpack.c.bf16 %v1760, %v1760
        %v1793 = vpack.c.bf16 %v1761, %v1761
        %v1794 = vpack.c.bf16 %v1762, %v1762
        %v1795 = vpack.c.bf16 %v1763, %v1763
        %v1796 = vpack.c.bf16 %v1764, %v1764
        %v1797 = vpack.c.bf16 %v1765, %v1765
        %v1798 = vpack.c.bf16 %v1766, %v1766
        %v1799 = vpack.c.bf16 %v1767, %v1767
        %v1800 = vpack.c.bf16 %v1768, %v1768
        %v1801 = vpack.c.bf16 %v1769, %v1769
        %v1802 = vpack.c.bf16 %v1770, %v1770
        %v1803 = vpack.c.bf16 %v1771, %v1771
        %v1804 = vpack.c.bf16 %v1772, %v1772
        %v1805 = vpack.c.bf16 %v1773, %v1773
        %v1806 = vpack.c.bf16 %v1774, %v1774
        %v1807 = vpack.c.bf16 %v1775, %v1775
        %v1808 = vpack.c.bf16 %v1776, %v1776
        %v1809 = vpack.c.bf16 %v1777, %v1777
        %v1810 = vpack.c.bf16 %v1778, %v1778
        %v1811 = vpack.c.bf16 %v1779, %v1779
        %v1812 = vpack.c.bf16 %v1780, %v1780
        %v1813 = vpack.c.bf16 %v1781, %v1781
        %v1814 = vpack.c.bf16 %v1782, %v1782
        %v1815 = vpack.c.bf16 %v1783, %v1783
        %v1816 = vpack.c.bf16 %v1784, %v1784
        %1849 = vrot.lane.b32.xlu0 %v1785, 8
        %v1850 = vpop.permute.xlu0 %1849
        %1851 = vrot.lane.b32.xlu0 %v1786, 8
        %v1852 = vpop.permute.xlu0 %1851
        %1853 = vrot.lane.b32.xlu0 %v1787, 8
        %v1854 = vpop.permute.xlu0 %1853
        %1855 = vrot.lane.b32.xlu0 %v1788, 8
        %v1856 = vpop.permute.xlu0 %1855
        %1857 = vrot.lane.b32.xlu0 %v1789, 8
        %v1858 = vpop.permute.xlu0 %1857
        %1859 = vrot.lane.b32.xlu0 %v1790, 8
        %v1860 = vpop.permute.xlu0 %1859
        %1861 = vrot.lane.b32.xlu0 %v1791, 8
        %v1862 = vpop.permute.xlu0 %1861
        %1863 = vrot.lane.b32.xlu0 %v1792, 8
        %v1864 = vpop.permute.xlu0 %1863
        %1865 = vrot.lane.b32.xlu0 %v1793, 8
        %v1866 = vpop.permute.xlu0 %1865
        %1867 = vrot.lane.b32.xlu0 %v1794, 8
        %v1868 = vpop.permute.xlu0 %1867
        %1869 = vrot.lane.b32.xlu0 %v1795, 8
        %v1870 = vpop.permute.xlu0 %1869
        %1871 = vrot.lane.b32.xlu0 %v1796, 8
        %v1872 = vpop.permute.xlu0 %1871
        %1873 = vrot.lane.b32.xlu0 %v1797, 8
        %v1874 = vpop.permute.xlu0 %1873
        %1875 = vrot.lane.b32.xlu0 %v1798, 8
        %v1876 = vpop.permute.xlu0 %1875
        %1877 = vrot.lane.b32.xlu0 %v1799, 8
        %v1878 = vpop.permute.xlu0 %1877
        %1879 = vrot.lane.b32.xlu0 %v1800, 8
        %v1880 = vpop.permute.xlu0 %1879
        %1881 = vrot.lane.b32.xlu0 %v1801, 8
        %v1882 = vpop.permute.xlu0 %1881
        %1883 = vrot.lane.b32.xlu0 %v1802, 8
        %v1884 = vpop.permute.xlu0 %1883
        %1885 = vrot.lane.b32.xlu0 %v1803, 8
        %v1886 = vpop.permute.xlu0 %1885
        %1887 = vrot.lane.b32.xlu0 %v1804, 8
        %v1888 = vpop.permute.xlu0 %1887
        %1889 = vrot.lane.b32.xlu0 %v1805, 8
        %v1890 = vpop.permute.xlu0 %1889
        %1891 = vrot.lane.b32.xlu0 %v1806, 8
        %v1892 = vpop.permute.xlu0 %1891
        %1893 = vrot.lane.b32.xlu0 %v1807, 8
        %v1894 = vpop.permute.xlu0 %1893
        %1895 = vrot.lane.b32.xlu0 %v1808, 8
        %v1896 = vpop.permute.xlu0 %1895
        %1897 = vrot.lane.b32.xlu0 %v1809, 8
        %v1898 = vpop.permute.xlu0 %1897
        %1899 = vrot.lane.b32.xlu0 %v1810, 8
        %v1900 = vpop.permute.xlu0 %1899
        %1901 = vrot.lane.b32.xlu0 %v1811, 8
        %v1902 = vpop.permute.xlu0 %1901
        %1903 = vrot.lane.b32.xlu0 %v1812, 8
        %v1904 = vpop.permute.xlu0 %1903
        %1905 = vrot.lane.b32.xlu0 %v1813, 8
        %v1906 = vpop.permute.xlu0 %1905
        %1907 = vrot.lane.b32.xlu0 %v1814, 8
        %v1908 = vpop.permute.xlu0 %1907
        %1909 = vrot.lane.b32.xlu0 %v1815, 8
        %v1910 = vpop.permute.xlu0 %1909
        %1911 = vrot.lane.b32.xlu0 %v1816, 8
        %v1912 = vpop.permute.xlu0 %1911
        %1945 = vst.msk [vmem:[%s1496] sm:$0xf] %vm853, %v1850
        %1946 = vst.msk [vmem:[%s1496 + $0x4] sm:$0xf] %vm853, %v1852
        %1947 = vst.msk [vmem:[%s1496 + $0x8] sm:$0xf] %vm853, %v1854
        %1948 = vst.msk [vmem:[%s1496 + $0xc] sm:$0xf] %vm853, %v1856
        %1949 = vst.msk [vmem:[%s1496 + $0x10] sm:$0xf] %vm853, %v1858
        %1950 = vst.msk [vmem:[%s1496 + $0x14] sm:$0xf] %vm853, %v1860
        %1951 = vst.msk [vmem:[%s1496 + $0x18] sm:$0xf] %vm853, %v1862
        %1952 = vst.msk [vmem:[%s1496 + $0x1c] sm:$0xf] %vm853, %v1864
        %1953 = vst.msk [vmem:[%s1496 + $0x20] sm:$0xf] %vm853, %v1866
        %1954 = vst.msk [vmem:[%s1496 + $0x24] sm:$0xf] %vm853, %v1868
        %1955 = vst.msk [vmem:[%s1496 + $0x28] sm:$0xf] %vm853, %v1870
        %1956 = vst.msk [vmem:[%s1496 + $0x2c] sm:$0xf] %vm853, %v1872
        %1957 = vst.msk [vmem:[%s1496 + $0x30] sm:$0xf] %vm853, %v1874
        %1958 = vst.msk [vmem:[%s1496 + $0x34] sm:$0xf] %vm853, %v1876
        %1959 = vst.msk [vmem:[%s1496 + $0x38] sm:$0xf] %vm853, %v1878
        %1960 = vst.msk [vmem:[%s1496 + $0x3c] sm:$0xf] %vm853, %v1880
        %1961 = vst.msk [vmem:[%s1496 + $0x40] sm:$0xf] %vm853, %v1882
        %1962 = vst.msk [vmem:[%s1496 + $0x44] sm:$0xf] %vm853, %v1884
        %1963 = vst.msk [vmem:[%s1496 + $0x48] sm:$0xf] %vm853, %v1886
        %1964 = vst.msk [vmem:[%s1496 + $0x4c] sm:$0xf] %vm853, %v1888
        %1965 = vst.msk [vmem:[%s1496 + $0x50] sm:$0xf] %vm853, %v1890
        %1966 = vst.msk [vmem:[%s1496 + $0x54] sm:$0xf] %vm853, %v1892
        %1967 = vst.msk [vmem:[%s1496 + $0x58] sm:$0xf] %vm853, %v1894
        %1968 = vst.msk [vmem:[%s1496 + $0x5c] sm:$0xf] %vm853, %v1896
        %1969 = vst.msk [vmem:[%s1496 + $0x60] sm:$0xf] %vm853, %v1898
        %1970 = vst.msk [vmem:[%s1496 + $0x64] sm:$0xf] %vm853, %v1900
        %1971 = vst.msk [vmem:[%s1496 + $0x68] sm:$0xf] %vm853, %v1902
        %1972 = vst.msk [vmem:[%s1496 + $0x6c] sm:$0xf] %vm853, %v1904
        %1973 = vst.msk [vmem:[%s1496 + $0x70] sm:$0xf] %vm853, %v1906
        %1974 = vst.msk [vmem:[%s1496 + $0x74] sm:$0xf] %vm853, %v1908
        %1975 = vst.msk [vmem:[%s1496 + $0x78] sm:$0xf] %vm853, %v1910
        %1976 = vst.msk [vmem:[%s1496 + $0x7c] sm:$0xf] %vm853, %v1912
        %1977 = vst [vmem:[%s226] sm:$0xff] 0.0
      $region36: #{conv_block_forward.3} parent=31 // pred_fallthru
        _
      %s1978 = smul.u32 %s21, 256
      %s1979 = sshra.s32 %s1978, 3
      %s1980 = sand.u32 %s1978, 7
      %s1981 = smul.addr %s1979, 4
      %s1982 = scalar_lea.vmem [#allocation3], %s1981
      %v1983 = vld [vmem:[%s1982] sm:$0xf]
      %v1984 = vld [vmem:[%s1982 + $0x4] sm:$0xf]
      %v1985 = vld [vmem:[%s1982 + $0x8] sm:$0xf]
      %v1986 = vld [vmem:[%s1982 + $0xc] sm:$0xf]
      %v1987 = vld [vmem:[%s1982 + $0x10] sm:$0xf]
      %v1988 = vld [vmem:[%s1982 + $0x14] sm:$0xf]
      %v1989 = vld [vmem:[%s1982 + $0x18] sm:$0xf]
      %v1990 = vld [vmem:[%s1982 + $0x1c] sm:$0xf]
      %v1991 = vld [vmem:[%s1982 + $0x20] sm:$0xf]
      %v1992 = vld [vmem:[%s1982 + $0x24] sm:$0xf]
      %v1993 = vld [vmem:[%s1982 + $0x28] sm:$0xf]
      %v1994 = vld [vmem:[%s1982 + $0x2c] sm:$0xf]
      %v1995 = vld [vmem:[%s1982 + $0x30] sm:$0xf]
      %v1996 = vld [vmem:[%s1982 + $0x34] sm:$0xf]
      %v1997 = vld [vmem:[%s1982 + $0x38] sm:$0xf]
      %v1998 = vld [vmem:[%s1982 + $0x3c] sm:$0xf]
      %v1999 = vld [vmem:[%s1982 + $0x40] sm:$0xf]
      %v2000 = vld [vmem:[%s1982 + $0x44] sm:$0xf]
      %v2001 = vld [vmem:[%s1982 + $0x48] sm:$0xf]
      %v2002 = vld [vmem:[%s1982 + $0x4c] sm:$0xf]
      %v2003 = vld [vmem:[%s1982 + $0x50] sm:$0xf]
      %v2004 = vld [vmem:[%s1982 + $0x54] sm:$0xf]
      %v2005 = vld [vmem:[%s1982 + $0x58] sm:$0xf]
      %v2006 = vld [vmem:[%s1982 + $0x5c] sm:$0xf]
      %v2007 = vld [vmem:[%s1982 + $0x60] sm:$0xf]
      %v2008 = vld [vmem:[%s1982 + $0x64] sm:$0xf]
      %v2009 = vld [vmem:[%s1982 + $0x68] sm:$0xf]
      %v2010 = vld [vmem:[%s1982 + $0x6c] sm:$0xf]
      %v2011 = vld [vmem:[%s1982 + $0x70] sm:$0xf]
      %v2012 = vld [vmem:[%s1982 + $0x74] sm:$0xf]
      %v2013 = vld [vmem:[%s1982 + $0x78] sm:$0xf]
      %v2014 = vld [vmem:[%s1982 + $0x7c] sm:$0xf]
      %v2015 = vld [vmem:[%s2] sm:$0xf]
      %v2016 = vld [vmem:[%s2 + $0x4] sm:$0x3]
      %s2017 = sadd.s32 %s1979, 32
      %s2018 = smul.addr %s2017, 4
      %s2019 = scalar_lea.vmem [#allocation3], %s2018
      %v2020 = vld [vmem:[%s2019] sm:$0xf]
      %v2021 = vld [vmem:[%s2019 + $0x4] sm:$0xf]
      %v2022 = vld [vmem:[%s2019 + $0x8] sm:$0xf]
      %v2023 = vld [vmem:[%s2019 + $0xc] sm:$0xf]
      %v2024 = vld [vmem:[%s2019 + $0x10] sm:$0xf]
      %v2025 = vld [vmem:[%s2019 + $0x14] sm:$0xf]
      %v2026 = vld [vmem:[%s2019 + $0x18] sm:$0xf]
      %v2027 = vld [vmem:[%s2019 + $0x1c] sm:$0xf]
      %v2028 = vld [vmem:[%s2019 + $0x20] sm:$0xf]
      %v2029 = vld [vmem:[%s2019 + $0x24] sm:$0xf]
      %v2030 = vld [vmem:[%s2019 + $0x28] sm:$0xf]
      %v2031 = vld [vmem:[%s2019 + $0x2c] sm:$0xf]
      %v2032 = vld [vmem:[%s2019 + $0x30] sm:$0xf]
      %v2033 = vld [vmem:[%s2019 + $0x34] sm:$0xf]
      %v2034 = vld [vmem:[%s2019 + $0x38] sm:$0xf]
      %v2035 = vld [vmem:[%s2019 + $0x3c] sm:$0xf]
      %v2036 = vld [vmem:[%s2019 + $0x40] sm:$0xf]
      %v2037 = vld [vmem:[%s2019 + $0x44] sm:$0xf]
      %v2038 = vld [vmem:[%s2019 + $0x48] sm:$0xf]
      %v2039 = vld [vmem:[%s2019 + $0x4c] sm:$0xf]
      %v2040 = vld [vmem:[%s2019 + $0x50] sm:$0xf]
      %v2041 = vld [vmem:[%s2019 + $0x54] sm:$0xf]
      %v2042 = vld [vmem:[%s2019 + $0x58] sm:$0xf]
      %v2043 = vld [vmem:[%s2019 + $0x5c] sm:$0xf]
      %v2044 = vld [vmem:[%s2019 + $0x60] sm:$0xf]
      %v2045 = vld [vmem:[%s2019 + $0x64] sm:$0xf]
      %v2046 = vld [vmem:[%s2019 + $0x68] sm:$0xf]
      %v2047 = vld [vmem:[%s2019 + $0x6c] sm:$0xf]
      %v2048 = vld [vmem:[%s2019 + $0x70] sm:$0xf]
      %v2049 = vld [vmem:[%s2019 + $0x74] sm:$0xf]
      %v2050 = vld [vmem:[%s2019 + $0x78] sm:$0xf]
      %v2051 = vld [vmem:[%s2019 + $0x7c] sm:$0xf]
      %s2052 = scalar_lea.vmem %s2, 8
      %v2053 = vld [vmem:[%s2052] sm:$0xf]
      %v2054 = vld [vmem:[%s2052 + $0x4] sm:$0x3]
      %v2087 = vunpack.c.l.b16 %v2020
      %v2088 = vunpack.c.l.b16 %v2021
      %v2089 = vunpack.c.l.b16 %v2022
      %v2090 = vunpack.c.l.b16 %v2023
      %v2091 = vunpack.c.l.b16 %v2024
      %v2092 = vunpack.c.l.b16 %v2025
      %v2093 = vunpack.c.l.b16 %v2026
      %v2094 = vunpack.c.l.b16 %v2027
      %v2095 = vunpack.c.l.b16 %v2028
      %v2096 = vunpack.c.l.b16 %v2029
      %v2097 = vunpack.c.l.b16 %v2030
      %v2098 = vunpack.c.l.b16 %v2031
      %v2099 = vunpack.c.l.b16 %v2032
      %v2100 = vunpack.c.l.b16 %v2033
      %v2101 = vunpack.c.l.b16 %v2034
      %v2102 = vunpack.c.l.b16 %v2035
      %v2103 = vunpack.c.l.b16 %v2036
      %v2104 = vunpack.c.l.b16 %v2037
      %v2105 = vunpack.c.l.b16 %v2038
      %v2106 = vunpack.c.l.b16 %v2039
      %v2107 = vunpack.c.l.b16 %v2040
      %v2108 = vunpack.c.l.b16 %v2041
      %v2109 = vunpack.c.l.b16 %v2042
      %v2110 = vunpack.c.l.b16 %v2043
      %v2111 = vunpack.c.l.b16 %v2044
      %v2112 = vunpack.c.l.b16 %v2045
      %v2113 = vunpack.c.l.b16 %v2046
      %v2114 = vunpack.c.l.b16 %v2047
      %v2115 = vunpack.c.l.b16 %v2048
      %v2116 = vunpack.c.l.b16 %v2049
      %v2117 = vunpack.c.l.b16 %v2050
      %v2118 = vunpack.c.l.b16 %v2051
      %v2119 = vpack.c.b16 %v2088, %v2087
      %v2120 = vpack.c.b16 %v2090, %v2089
      %v2121 = vpack.c.b16 %v2092, %v2091
      %v2122 = vpack.c.b16 %v2094, %v2093
      %v2123 = vpack.c.b16 %v2096, %v2095
      %v2124 = vpack.c.b16 %v2098, %v2097
      %v2125 = vpack.c.b16 %v2100, %v2099
      %v2126 = vpack.c.b16 %v2102, %v2101
      %v2127 = vpack.c.b16 %v2104, %v2103
      %v2128 = vpack.c.b16 %v2106, %v2105
      %v2129 = vpack.c.b16 %v2108, %v2107
      %v2130 = vpack.c.b16 %v2110, %v2109
      %v2131 = vpack.c.b16 %v2112, %v2111
      %v2132 = vpack.c.b16 %v2114, %v2113
      %v2133 = vpack.c.b16 %v2116, %v2115
      %v2134 = vpack.c.b16 %v2118, %v2117
      %v2137 = vunpack.c.l.b16 %v2053
      %v2138 = vunpack.c.l.b16 %v2054
      %v2139 = vpack.c.b16 %v2138, %v2137
      %vm2140 = vcmask 97280
      %v2142 = vsel %vm2140, %v2119, 0
      %v2145 = vsel %vm2140, %v2120, 0
      %v2148 = vsel %vm2140, %v2121, 0
      %v2151 = vsel %vm2140, %v2122, 0
      %v2154 = vsel %vm2140, %v2123, 0
      %v2157 = vsel %vm2140, %v2124, 0
      %v2160 = vsel %vm2140, %v2125, 0
      %v2163 = vsel %vm2140, %v2126, 0
      %v2166 = vsel %vm2140, %v2127, 0
      %v2169 = vsel %vm2140, %v2128, 0
      %v2172 = vsel %vm2140, %v2129, 0
      %v2175 = vsel %vm2140, %v2130, 0
      %v2178 = vsel %vm2140, %v2131, 0
      %v2181 = vsel %vm2140, %v2132, 0
      %v2184 = vsel %vm2140, %v2133, 0
      %v2187 = vsel %vm2140, %v2134, 0
      %vm2189 = vcmask 1045504
      %v2191 = vsel %vm2189, %v2139, 0
      %2193 = vmatpush.bf16.msra.mxu0 0
      %2194 = vmatpush.bf16.msra.mxu0 0
      %2195 = vmatpush.bf16.msra.mxu0 0
      %2196 = vmatpush.bf16.msra.mxu0 0
      %2197 = vmatpush.bf16.msra.mxu0 0
      %2198 = vmatpush.bf16.msra.mxu0 0
      %2199 = vmatpush.bf16.msra.mxu0 0
      %2200 = vmatpush.bf16.msra.mxu0 %v2191
      %2201 = vmatmul.bf16.gmra.mxu0 %v2142
      %v2202 = vpop.f32.mrf.mxu0
      %v2203 = vadd.f32 0.0, %v2202
      %v2204 = vpop.f32.mrf.mxu0
      %v2205 = vadd.f32 0.0, %v2204
      %2206 = vmatmul.bf16.gmra.mxu0 %v2145
      %v2207 = vpop.f32.mrf.mxu0
      %v2208 = vadd.f32 0.0, %v2207
      %v2209 = vpop.f32.mrf.mxu0
      %v2210 = vadd.f32 0.0, %v2209
      %2211 = vmatmul.bf16.gmra.mxu0 %v2148
      %v2212 = vpop.f32.mrf.mxu0
      %v2213 = vadd.f32 0.0, %v2212
      %v2214 = vpop.f32.mrf.mxu0
      %v2215 = vadd.f32 0.0, %v2214
      %2216 = vmatmul.bf16.gmra.mxu0 %v2151
      %v2217 = vpop.f32.mrf.mxu0
      %v2218 = vadd.f32 0.0, %v2217
      %v2219 = vpop.f32.mrf.mxu0
      %v2220 = vadd.f32 0.0, %v2219
      %2221 = vmatmul.bf16.gmra.mxu0 %v2154
      %v2222 = vpop.f32.mrf.mxu0
      %v2223 = vadd.f32 0.0, %v2222
      %v2224 = vpop.f32.mrf.mxu0
      %v2225 = vadd.f32 0.0, %v2224
      %2226 = vmatmul.bf16.gmra.mxu0 %v2157
      %v2227 = vpop.f32.mrf.mxu0
      %v2228 = vadd.f32 0.0, %v2227
      %v2229 = vpop.f32.mrf.mxu0
      %v2230 = vadd.f32 0.0, %v2229
      %2231 = vmatmul.bf16.gmra.mxu0 %v2160
      %v2232 = vpop.f32.mrf.mxu0
      %v2233 = vadd.f32 0.0, %v2232
      %v2234 = vpop.f32.mrf.mxu0
      %v2235 = vadd.f32 0.0, %v2234
      %2236 = vmatmul.bf16.gmra.mxu0 %v2163
      %v2237 = vpop.f32.mrf.mxu0
      %v2238 = vadd.f32 0.0, %v2237
      %v2239 = vpop.f32.mrf.mxu0
      %v2240 = vadd.f32 0.0, %v2239
      %2241 = vmatmul.bf16.gmra.mxu0 %v2166
      %v2242 = vpop.f32.mrf.mxu0
      %v2243 = vadd.f32 0.0, %v2242
      %v2244 = vpop.f32.mrf.mxu0
      %v2245 = vadd.f32 0.0, %v2244
      %2246 = vmatmul.bf16.gmra.mxu0 %v2169
      %v2247 = vpop.f32.mrf.mxu0
      %v2248 = vadd.f32 0.0, %v2247
      %v2249 = vpop.f32.mrf.mxu0
      %v2250 = vadd.f32 0.0, %v2249
      %2251 = vmatmul.bf16.gmra.mxu0 %v2172
      %v2252 = vpop.f32.mrf.mxu0
      %v2253 = vadd.f32 0.0, %v2252
      %v2254 = vpop.f32.mrf.mxu0
      %v2255 = vadd.f32 0.0, %v2254
      %2256 = vmatmul.bf16.gmra.mxu0 %v2175
      %v2257 = vpop.f32.mrf.mxu0
      %v2258 = vadd.f32 0.0, %v2257
      %v2259 = vpop.f32.mrf.mxu0
      %v2260 = vadd.f32 0.0, %v2259
      %2261 = vmatmul.bf16.gmra.mxu0 %v2178
      %v2262 = vpop.f32.mrf.mxu0
      %v2263 = vadd.f32 0.0, %v2262
      %v2264 = vpop.f32.mrf.mxu0
      %v2265 = vadd.f32 0.0, %v2264
      %2266 = vmatmul.bf16.gmra.mxu0 %v2181
      %v2267 = vpop.f32.mrf.mxu0
      %v2268 = vadd.f32 0.0, %v2267
      %v2269 = vpop.f32.mrf.mxu0
      %v2270 = vadd.f32 0.0, %v2269
      %2271 = vmatmul.bf16.gmra.mxu0 %v2184
      %v2272 = vpop.f32.mrf.mxu0
      %v2273 = vadd.f32 0.0, %v2272
      %v2274 = vpop.f32.mrf.mxu0
      %v2275 = vadd.f32 0.0, %v2274
      %2276 = vmatmul.bf16.gmra.mxu0 %v2187
      %v2277 = vpop.f32.mrf.mxu0
      %v2278 = vadd.f32 0.0, %v2277
      %v2279 = vpop.f32.mrf.mxu0
      %v2280 = vadd.f32 0.0, %v2279
      %2281 = vdwg.mxu0
      %v2314 = vunpack.c.l.b16 %v1983
      %v2315 = vunpack.c.l.b16 %v1984
      %v2316 = vunpack.c.l.b16 %v1985
      %v2317 = vunpack.c.l.b16 %v1986
      %v2318 = vunpack.c.l.b16 %v1987
      %v2319 = vunpack.c.l.b16 %v1988
      %v2320 = vunpack.c.l.b16 %v1989
      %v2321 = vunpack.c.l.b16 %v1990
      %v2322 = vunpack.c.l.b16 %v1991
      %v2323 = vunpack.c.l.b16 %v1992
      %v2324 = vunpack.c.l.b16 %v1993
      %v2325 = vunpack.c.l.b16 %v1994
      %v2326 = vunpack.c.l.b16 %v1995
      %v2327 = vunpack.c.l.b16 %v1996
      %v2328 = vunpack.c.l.b16 %v1997
      %v2329 = vunpack.c.l.b16 %v1998
      %v2330 = vunpack.c.l.b16 %v1999
      %v2331 = vunpack.c.l.b16 %v2000
      %v2332 = vunpack.c.l.b16 %v2001
      %v2333 = vunpack.c.l.b16 %v2002
      %v2334 = vunpack.c.l.b16 %v2003
      %v2335 = vunpack.c.l.b16 %v2004
      %v2336 = vunpack.c.l.b16 %v2005
      %v2337 = vunpack.c.l.b16 %v2006
      %v2338 = vunpack.c.l.b16 %v2007
      %v2339 = vunpack.c.l.b16 %v2008
      %v2340 = vunpack.c.l.b16 %v2009
      %v2341 = vunpack.c.l.b16 %v2010
      %v2342 = vunpack.c.l.b16 %v2011
      %v2343 = vunpack.c.l.b16 %v2012
      %v2344 = vunpack.c.l.b16 %v2013
      %v2345 = vunpack.c.l.b16 %v2014
      %v2346 = vpack.c.b16 %v2315, %v2314
      %v2347 = vpack.c.b16 %v2317, %v2316
      %v2348 = vpack.c.b16 %v2319, %v2318
      %v2349 = vpack.c.b16 %v2321, %v2320
      %v2350 = vpack.c.b16 %v2323, %v2322
      %v2351 = vpack.c.b16 %v2325, %v2324
      %v2352 = vpack.c.b16 %v2327, %v2326
      %v2353 = vpack.c.b16 %v2329, %v2328
      %v2354 = vpack.c.b16 %v2331, %v2330
      %v2355 = vpack.c.b16 %v2333, %v2332
      %v2356 = vpack.c.b16 %v2335, %v2334
      %v2357 = vpack.c.b16 %v2337, %v2336
      %v2358 = vpack.c.b16 %v2339, %v2338
      %v2359 = vpack.c.b16 %v2341, %v2340
      %v2360 = vpack.c.b16 %v2343, %v2342
      %v2361 = vpack.c.b16 %v2345, %v2344
      %v2364 = vunpack.c.l.b16 %v2015
      %v2365 = vunpack.c.l.b16 %v2016
      %v2366 = vpack.c.b16 %v2365, %v2364
      %v2368 = vsel %vm2140, %v2346, 0
      %v2371 = vsel %vm2140, %v2347, 0
      %v2374 = vsel %vm2140, %v2348, 0
      %v2377 = vsel %vm2140, %v2349, 0
      %v2380 = vsel %vm2140, %v2350, 0
      %v2383 = vsel %vm2140, %v2351, 0
      %v2386 = vsel %vm2140, %v2352, 0
      %v2389 = vsel %vm2140, %v2353, 0
      %v2392 = vsel %vm2140, %v2354, 0
      %v2395 = vsel %vm2140, %v2355, 0
      %v2398 = vsel %vm2140, %v2356, 0
      %v2401 = vsel %vm2140, %v2357, 0
      %v2404 = vsel %vm2140, %v2358, 0
      %v2407 = vsel %vm2140, %v2359, 0
      %v2410 = vsel %vm2140, %v2360, 0
      %v2413 = vsel %vm2140, %v2361, 0
      %v2416 = vsel %vm2189, %v2366, 0
      %2418 = vmatpush.bf16.msra.mxu0 0
      %2419 = vmatpush.bf16.msra.mxu0 0
      %2420 = vmatpush.bf16.msra.mxu0 0
      %2421 = vmatpush.bf16.msra.mxu0 0
      %2422 = vmatpush.bf16.msra.mxu0 0
      %2423 = vmatpush.bf16.msra.mxu0 0
      %2424 = vmatpush.bf16.msra.mxu0 0
      %2425 = vmatpush.bf16.msra.mxu0 %v2416
      %2426 = vmatmul.bf16.gmra.mxu0 %v2368
      %v2427 = vpop.f32.mrf.mxu0
      %v2428 = vadd.f32 %v2203, %v2427
      %v2429 = vpop.f32.mrf.mxu0
      %v2430 = vadd.f32 %v2205, %v2429
      %2431 = vmatmul.bf16.gmra.mxu0 %v2371
      %v2432 = vpop.f32.mrf.mxu0
      %v2433 = vadd.f32 %v2208, %v2432
      %v2434 = vpop.f32.mrf.mxu0
      %v2435 = vadd.f32 %v2210, %v2434
      %2436 = vmatmul.bf16.gmra.mxu0 %v2374
      %v2437 = vpop.f32.mrf.mxu0
      %v2438 = vadd.f32 %v2213, %v2437
      %v2439 = vpop.f32.mrf.mxu0
      %v2440 = vadd.f32 %v2215, %v2439
      %2441 = vmatmul.bf16.gmra.mxu0 %v2377
      %v2442 = vpop.f32.mrf.mxu0
      %v2443 = vadd.f32 %v2218, %v2442
      %v2444 = vpop.f32.mrf.mxu0
      %v2445 = vadd.f32 %v2220, %v2444
      %2446 = vmatmul.bf16.gmra.mxu0 %v2380
      %v2447 = vpop.f32.mrf.mxu0
      %v2448 = vadd.f32 %v2223, %v2447
      %v2449 = vpop.f32.mrf.mxu0
      %v2450 = vadd.f32 %v2225, %v2449
      %2451 = vmatmul.bf16.gmra.mxu0 %v2383
      %v2452 = vpop.f32.mrf.mxu0
      %v2453 = vadd.f32 %v2228, %v2452
      %v2454 = vpop.f32.mrf.mxu0
      %v2455 = vadd.f32 %v2230, %v2454
      %2456 = vmatmul.bf16.gmra.mxu0 %v2386
      %v2457 = vpop.f32.mrf.mxu0
      %v2458 = vadd.f32 %v2233, %v2457
      %v2459 = vpop.f32.mrf.mxu0
      %v2460 = vadd.f32 %v2235, %v2459
      %2461 = vmatmul.bf16.gmra.mxu0 %v2389
      %v2462 = vpop.f32.mrf.mxu0
      %v2463 = vadd.f32 %v2238, %v2462
      %v2464 = vpop.f32.mrf.mxu0
      %v2465 = vadd.f32 %v2240, %v2464
      %2466 = vmatmul.bf16.gmra.mxu0 %v2392
      %v2467 = vpop.f32.mrf.mxu0
      %v2468 = vadd.f32 %v2243, %v2467
      %v2469 = vpop.f32.mrf.mxu0
      %v2470 = vadd.f32 %v2245, %v2469
      %2471 = vmatmul.bf16.gmra.mxu0 %v2395
      %v2472 = vpop.f32.mrf.mxu0
      %v2473 = vadd.f32 %v2248, %v2472
      %v2474 = vpop.f32.mrf.mxu0
      %v2475 = vadd.f32 %v2250, %v2474
      %2476 = vmatmul.bf16.gmra.mxu0 %v2398
      %v2477 = vpop.f32.mrf.mxu0
      %v2478 = vadd.f32 %v2253, %v2477
      %v2479 = vpop.f32.mrf.mxu0
      %v2480 = vadd.f32 %v2255, %v2479
      %2481 = vmatmul.bf16.gmra.mxu0 %v2401
      %v2482 = vpop.f32.mrf.mxu0
      %v2483 = vadd.f32 %v2258, %v2482
      %v2484 = vpop.f32.mrf.mxu0
      %v2485 = vadd.f32 %v2260, %v2484
      %2486 = vmatmul.bf16.gmra.mxu0 %v2404
      %v2487 = vpop.f32.mrf.mxu0
      %v2488 = vadd.f32 %v2263, %v2487
      %v2489 = vpop.f32.mrf.mxu0
      %v2490 = vadd.f32 %v2265, %v2489
      %2491 = vmatmul.bf16.gmra.mxu0 %v2407
      %v2492 = vpop.f32.mrf.mxu0
      %v2493 = vadd.f32 %v2268, %v2492
      %v2494 = vpop.f32.mrf.mxu0
      %v2495 = vadd.f32 %v2270, %v2494
      %2496 = vmatmul.bf16.gmra.mxu0 %v2410
      %v2497 = vpop.f32.mrf.mxu0
      %v2498 = vadd.f32 %v2273, %v2497
      %v2499 = vpop.f32.mrf.mxu0
      %v2500 = vadd.f32 %v2275, %v2499
      %2501 = vmatmul.bf16.gmra.mxu0 %v2413
      %v2502 = vpop.f32.mrf.mxu0
      %v2503 = vadd.f32 %v2278, %v2502
      %v2504 = vpop.f32.mrf.mxu0
      %v2505 = vadd.f32 %v2280, %v2504
      %2506 = vdwg.mxu0
      %s2507 = sadd.s32 %s1979, 64
      %s2508 = smul.addr %s2507, 4
      %s2509 = scalar_lea.vmem [#allocation3], %s2508
      %v2510 = vld [vmem:[%s2509] sm:$0xf]
      %v2511 = vld [vmem:[%s2509 + $0x4] sm:$0xf]
      %v2512 = vld [vmem:[%s2509 + $0x8] sm:$0xf]
      %v2513 = vld [vmem:[%s2509 + $0xc] sm:$0xf]
      %v2514 = vld [vmem:[%s2509 + $0x10] sm:$0xf]
      %v2515 = vld [vmem:[%s2509 + $0x14] sm:$0xf]
      %v2516 = vld [vmem:[%s2509 + $0x18] sm:$0xf]
      %v2517 = vld [vmem:[%s2509 + $0x1c] sm:$0xf]
      %v2518 = vld [vmem:[%s2509 + $0x20] sm:$0xf]
      %v2519 = vld [vmem:[%s2509 + $0x24] sm:$0xf]
      %v2520 = vld [vmem:[%s2509 + $0x28] sm:$0xf]
      %v2521 = vld [vmem:[%s2509 + $0x2c] sm:$0xf]
      %v2522 = vld [vmem:[%s2509 + $0x30] sm:$0xf]
      %v2523 = vld [vmem:[%s2509 + $0x34] sm:$0xf]
      %v2524 = vld [vmem:[%s2509 + $0x38] sm:$0xf]
      %v2525 = vld [vmem:[%s2509 + $0x3c] sm:$0xf]
      %v2526 = vld [vmem:[%s2509 + $0x40] sm:$0xf]
      %v2527 = vld [vmem:[%s2509 + $0x44] sm:$0xf]
      %v2528 = vld [vmem:[%s2509 + $0x48] sm:$0xf]
      %v2529 = vld [vmem:[%s2509 + $0x4c] sm:$0xf]
      %v2530 = vld [vmem:[%s2509 + $0x50] sm:$0xf]
      %v2531 = vld [vmem:[%s2509 + $0x54] sm:$0xf]
      %v2532 = vld [vmem:[%s2509 + $0x58] sm:$0xf]
      %v2533 = vld [vmem:[%s2509 + $0x5c] sm:$0xf]
      %v2534 = vld [vmem:[%s2509 + $0x60] sm:$0xf]
      %v2535 = vld [vmem:[%s2509 + $0x64] sm:$0xf]
      %v2536 = vld [vmem:[%s2509 + $0x68] sm:$0xf]
      %v2537 = vld [vmem:[%s2509 + $0x6c] sm:$0xf]
      %v2538 = vld [vmem:[%s2509 + $0x70] sm:$0xf]
      %v2539 = vld [vmem:[%s2509 + $0x74] sm:$0xf]
      %v2540 = vld [vmem:[%s2509 + $0x78] sm:$0xf]
      %v2541 = vld [vmem:[%s2509 + $0x7c] sm:$0xf]
      %s2542 = scalar_lea.vmem %s2, 16
      %v2543 = vld [vmem:[%s2542] sm:$0xf]
      %v2544 = vld [vmem:[%s2542 + $0x4] sm:$0x3]
      %v2577 = vunpack.c.l.b16 %v2510
      %v2578 = vunpack.c.l.b16 %v2511
      %v2579 = vunpack.c.l.b16 %v2512
      %v2580 = vunpack.c.l.b16 %v2513
      %v2581 = vunpack.c.l.b16 %v2514
      %v2582 = vunpack.c.l.b16 %v2515
      %v2583 = vunpack.c.l.b16 %v2516
      %v2584 = vunpack.c.l.b16 %v2517
      %v2585 = vunpack.c.l.b16 %v2518
      %v2586 = vunpack.c.l.b16 %v2519
      %v2587 = vunpack.c.l.b16 %v2520
      %v2588 = vunpack.c.l.b16 %v2521
      %v2589 = vunpack.c.l.b16 %v2522
      %v2590 = vunpack.c.l.b16 %v2523
      %v2591 = vunpack.c.l.b16 %v2524
      %v2592 = vunpack.c.l.b16 %v2525
      %v2593 = vunpack.c.l.b16 %v2526
      %v2594 = vunpack.c.l.b16 %v2527
      %v2595 = vunpack.c.l.b16 %v2528
      %v2596 = vunpack.c.l.b16 %v2529
      %v2597 = vunpack.c.l.b16 %v2530
      %v2598 = vunpack.c.l.b16 %v2531
      %v2599 = vunpack.c.l.b16 %v2532
      %v2600 = vunpack.c.l.b16 %v2533
      %v2601 = vunpack.c.l.b16 %v2534
      %v2602 = vunpack.c.l.b16 %v2535
      %v2603 = vunpack.c.l.b16 %v2536
      %v2604 = vunpack.c.l.b16 %v2537
      %v2605 = vunpack.c.l.b16 %v2538
      %v2606 = vunpack.c.l.b16 %v2539
      %v2607 = vunpack.c.l.b16 %v2540
      %v2608 = vunpack.c.l.b16 %v2541
      %v2609 = vpack.c.b16 %v2578, %v2577
      %v2610 = vpack.c.b16 %v2580, %v2579
      %v2611 = vpack.c.b16 %v2582, %v2581
      %v2612 = vpack.c.b16 %v2584, %v2583
      %v2613 = vpack.c.b16 %v2586, %v2585
      %v2614 = vpack.c.b16 %v2588, %v2587
      %v2615 = vpack.c.b16 %v2590, %v2589
      %v2616 = vpack.c.b16 %v2592, %v2591
      %v2617 = vpack.c.b16 %v2594, %v2593
      %v2618 = vpack.c.b16 %v2596, %v2595
      %v2619 = vpack.c.b16 %v2598, %v2597
      %v2620 = vpack.c.b16 %v2600, %v2599
      %v2621 = vpack.c.b16 %v2602, %v2601
      %v2622 = vpack.c.b16 %v2604, %v2603
      %v2623 = vpack.c.b16 %v2606, %v2605
      %v2624 = vpack.c.b16 %v2608, %v2607
      %v2627 = vunpack.c.l.b16 %v2543
      %v2628 = vunpack.c.l.b16 %v2544
      %v2629 = vpack.c.b16 %v2628, %v2627
      %v2631 = vsel %vm2140, %v2609, 0
      %v2634 = vsel %vm2140, %v2610, 0
      %v2637 = vsel %vm2140, %v2611, 0
      %v2640 = vsel %vm2140, %v2612, 0
      %v2643 = vsel %vm2140, %v2613, 0
      %v2646 = vsel %vm2140, %v2614, 0
      %v2649 = vsel %vm2140, %v2615, 0
      %v2652 = vsel %vm2140, %v2616, 0
      %v2655 = vsel %vm2140, %v2617, 0
      %v2658 = vsel %vm2140, %v2618, 0
      %v2661 = vsel %vm2140, %v2619, 0
      %v2664 = vsel %vm2140, %v2620, 0
      %v2667 = vsel %vm2140, %v2621, 0
      %v2670 = vsel %vm2140, %v2622, 0
      %v2673 = vsel %vm2140, %v2623, 0
      %v2676 = vsel %vm2140, %v2624, 0
      %v2679 = vsel %vm2189, %v2629, 0
      %2681 = vmatpush.bf16.msra.mxu0 0
      %2682 = vmatpush.bf16.msra.mxu0 0
      %2683 = vmatpush.bf16.msra.mxu0 0
      %2684 = vmatpush.bf16.msra.mxu0 0
      %2685 = vmatpush.bf16.msra.mxu0 0
      %2686 = vmatpush.bf16.msra.mxu0 0
      %2687 = vmatpush.bf16.msra.mxu0 0
      %2688 = vmatpush.bf16.msra.mxu0 %v2679
      %2689 = vmatmul.bf16.gmra.mxu0 %v2631
      %v2690 = vpop.f32.mrf.mxu0
      %v2691 = vadd.f32 0.0, %v2690
      %v2692 = vpop.f32.mrf.mxu0
      %v2693 = vadd.f32 0.0, %v2692
      %2694 = vmatmul.bf16.gmra.mxu0 %v2634
      %v2695 = vpop.f32.mrf.mxu0
      %v2696 = vadd.f32 0.0, %v2695
      %v2697 = vpop.f32.mrf.mxu0
      %v2698 = vadd.f32 0.0, %v2697
      %2699 = vmatmul.bf16.gmra.mxu0 %v2637
      %v2700 = vpop.f32.mrf.mxu0
      %v2701 = vadd.f32 0.0, %v2700
      %v2702 = vpop.f32.mrf.mxu0
      %v2703 = vadd.f32 0.0, %v2702
      %2704 = vmatmul.bf16.gmra.mxu0 %v2640
      %v2705 = vpop.f32.mrf.mxu0
      %v2706 = vadd.f32 0.0, %v2705
      %v2707 = vpop.f32.mrf.mxu0
      %v2708 = vadd.f32 0.0, %v2707
      %2709 = vmatmul.bf16.gmra.mxu0 %v2643
      %v2710 = vpop.f32.mrf.mxu0
      %v2711 = vadd.f32 0.0, %v2710
      %v2712 = vpop.f32.mrf.mxu0
      %v2713 = vadd.f32 0.0, %v2712
      %2714 = vmatmul.bf16.gmra.mxu0 %v2646
      %v2715 = vpop.f32.mrf.mxu0
      %v2716 = vadd.f32 0.0, %v2715
      %v2717 = vpop.f32.mrf.mxu0
      %v2718 = vadd.f32 0.0, %v2717
      %2719 = vmatmul.bf16.gmra.mxu0 %v2649
      %v2720 = vpop.f32.mrf.mxu0
      %v2721 = vadd.f32 0.0, %v2720
      %v2722 = vpop.f32.mrf.mxu0
      %v2723 = vadd.f32 0.0, %v2722
      %2724 = vmatmul.bf16.gmra.mxu0 %v2652
      %v2725 = vpop.f32.mrf.mxu0
      %v2726 = vadd.f32 0.0, %v2725
      %v2727 = vpop.f32.mrf.mxu0
      %v2728 = vadd.f32 0.0, %v2727
      %2729 = vmatmul.bf16.gmra.mxu0 %v2655
      %v2730 = vpop.f32.mrf.mxu0
      %v2731 = vadd.f32 0.0, %v2730
      %v2732 = vpop.f32.mrf.mxu0
      %v2733 = vadd.f32 0.0, %v2732
      %2734 = vmatmul.bf16.gmra.mxu0 %v2658
      %v2735 = vpop.f32.mrf.mxu0
      %v2736 = vadd.f32 0.0, %v2735
      %v2737 = vpop.f32.mrf.mxu0
      %v2738 = vadd.f32 0.0, %v2737
      %2739 = vmatmul.bf16.gmra.mxu0 %v2661
      %v2740 = vpop.f32.mrf.mxu0
      %v2741 = vadd.f32 0.0, %v2740
      %v2742 = vpop.f32.mrf.mxu0
      %v2743 = vadd.f32 0.0, %v2742
      %2744 = vmatmul.bf16.gmra.mxu0 %v2664
      %v2745 = vpop.f32.mrf.mxu0
      %v2746 = vadd.f32 0.0, %v2745
      %v2747 = vpop.f32.mrf.mxu0
      %v2748 = vadd.f32 0.0, %v2747
      %2749 = vmatmul.bf16.gmra.mxu0 %v2667
      %v2750 = vpop.f32.mrf.mxu0
      %v2751 = vadd.f32 0.0, %v2750
      %v2752 = vpop.f32.mrf.mxu0
      %v2753 = vadd.f32 0.0, %v2752
      %2754 = vmatmul.bf16.gmra.mxu0 %v2670
      %v2755 = vpop.f32.mrf.mxu0
      %v2756 = vadd.f32 0.0, %v2755
      %v2757 = vpop.f32.mrf.mxu0
      %v2758 = vadd.f32 0.0, %v2757
      %2759 = vmatmul.bf16.gmra.mxu0 %v2673
      %v2760 = vpop.f32.mrf.mxu0
      %v2761 = vadd.f32 0.0, %v2760
      %v2762 = vpop.f32.mrf.mxu0
      %v2763 = vadd.f32 0.0, %v2762
      %2764 = vmatmul.bf16.gmra.mxu0 %v2676
      %v2765 = vpop.f32.mrf.mxu0
      %v2766 = vadd.f32 0.0, %v2765
      %v2767 = vpop.f32.mrf.mxu0
      %v2768 = vadd.f32 0.0, %v2767
      %2769 = vdwg.mxu0
      %v2770 = vadd.f32 %v2428, %v2691
      %v2771 = vadd.f32 %v2430, %v2693
      %v2772 = vadd.f32 %v2433, %v2696
      %v2773 = vadd.f32 %v2435, %v2698
      %v2774 = vadd.f32 %v2438, %v2701
      %v2775 = vadd.f32 %v2440, %v2703
      %v2776 = vadd.f32 %v2443, %v2706
      %v2777 = vadd.f32 %v2445, %v2708
      %v2778 = vadd.f32 %v2448, %v2711
      %v2779 = vadd.f32 %v2450, %v2713
      %v2780 = vadd.f32 %v2453, %v2716
      %v2781 = vadd.f32 %v2455, %v2718
      %v2782 = vadd.f32 %v2458, %v2721
      %v2783 = vadd.f32 %v2460, %v2723
      %v2784 = vadd.f32 %v2463, %v2726
      %v2785 = vadd.f32 %v2465, %v2728
      %v2786 = vadd.f32 %v2468, %v2731
      %v2787 = vadd.f32 %v2470, %v2733
      %v2788 = vadd.f32 %v2473, %v2736
      %v2789 = vadd.f32 %v2475, %v2738
      %v2790 = vadd.f32 %v2478, %v2741
      %v2791 = vadd.f32 %v2480, %v2743
      %v2792 = vadd.f32 %v2483, %v2746
      %v2793 = vadd.f32 %v2485, %v2748
      %v2794 = vadd.f32 %v2488, %v2751
      %v2795 = vadd.f32 %v2490, %v2753
      %v2796 = vadd.f32 %v2493, %v2756
      %v2797 = vadd.f32 %v2495, %v2758
      %v2798 = vadd.f32 %v2498, %v2761
      %v2799 = vadd.f32 %v2500, %v2763
      %v2800 = vadd.f32 %v2503, %v2766
      %v2801 = vadd.f32 %v2505, %v2768
      %v2802 = vld [vmem:[%s0 + $0x2] sm:$0x1]
      %v2803 = vperm.slane %v2802, 0
      %v2804 = vadd.f32 %v2770, %v2803
      %v2805 = vadd.f32 %v2771, %v2803
      %v2806 = vadd.f32 %v2772, %v2803
      %v2807 = vadd.f32 %v2773, %v2803
      %v2808 = vadd.f32 %v2774, %v2803
      %v2809 = vadd.f32 %v2775, %v2803
      %v2810 = vadd.f32 %v2776, %v2803
      %v2811 = vadd.f32 %v2777, %v2803
      %v2812 = vadd.f32 %v2778, %v2803
      %v2813 = vadd.f32 %v2779, %v2803
      %v2814 = vadd.f32 %v2780, %v2803
      %v2815 = vadd.f32 %v2781, %v2803
      %v2816 = vadd.f32 %v2782, %v2803
      %v2817 = vadd.f32 %v2783, %v2803
      %v2818 = vadd.f32 %v2784, %v2803
      %v2819 = vadd.f32 %v2785, %v2803
      %v2820 = vadd.f32 %v2786, %v2803
      %v2821 = vadd.f32 %v2787, %v2803
      %v2822 = vadd.f32 %v2788, %v2803
      %v2823 = vadd.f32 %v2789, %v2803
      %v2824 = vadd.f32 %v2790, %v2803
      %v2825 = vadd.f32 %v2791, %v2803
      %v2826 = vadd.f32 %v2792, %v2803
      %v2827 = vadd.f32 %v2793, %v2803
      %v2828 = vadd.f32 %v2794, %v2803
      %v2829 = vadd.f32 %v2795, %v2803
      %v2830 = vadd.f32 %v2796, %v2803
      %v2831 = vadd.f32 %v2797, %v2803
      %v2832 = vadd.f32 %v2798, %v2803
      %v2833 = vadd.f32 %v2799, %v2803
      %v2834 = vadd.f32 %v2800, %v2803
      %v2835 = vadd.f32 %v2801, %v2803
      %v2836 = vpack.c.bf16 %v2804, %v2804
      %v2837 = vpack.c.bf16 %v2805, %v2805
      %v2838 = vpack.c.bf16 %v2806, %v2806
      %v2839 = vpack.c.bf16 %v2807, %v2807
      %v2840 = vpack.c.bf16 %v2808, %v2808
      %v2841 = vpack.c.bf16 %v2809, %v2809
      %v2842 = vpack.c.bf16 %v2810, %v2810
      %v2843 = vpack.c.bf16 %v2811, %v2811
      %v2844 = vpack.c.bf16 %v2812, %v2812
      %v2845 = vpack.c.bf16 %v2813, %v2813
      %v2846 = vpack.c.bf16 %v2814, %v2814
      %v2847 = vpack.c.bf16 %v2815, %v2815
      %v2848 = vpack.c.bf16 %v2816, %v2816
      %v2849 = vpack.c.bf16 %v2817, %v2817
      %v2850 = vpack.c.bf16 %v2818, %v2818
      %v2851 = vpack.c.bf16 %v2819, %v2819
      %v2852 = vpack.c.bf16 %v2820, %v2820
      %v2853 = vpack.c.bf16 %v2821, %v2821
      %v2854 = vpack.c.bf16 %v2822, %v2822
      %v2855 = vpack.c.bf16 %v2823, %v2823
      %v2856 = vpack.c.bf16 %v2824, %v2824
      %v2857 = vpack.c.bf16 %v2825, %v2825
      %v2858 = vpack.c.bf16 %v2826, %v2826
      %v2859 = vpack.c.bf16 %v2827, %v2827
      %v2860 = vpack.c.bf16 %v2828, %v2828
      %v2861 = vpack.c.bf16 %v2829, %v2829
      %v2862 = vpack.c.bf16 %v2830, %v2830
      %v2863 = vpack.c.bf16 %v2831, %v2831
      %v2864 = vpack.c.bf16 %v2832, %v2832
      %v2865 = vpack.c.bf16 %v2833, %v2833
      %v2866 = vpack.c.bf16 %v2834, %v2834
      %v2867 = vpack.c.bf16 %v2835, %v2835
      %2868 = vst [vmem:[%s220] sm:$0xf] %v2836
      %2869 = vst [vmem:[%s220 + $0x4] sm:$0xf] %v2837
      %2870 = vst [vmem:[%s220 + $0x8] sm:$0xf] %v2838
      %2871 = vst [vmem:[%s220 + $0xc] sm:$0xf] %v2839
      %2872 = vst [vmem:[%s220 + $0x10] sm:$0xf] %v2840
      %2873 = vst [vmem:[%s220 + $0x14] sm:$0xf] %v2841
      %2874 = vst [vmem:[%s220 + $0x18] sm:$0xf] %v2842
      %2875 = vst [vmem:[%s220 + $0x1c] sm:$0xf] %v2843
      %2876 = vst [vmem:[%s220 + $0x20] sm:$0xf] %v2844
      %2877 = vst [vmem:[%s220 + $0x24] sm:$0xf] %v2845
      %2878 = vst [vmem:[%s220 + $0x28] sm:$0xf] %v2846
      %2879 = vst [vmem:[%s220 + $0x2c] sm:$0xf] %v2847
      %2880 = vst [vmem:[%s220 + $0x30] sm:$0xf] %v2848
      %2881 = vst [vmem:[%s220 + $0x34] sm:$0xf] %v2849
      %2882 = vst [vmem:[%s220 + $0x38] sm:$0xf] %v2850
      %2883 = vst [vmem:[%s220 + $0x3c] sm:$0xf] %v2851
      %2884 = vst [vmem:[%s220 + $0x40] sm:$0xf] %v2852
      %2885 = vst [vmem:[%s220 + $0x44] sm:$0xf] %v2853
      %2886 = vst [vmem:[%s220 + $0x48] sm:$0xf] %v2854
      %2887 = vst [vmem:[%s220 + $0x4c] sm:$0xf] %v2855
      %2888 = vst [vmem:[%s220 + $0x50] sm:$0xf] %v2856
      %2889 = vst [vmem:[%s220 + $0x54] sm:$0xf] %v2857
      %2890 = vst [vmem:[%s220 + $0x58] sm:$0xf] %v2858
      %2891 = vst [vmem:[%s220 + $0x5c] sm:$0xf] %v2859
      %2892 = vst [vmem:[%s220 + $0x60] sm:$0xf] %v2860
      %2893 = vst [vmem:[%s220 + $0x64] sm:$0xf] %v2861
      %2894 = vst [vmem:[%s220 + $0x68] sm:$0xf] %v2862
      %2895 = vst [vmem:[%s220 + $0x6c] sm:$0xf] %v2863
      %2896 = vst [vmem:[%s220 + $0x70] sm:$0xf] %v2864
      %2897 = vst [vmem:[%s220 + $0x74] sm:$0xf] %v2865
      %2898 = vst [vmem:[%s220 + $0x78] sm:$0xf] %v2866
      %2899 = vst [vmem:[%s220 + $0x7c] sm:$0xf] %v2867
      %v2900 = vld [vmem:[%s226] sm:$0x1]
      %v2901 = vadd.f32 %v2804, %v2805
      %v2902 = vadd.f32 %v2901, %v2806
      %v2903 = vadd.f32 %v2902, %v2807
      %v2904 = vadd.f32 %v2903, %v2808
      %v2905 = vadd.f32 %v2904, %v2809
      %v2906 = vadd.f32 %v2905, %v2810
      %v2907 = vadd.f32 %v2906, %v2811
      %v2908 = vadd.f32 %v2907, %v2812
      %v2909 = vadd.f32 %v2908, %v2813
      %v2910 = vadd.f32 %v2909, %v2814
      %v2911 = vadd.f32 %v2910, %v2815
      %v2912 = vadd.f32 %v2911, %v2816
      %v2913 = vadd.f32 %v2912, %v2817
      %v2914 = vadd.f32 %v2913, %v2818
      %v2915 = vadd.f32 %v2914, %v2819
      %v2916 = vadd.f32 %v2915, %v2820
      %v2917 = vadd.f32 %v2916, %v2821
      %v2918 = vadd.f32 %v2917, %v2822
      %v2919 = vadd.f32 %v2918, %v2823
      %v2920 = vadd.f32 %v2919, %v2824
      %v2921 = vadd.f32 %v2920, %v2825
      %v2922 = vadd.f32 %v2921, %v2826
      %v2923 = vadd.f32 %v2922, %v2827
      %v2924 = vadd.f32 %v2923, %v2828
      %v2925 = vadd.f32 %v2924, %v2829
      %v2926 = vadd.f32 %v2925, %v2830
      %v2927 = vadd.f32 %v2926, %v2831
      %v2928 = vadd.f32 %v2927, %v2832
      %v2929 = vadd.f32 %v2928, %v2833
      %v2930 = vadd.f32 %v2929, %v2834
      %v2931 = vadd.f32 %v2930, %v2835
      %v2932 = vrot.slane %v2931, 4
      %v2933 = vadd.f32 %v2931, %v2932
      %v2934 = vrot.slane %v2933, 2
      %v2935 = vadd.f32 %v2933, %v2934
      %v2936 = vrot.slane %v2935, 1
      %v2937 = vadd.f32 %v2935, %v2936
      %v2938 = vadd.f32 %v2900, %v2937
      %2939 = vst [vmem:[%s226] sm:$0x1] %v2938
      %v2940 = vld [vmem:[%s226 + $0x1] sm:$0x1]
      %v2941 = vmul.f32 %v2804, %v2804
      %v2942 = vmul.f32 %v2805, %v2805
      %v2943 = vmul.f32 %v2806, %v2806
      %v2944 = vmul.f32 %v2807, %v2807
      %v2945 = vmul.f32 %v2808, %v2808
      %v2946 = vmul.f32 %v2809, %v2809
      %v2947 = vmul.f32 %v2810, %v2810
      %v2948 = vmul.f32 %v2811, %v2811
      %v2949 = vmul.f32 %v2812, %v2812
      %v2950 = vmul.f32 %v2813, %v2813
      %v2951 = vmul.f32 %v2814, %v2814
      %v2952 = vmul.f32 %v2815, %v2815
      %v2953 = vmul.f32 %v2816, %v2816
      %v2954 = vmul.f32 %v2817, %v2817
      %v2955 = vmul.f32 %v2818, %v2818
      %v2956 = vmul.f32 %v2819, %v2819
      %v2957 = vmul.f32 %v2820, %v2820
      %v2958 = vmul.f32 %v2821, %v2821
      %v2959 = vmul.f32 %v2822, %v2822
      %v2960 = vmul.f32 %v2823, %v2823
      %v2961 = vmul.f32 %v2824, %v2824
      %v2962 = vmul.f32 %v2825, %v2825
      %v2963 = vmul.f32 %v2826, %v2826
      %v2964 = vmul.f32 %v2827, %v2827
      %v2965 = vmul.f32 %v2828, %v2828
      %v2966 = vmul.f32 %v2829, %v2829
      %v2967 = vmul.f32 %v2830, %v2830
      %v2968 = vmul.f32 %v2831, %v2831
      %v2969 = vmul.f32 %v2832, %v2832
      %v2970 = vmul.f32 %v2833, %v2833
      %v2971 = vmul.f32 %v2834, %v2834
      %v2972 = vmul.f32 %v2835, %v2835
      %v2973 = vadd.f32 %v2941, %v2942
      %v2974 = vadd.f32 %v2973, %v2943
      %v2975 = vadd.f32 %v2974, %v2944
      %v2976 = vadd.f32 %v2975, %v2945
      %v2977 = vadd.f32 %v2976, %v2946
      %v2978 = vadd.f32 %v2977, %v2947
      %v2979 = vadd.f32 %v2978, %v2948
      %v2980 = vadd.f32 %v2979, %v2949
      %v2981 = vadd.f32 %v2980, %v2950
      %v2982 = vadd.f32 %v2981, %v2951
      %v2983 = vadd.f32 %v2982, %v2952
      %v2984 = vadd.f32 %v2983, %v2953
      %v2985 = vadd.f32 %v2984, %v2954
      %v2986 = vadd.f32 %v2985, %v2955
      %v2987 = vadd.f32 %v2986, %v2956
      %v2988 = vadd.f32 %v2987, %v2957
      %v2989 = vadd.f32 %v2988, %v2958
      %v2990 = vadd.f32 %v2989, %v2959
      %v2991 = vadd.f32 %v2990, %v2960
      %v2992 = vadd.f32 %v2991, %v2961
      %v2993 = vadd.f32 %v2992, %v2962
      %v2994 = vadd.f32 %v2993, %v2963
      %v2995 = vadd.f32 %v2994, %v2964
      %v2996 = vadd.f32 %v2995, %v2965
      %v2997 = vadd.f32 %v2996, %v2966
      %v2998 = vadd.f32 %v2997, %v2967
      %v2999 = vadd.f32 %v2998, %v2968
      %v3000 = vadd.f32 %v2999, %v2969
      %v3001 = vadd.f32 %v3000, %v2970
      %v3002 = vadd.f32 %v3001, %v2971
      %v3003 = vadd.f32 %v3002, %v2972
      %v3004 = vrot.slane %v3003, 4
      %v3005 = vadd.f32 %v3003, %v3004
      %v3006 = vrot.slane %v3005, 2
      %v3007 = vadd.f32 %v3005, %v3006
      %v3008 = vrot.slane %v3007, 1
      %v3009 = vadd.f32 %v3007, %v3008
      %v3010 = vadd.f32 %v2940, %v3009
      %3011 = vst [vmem:[%s226 + $0x1] sm:$0x1] %v3010
      %s3012 = sadd.s32 %s20, %s21
      %s3013 = smul.u32 32, %s3012
      %p3014 = scmp.lt.s32.totalorder %s3013, 63
      %s3015 = scalar_select %p3014, %s3013, 63
      %s3016 = smul.addr %s3015, 4
      %s3017 = scalar_lea.vmem %s3, %s3016
      %p3018 = scmp.lt.s32.totalorder %s20, 1
      %s3019 = scalar_select %p3018, %s20, 1
      %s3020 = smul.addr %s3019, 8
      %s3021 = scalar_lea.vmem %s4, %s3020
      // Predicated region
      $region37: #{conv_block_forward.3} parent=31 // pred_check
        %p3022 = pneg %p116
      $region38: #{conv_block_forward.3} parent=31 // pred_check_branch
        %3024 = sbr.rel (%p3022) target = $region40
      $region39: #{conv_block_forward.3} parent=31 // pred_region
        %s3025 = sadd.s32 %s20, %s21
        %s3026 = smul.u32 32, %s3025
      $region40: #{conv_block_forward.3} parent=31 // pred_fallthru
        _
      // Predicated region
      $region41: #{conv_block_forward.3} parent=31 // pred_check
        %p3027 = pneg %p142
      $region42: #{conv_block_forward.3} parent=31 // pred_check_branch
        %3029 = sbr.rel (%p3027) target = $region44
      $region43: #{conv_block_forward.3} parent=31 // pred_region
        _
      $region44: #{conv_block_forward.3} parent=31 // pred_fallthru
        _
    $region32: #{conv_block_forward.3} parent=5 // pred_fallthru
      _
    %p3030 = scmp.le.s32.totalorder 2, %s11
    // Predicated region
    $region45: #{conv_block_forward.3} parent=5 // pred_check
      %p3031 = pneg %p3030
    $region46: #{conv_block_forward.3} parent=5 // pred_check_branch
      %3033 = sbr.rel (%p3031) target = $region48
    $region47: #{conv_block_forward.3} parent=5 // pred_region
      %s3034 = ssub.s32 %s11, 2
      // Predicated region
      $region49: #{conv_block_forward.3} parent=47 // pred_check
        %p3035 = pneg %p122
      $region50: #{conv_block_forward.3} parent=47 // pred_check_branch
        %3037 = sbr.rel (%p3035) target = $region52
      $region51: #{conv_block_forward.3} parent=47 // pred_region
        %s3038 = sadd.s32 %s22, %s23
        %s3039 = smul.u32 32, %s3038
        %p3040 = scmp.lt.s32.totalorder %s3039, 63
        %s3041 = scalar_select %p3040, %s3039, 63
        %s3042 = smul.addr %s3041, 4
        %s3043 = scalar_lea.vmem %s3, %s3042
      $region52: #{conv_block_forward.3} parent=47 // pred_fallthru
        _
      // Predicated region
      $region53: #{conv_block_forward.3} parent=47 // pred_check
        %p3044 = pneg %p148
      $region54: #{conv_block_forward.3} parent=47 // pred_check_branch
        %3046 = sbr.rel (%p3044) target = $region56
      $region55: #{conv_block_forward.3} parent=47 // pred_region
        %p3047 = scmp.lt.s32.totalorder %s22, 1
        %s3048 = scalar_select %p3047, %s22, 1
        %s3049 = smul.addr %s3048, 8
        %s3050 = scalar_lea.vmem %s4, %s3049
      $region56: #{conv_block_forward.3} parent=47 // pred_fallthru
        _
    $region48: #{conv_block_forward.3} parent=5 // pred_fallthru
      _
  $region6: #{conv_block_forward.3} parent=0 // loop_footer
    %s15 = sadd.s32 1, %s11
  $region7: #{conv_block_forward.3} parent=0 // loop_footer_branch
    %10 = sbr.rel target = $region3
  $region8: #{conv_block_forward.3} parent=0 // loop_exit
    _

</llo_original>
